<compile_context>
chip_gen: v6e
topology: v6e:2x2x1
jax: 0.10.0
libtpu: 0.0.40
codegen_flags: <defaults>
</compile_context>

<pallas_src>
import functools

import jax
import jax.numpy as jnp
import numpy as np
from jax.experimental import pallas as pl
from jax.experimental.pallas import tpu as pltpu

_HI = jax.lax.Precision.HIGHEST  # used only by the pure-JAX reference


# ----------------------------------------------------------------------------
# Kernel 1: fused (z*emb) @ W_fc + b  ->  BatchNorm2d(128), channels-last rows
# ----------------------------------------------------------------------------
def _fc_bn_kernel(x_ref, w_ref, b_ref, g_ref, bb_ref, o_ref, *, eps):
    # x_ref: (B*HW, HW*L) "eye-expanded" input so the fc lands directly in
    # channels-last (B*HW, 128) rows; w_ref: (HW*L, 128); b/g/bb: per-channel.
    y = jnp.dot(x_ref[...], w_ref[...], preferred_element_type=jnp.float32) + b_ref[...]
    mean = jnp.mean(y, axis=0, keepdims=True)
    var = jnp.mean(jnp.square(y - mean), axis=0, keepdims=True)  # biased (training BN)
    o_ref[...] = (y - mean) * jax.lax.rsqrt(var + eps) * g_ref[...] + bb_ref[...]


def fc_bn(x2, w2, b2, gamma, beta, eps=1e-5):
    M, K = x2.shape
    _, N = w2.shape
    return pl.pallas_call(
        functools.partial(_fc_bn_kernel, eps=eps),
        out_shape=jax.ShapeDtypeStruct((M, N), jnp.float32),
        grid=(1,),
        in_specs=[
            pl.BlockSpec((M, K), lambda i: (0, 0)),
            pl.BlockSpec((K, N), lambda i: (0, 0)),
            pl.BlockSpec((M, N), lambda i: (0, 0)),
            pl.BlockSpec((1, N), lambda i: (0, 0)),
            pl.BlockSpec((1, N), lambda i: (0, 0)),
        ],
        out_specs=pl.BlockSpec((M, N), lambda i: (0, 0)),
        compiler_params=pltpu.CompilerParams(dimension_semantics=("arbitrary",)),
    )(x2, w2, b2, gamma, beta)


# ----------------------------------------------------------------------------
# Kernel 2: sub-pixel ConvTranspose2d (4 parity matmuls) + BatchNorm + ReLU
# ----------------------------------------------------------------------------
def _ct_bn_relu_kernel(p_ref, w_ref, b_ref, g_ref, bb_ref, o_ref, *, eps, n_par, m_rows):
    # p_ref: (4, M, Cin*4) per-parity patches, w_ref: (4, Cin*4, Cout)
    ys = []
    for i in range(n_par):
        ys.append(jnp.dot(p_ref[i], w_ref[i], preferred_element_type=jnp.float32)
                  + b_ref[...])
    cnt = float(n_par * m_rows)
    # BatchNorm stats over the FULL output (all parities x all rows) per channel
    mean = sum(y.sum(axis=0, keepdims=True) for y in ys) / cnt
    var = sum(jnp.square(y - mean).sum(axis=0, keepdims=True) for y in ys) / cnt
    scale = jax.lax.rsqrt(var + eps) * g_ref[...]
    shift = bb_ref[...] - mean * scale
    for i in range(n_par):
        o_ref[i] = jnp.maximum(ys[i] * scale + shift, 0.0)


def ct_bn_relu(patches, w4, bias, gamma, beta, eps=1e-5):
    P, M, K = patches.shape
    N = w4.shape[-1]
    return pl.pallas_call(
        functools.partial(_ct_bn_relu_kernel, eps=eps, n_par=P, m_rows=M),
        out_shape=jax.ShapeDtypeStruct((P, M, N), jnp.float32),
        grid=(1,),
        in_specs=[
            pl.BlockSpec((P, M, K), lambda i: (0, 0, 0)),
            pl.BlockSpec((P, K, N), lambda i: (0, 0, 0)),
            pl.BlockSpec((1, N), lambda i: (0, 0)),
            pl.BlockSpec((1, N), lambda i: (0, 0)),
            pl.BlockSpec((1, N), lambda i: (0, 0)),
        ],
        out_specs=pl.BlockSpec((P, M, N), lambda i: (0, 0, 0)),
        compiler_params=pltpu.CompilerParams(dimension_semantics=("arbitrary",)),
    )(patches, w4, bias, gamma, beta)


# ----------------------------------------------------------------------------
# Kernel 3: sub-pixel ConvTranspose2d with Cout=1 + tanh (VPU multiply-reduce)
# ----------------------------------------------------------------------------
def _ct_tanh_kernel(p_ref, w_ref, b_ref, o_ref, *, n_par):
    # p_ref: (4, M, Cin*4), w_ref: (4, Cin*4), b_ref: (1, 1), o_ref: (M, 4)
    for i in range(n_par):
        y = jnp.sum(p_ref[i] * w_ref[i:i + 1, :], axis=-1, keepdims=True)  # (M, 1)
        o_ref[:, i:i + 1] = jnp.tanh(y + b_ref[...])


def ct_tanh(patches, w4, bias):
    P, M, K = patches.shape
    return pl.pallas_call(
        functools.partial(_ct_tanh_kernel, n_par=P),
        out_shape=jax.ShapeDtypeStruct((M, P), jnp.float32),
        grid=(1,),
        in_specs=[
            pl.BlockSpec((P, M, K), lambda i: (0, 0, 0)),
            pl.BlockSpec((P, K), lambda i: (0, 0)),
            pl.BlockSpec((1, 1), lambda i: (0, 0)),
        ],
        out_specs=pl.BlockSpec((M, P), lambda i: (0, 0)),
        compiler_params=pltpu.CompilerParams(dimension_semantics=("arbitrary",)),
    )(patches, w4, bias)


# ----------------------------------------------------------------------------
# XLA-side layout glue (fuses into a handful of small fusions)
# ----------------------------------------------------------------------------
def _subpixel_patches(x):
    """x: (B, H, W, C) channels-last -> (4, B*H*W, 4*C) per-parity patches for
    ConvTranspose2d(k=4, s=2, p=1).  K order = (dy, dx, c)."""
    B, H, W, C = x.shape
    xp = jnp.pad(x, ((0, 0), (1, 1), (1, 1), (0, 0)))
    pats = []
    for py in (0, 1):
        for px in (0, 1):
            taps = [xp[:, dy + py:dy + py + H, dx + px:dx + px + W, :]
                    for dy in (0, 1) for dx in (0, 1)]
            pats.append(jnp.concatenate(taps, axis=-1).reshape(B * H * W, 4 * C))
    return jnp.stack(pats, axis=0)


def _subpixel_weights(w):
    """w: PyTorch ConvTranspose2d weight (Cin, Cout, 4, 4) -> (4, 4*Cin, Cout).
    Per parity (py, px) the effective 2x2 kernel taps are ky=(3-py)-2*dy,
    kx=(3-px)-2*dx; row order matches _subpixel_patches (dy, dx, c)."""
    cin, cout = w.shape[0], w.shape[1]
    mats = []
    for py in (0, 1):
        for px in (0, 1):
            wt = w[:, :, (3 - py, 1 - py), :][:, :, :, (3 - px, 1 - px)]  # (Cin,Cout,dy,dx)
            mats.append(jnp.transpose(wt, (2, 3, 0, 1)).reshape(4 * cin, cout))
    return jnp.stack(mats, axis=0)


def _interleave(y4, B, H, W):
    """y4: (4, B*H*W, C) parity outputs -> (B, 2H, 2W, C) channels-last."""
    C = y4.shape[-1]
    o = y4.reshape(2, 2, B, H, W, C).transpose(2, 3, 0, 4, 1, 5)
    return o.reshape(B, 2 * H, 2 * W, C)


def prepare_params(params, img_size):
    """One-time layout permutes (channels-last fc weights, sub-pixel conv weights)."""
    s4 = img_size // 4
    L = params["emb"].shape[1]
    # fc output column index is (c, h, w); permute to (h, w, k) rows x c cols
    fc_w = params["fc_w"].reshape(L, 128, s4, s4).transpose(2, 3, 0, 1)
    fc_w = fc_w.reshape(s4 * s4 * L, 128)
    fc_b = params["fc_b"].reshape(128, s4, s4).transpose(1, 2, 0).reshape(s4 * s4, 128)
    return dict(
        emb=params["emb"],
        fc_w_hwc=fc_w,
        fc_b_hwc=fc_b,
        bn0_g=params["bn0_g"].reshape(1, 128),
        bn0_b=params["bn0_b"].reshape(1, 128),
        ct1_w=_subpixel_weights(params["ct1_w"]),          # (4, 512, 64)
        ct1_b=params["ct1_b"].reshape(1, 64),
        bn1_g=params["bn1_g"].reshape(1, 64),
        bn1_b=params["bn1_b"].reshape(1, 64),
        ct2_w=_subpixel_weights(params["ct2_w"])[:, :, 0],  # (4, 256)
        ct2_b=params["ct2_b"].reshape(1, 1),
    )


# ----------------------------------------------------------------------------
# Generator forward (mirrors the PyTorch module)
# ----------------------------------------------------------------------------
def generator_forward(prep, z, labels, *, img_size):
    B, L = z.shape
    s4 = img_size // 4
    hw = s4 * s4

    # torch.mul(z, embedding); the eye-expansion makes the fc land directly in
    # channels-last (B*HW, 128) rows so BatchNorm(128) fuses into the kernel.
    x = z * prep["emb"][labels]                                        # (B, L)
    eye = jnp.eye(hw, dtype=x.dtype)
    x2 = (eye[None, :, :, None] * x[:, None, None, :]).reshape(B * hw, hw * L)
    b2 = jnp.tile(prep["fc_b_hwc"], (B, 1))                            # (B*hw, 128)

    h0 = fc_bn(x2, prep["fc_w_hwc"], b2, prep["bn0_g"], prep["bn0_b"])  # (B*hw, 128)
    h0 = h0.reshape(B, s4, s4, 128)                                     # channels-last

    # ConvTranspose2d(128, 64, 4, 2, 1) + BatchNorm2d(64) + ReLU
    p1 = _subpixel_patches(h0)                                          # (4, B*hw, 512)
    y1 = ct_bn_relu(p1, prep["ct1_w"], prep["ct1_b"],
                    prep["bn1_g"], prep["bn1_b"])                       # (4, B*hw, 64)
    h1 = _interleave(y1, B, s4, s4)                                     # (B, 2s4, 2s4, 64)

    # ConvTranspose2d(64, 1, 4, 2, 1) + Tanh
    p2 = _subpixel_patches(h1)                                          # (4, B*4*hw, 256)
    y2 = ct_tanh(p2, prep["ct2_w"], prep["ct2_b"])                      # (B*4*hw, 4)

    H1 = 2 * s4
    out = y2.reshape(B, H1, H1, 2, 2).transpose(0, 1, 3, 2, 4)          # (b, m, py, n, px)
    return out.reshape(B, 1, img_size, img_size)                        # NCHW, C=1


# ----------------------------------------------------------------------------
# Pure-JAX f32 reference for correctness checking (HIGHEST precision)
# ----------------------------------------------------------------------------
def generator_reference(params, z, labels, *, img_size):
    emb = params["emb"][labels]
    x = jnp.dot(z * emb, params["fc_w"], precision=_HI) + params["fc_b"]
    B = z.shape[0]
    s4 = img_size // 4
    x = x.reshape(B, 128, s4, s4)

    def bn(x, g, b, relu=False):
        mean = x.mean(axis=(0, 2, 3), keepdims=True)
        var = ((x - mean) ** 2).mean(axis=(0, 2, 3), keepdims=True)
        y = (x - mean) / jnp.sqrt(var + 1e-5) * g.reshape(1, -1, 1, 1) + b.reshape(1, -1, 1, 1)
        return jnp.maximum(y, 0.0) if relu else y

    def ct(x, w, b):
        w_conv = jnp.flip(w, axis=(2, 3)).transpose(1, 0, 2, 3)   # (Cout, Cin, 4, 4)
        y = jax.lax.conv_general_dilated(
            x, w_conv, window_strides=(1, 1), padding=((2, 2), (2, 2)),
            lhs_dilation=(2, 2), rhs_dilation=(1, 1),
            dimension_numbers=("NCHW", "OIHW", "NCHW"), precision=_HI)
        return y + b.reshape(1, -1, 1, 1)

    x = bn(x, params["bn0_g"], params["bn0_b"])
    x = ct(x, params["ct1_w"], params["ct1_b"])
    x = bn(x, params["bn1_g"], params["bn1_b"], relu=True)
    x = ct(x, params["ct2_w"], params["ct2_b"])
    return jnp.tanh(x)


if __name__ == "__main__":
    latent_dim, num_classes, img_size, batch = 32, 10, 16, 2
    fc_out = 128 * (img_size // 4) ** 2

    key = jax.random.PRNGKey(0)
    keys = jax.random.split(key, 12)
    params = dict(
        emb=jax.random.normal(keys[0], (num_classes, latent_dim), jnp.float32),
        fc_w=0.05 * jax.random.normal(keys[1], (latent_dim, fc_out), jnp.float32),
        fc_b=0.05 * jax.random.normal(keys[2], (fc_out,), jnp.float32),
        bn0_g=1.0 + 0.1 * jax.random.normal(keys[3], (128,), jnp.float32),
        bn0_b=0.1 * jax.random.normal(keys[4], (128,), jnp.float32),
        ct1_w=0.05 * jax.random.normal(keys[5], (128, 64, 4, 4), jnp.float32),
        ct1_b=0.05 * jax.random.normal(keys[6], (64,), jnp.float32),
        bn1_g=1.0 + 0.1 * jax.random.normal(keys[7], (64,), jnp.float32),
        bn1_b=0.1 * jax.random.normal(keys[8], (64,), jnp.float32),
        ct2_w=0.05 * jax.random.normal(keys[9], (64, 1, 4, 4), jnp.float32),
        ct2_b=0.05 * jax.random.normal(keys[10], (1,), jnp.float32),
    )
    z = jax.random.normal(keys[11], (batch, latent_dim), jnp.float32)
    labels = jnp.array([3, 7], dtype=jnp.int32)

    prep = prepare_params(params, img_size)            # one-time layout permutes
    fwd = jax.jit(functools.partial(generator_forward, img_size=img_size))
    out = jax.block_until_ready(fwd(prep, z, labels))
    assert out.shape == (batch, 1, img_size, img_size), out.shape

    ref = generator_reference(params, z, labels, img_size=img_size)
    # Pallas matmuls run at default (single-pass bf16 MXU) precision per the
    # perf review; the reference is exact f32, hence the slightly looser bound.
    np.testing.assert_allclose(np.asarray(out), np.asarray(ref), atol=1e-2, rtol=1e-2)
    print("KERNEL_OK")
</pallas_src>

<mosaic_0001>
module attributes {stable_mosaic.version = 11 : i64} {
  func.func @_fc_bn_kernel(%arg0: i32, %arg1: memref<32x512xf32, #tpu.memory_space<vmem>>, %arg2: memref<512x128xf32, #tpu.memory_space<vmem>>, %arg3: memref<32x128xf32, #tpu.memory_space<vmem>>, %arg4: memref<1x128xf32, #tpu.memory_space<vmem>>, %arg5: memref<1x128xf32, #tpu.memory_space<vmem>>, %arg6: memref<32x128xf32, #tpu.memory_space<vmem>>) attributes {dimension_semantics = [#tpu.dimension_semantics<arbitrary>], iteration_bounds = array<i64: 1>, scalar_prefetch = 0 : i64, scratch_operands = 0 : i64, tpu.core_type = #tpu.core_type<tc>, window_params = [{pipeline_mode = #tpu.pipeline_mode<synchronous>, transform_indices = @transform_0, window_bounds = array<i64: 32, 512>}, {pipeline_mode = #tpu.pipeline_mode<synchronous>, transform_indices = @transform_1, window_bounds = array<i64: 512, 128>}, {pipeline_mode = #tpu.pipeline_mode<synchronous>, transform_indices = @transform_2, window_bounds = array<i64: 32, 128>}, {pipeline_mode = #tpu.pipeline_mode<synchronous>, transform_indices = @transform_3, window_bounds = array<i64: 1, 128>}, {pipeline_mode = #tpu.pipeline_mode<synchronous>, transform_indices = @transform_4, window_bounds = array<i64: 1, 128>}, {pipeline_mode = #tpu.pipeline_mode<synchronous>, transform_indices = @transform_5, window_bounds = array<i64: 32, 128>}]} {
    %c0 = arith.constant 0 : index
    %c0_0 = arith.constant 0 : index
    %0 = vector.load %arg1[%c0, %c0_0] : memref<32x512xf32, #tpu.memory_space<vmem>>, vector<32x512xf32>
    %c0_1 = arith.constant 0 : index
    %c0_2 = arith.constant 0 : index
    %1 = vector.load %arg2[%c0_1, %c0_2] : memref<512x128xf32, #tpu.memory_space<vmem>>, vector<512x128xf32>
    %cst = arith.constant dense<0.000000e+00> : vector<32x128xf32>
    %2 = tpu.matmul %0, %1, %cst {dimension_numbers = #tpu.dot_dimension_numbers<[1], [0], [0], [1], [0, 0, 1, 1], [], []>} : vector<32x512xf32>, vector<512x128xf32>, vector<32x128xf32> -> vector<32x128xf32>
    %c0_3 = arith.constant 0 : index
    %c0_4 = arith.constant 0 : index
    %3 = vector.load %arg3[%c0_3, %c0_4] : memref<32x128xf32, #tpu.memory_space<vmem>>, vector<32x128xf32>
    %4 = arith.addf %2, %3 : vector<32x128xf32>
    %cst_5 = arith.constant dense<0.000000e+00> : vector<128xf32>
    %5 = vector.multi_reduction <add>, %4, %cst_5 [0] : vector<32x128xf32> to vector<128xf32>
    %6 = vector.shape_cast %5 : vector<128xf32> to vector<1x128xf32>
    %cst_6 = arith.constant 3.200000e+01 : f32
    %7 = vector.broadcast %cst_6 : f32 to vector<1x128xf32>
    %8 = arith.divf %6, %7 : vector<1x128xf32>
    %9 = vector.broadcast %8 : vector<1x128xf32> to vector<32x128xf32>
    %10 = arith.subf %4, %9 : vector<32x128xf32>
    %11 = arith.mulf %10, %10 : vector<32x128xf32>
    %cst_7 = arith.constant dense<0.000000e+00> : vector<128xf32>
    %12 = vector.multi_reduction <add>, %11, %cst_7 [0] : vector<32x128xf32> to vector<128xf32>
    %13 = vector.shape_cast %12 : vector<128xf32> to vector<1x128xf32>
    %cst_8 = arith.constant 3.200000e+01 : f32
    %14 = vector.broadcast %cst_8 : f32 to vector<1x128xf32>
    %15 = arith.divf %13, %14 : vector<1x128xf32>
    %16 = vector.broadcast %8 : vector<1x128xf32> to vector<32x128xf32>
    %17 = arith.subf %4, %16 : vector<32x128xf32>
    %cst_9 = arith.constant 9.99999974E-6 : f32
    %18 = vector.broadcast %cst_9 : f32 to vector<1x128xf32>
    %19 = arith.addf %15, %18 : vector<1x128xf32>
    %20 = math.rsqrt %19 : vector<1x128xf32>
    %21 = vector.broadcast %20 : vector<1x128xf32> to vector<32x128xf32>
    %22 = arith.mulf %17, %21 : vector<32x128xf32>
    %c0_10 = arith.constant 0 : index
    %c0_11 = arith.constant 0 : index
    %23 = vector.load %arg4[%c0_10, %c0_11] : memref<1x128xf32, #tpu.memory_space<vmem>>, vector<1x128xf32>
    %24 = vector.broadcast %23 : vector<1x128xf32> to vector<32x128xf32>
    %25 = arith.mulf %22, %24 : vector<32x128xf32>
    %c0_12 = arith.constant 0 : index
    %c0_13 = arith.constant 0 : index
    %26 = vector.load %arg5[%c0_12, %c0_13] : memref<1x128xf32, #tpu.memory_space<vmem>>, vector<1x128xf32>
    %27 = vector.broadcast %26 : vector<1x128xf32> to vector<32x128xf32>
    %28 = arith.addf %25, %27 : vector<32x128xf32>
    %c0_14 = arith.constant 0 : index
    %c0_15 = arith.constant 0 : index
    %29 = vector.load %arg6[%c0_14, %c0_15] : memref<32x128xf32, #tpu.memory_space<vmem>>, vector<32x128xf32>
    tpu.vector_store %arg6[%c0_14, %c0_15], %28 {strides = array<i32>} : memref<32x128xf32, #tpu.memory_space<vmem>>, vector<32x128xf32>,
    return
  }
  func.func @transform_0(%arg0: i32) -> (i32, i32) {
    %c0_i32 = arith.constant 0 : i32
    %c0_i32_0 = arith.constant 0 : i32
    %c0_i32_1 = arith.constant 0 : i32
    return %c0_i32, %c0_i32_0 : i32, i32
  }
  func.func @transform_1(%arg0: i32) -> (i32, i32) {
    %c0_i32 = arith.constant 0 : i32
    %c0_i32_0 = arith.constant 0 : i32
    %c0_i32_1 = arith.constant 0 : i32
    return %c0_i32, %c0_i32_0 : i32, i32
  }
  func.func @transform_2(%arg0: i32) -> (i32, i32) {
    %c0_i32 = arith.constant 0 : i32
    %c0_i32_0 = arith.constant 0 : i32
    %c0_i32_1 = arith.constant 0 : i32
    return %c0_i32, %c0_i32_0 : i32, i32
  }
  func.func @transform_3(%arg0: i32) -> (i32, i32) {
    %c0_i32 = arith.constant 0 : i32
    %c0_i32_0 = arith.constant 0 : i32
    %c0_i32_1 = arith.constant 0 : i32
    return %c0_i32, %c0_i32_0 : i32, i32
  }
  func.func @transform_4(%arg0: i32) -> (i32, i32) {
    %c0_i32 = arith.constant 0 : i32
    %c0_i32_0 = arith.constant 0 : i32
    %c0_i32_1 = arith.constant 0 : i32
    return %c0_i32, %c0_i32_0 : i32, i32
  }
  func.func @transform_5(%arg0: i32) -> (i32, i32) {
    %c0_i32 = arith.constant 0 : i32
    %c0_i32_0 = arith.constant 0 : i32
    %c0_i32_1 = arith.constant 0 : i32
    return %c0_i32, %c0_i32_0 : i32, i32
  }
}

module attributes {stable_mosaic.version = 11 : i64} {
  func.func @_ct_bn_relu_kernel(%arg0: i32, %arg1: memref<4x32x512xf32, #tpu.memory_space<vmem>>, %arg2: memref<4x512x64xf32, #tpu.memory_space<vmem>>, %arg3: memref<1x64xf32, #tpu.memory_space<vmem>>, %arg4: memref<1x64xf32, #tpu.memory_space<vmem>>, %arg5: memref<1x64xf32, #tpu.memory_space<vmem>>, %arg6: memref<4x32x64xf32, #tpu.memory_space<vmem>>) attributes {dimension_semantics = [#tpu.dimension_semantics<arbitrary>], iteration_bounds = array<i64: 1>, scalar_prefetch = 0 : i64, scratch_operands = 0 : i64, tpu.core_type = #tpu.core_type<tc>, window_params = [{pipeline_mode = #tpu.pipeline_mode<synchronous>, transform_indices = @transform_0, window_bounds = array<i64: 4, 32, 512>}, {pipeline_mode = #tpu.pipeline_mode<synchronous>, transform_indices = @transform_1, window_bounds = array<i64: 4, 512, 64>}, {pipeline_mode = #tpu.pipeline_mode<synchronous>, transform_indices = @transform_2, window_bounds = array<i64: 1, 64>}, {pipeline_mode = #tpu.pipeline_mode<synchronous>, transform_indices = @transform_3, window_bounds = array<i64: 1, 64>}, {pipeline_mode = #tpu.pipeline_mode<synchronous>, transform_indices = @transform_4, window_bounds = array<i64: 1, 64>}, {pipeline_mode = #tpu.pipeline_mode<synchronous>, transform_indices = @transform_5, window_bounds = array<i64: 4, 32, 64>}]} {
    %c0 = arith.constant 0 : index
    %c0_0 = arith.constant 0 : index
    %c0_1 = arith.constant 0 : index
    %0 = vector.load %arg1[%c0, %c0_0, %c0_1] : memref<4x32x512xf32, #tpu.memory_space<vmem>>, vector<1x32x512xf32>
    %1 = vector.shape_cast %0 : vector<1x32x512xf32> to vector<32x512xf32>
    %c0_2 = arith.constant 0 : index
    %c0_3 = arith.constant 0 : index
    %c0_4 = arith.constant 0 : index
    %2 = vector.load %arg2[%c0_2, %c0_3, %c0_4] : memref<4x512x64xf32, #tpu.memory_space<vmem>>, vector<1x512x64xf32>
    %3 = vector.shape_cast %2 : vector<1x512x64xf32> to vector<512x64xf32>
    %cst = arith.constant dense<0.000000e+00> : vector<32x64xf32>
    %4 = tpu.matmul %1, %3, %cst {dimension_numbers = #tpu.dot_dimension_numbers<[1], [0], [0], [1], [0, 0, 1, 1], [], []>} : vector<32x512xf32>, vector<512x64xf32>, vector<32x64xf32> -> vector<32x64xf32>
    %c0_5 = arith.constant 0 : index
    %c0_6 = arith.constant 0 : index
    %5 = vector.load %arg3[%c0_5, %c0_6] : memref<1x64xf32, #tpu.memory_space<vmem>>, vector<1x64xf32>
    %6 = vector.broadcast %5 : vector<1x64xf32> to vector<32x64xf32>
    %7 = arith.addf %4, %6 : vector<32x64xf32>
    %c1 = arith.constant 1 : index
    %c0_7 = arith.constant 0 : index
    %c0_8 = arith.constant 0 : index
    %8 = vector.load %arg1[%c1, %c0_7, %c0_8] : memref<4x32x512xf32, #tpu.memory_space<vmem>>, vector<1x32x512xf32>
    %9 = vector.shape_cast %8 : vector<1x32x512xf32> to vector<32x512xf32>
    %c1_9 = arith.constant 1 : index
    %c0_10 = arith.constant 0 : index
    %c0_11 = arith.constant 0 : index
    %10 = vector.load %arg2[%c1_9, %c0_10, %c0_11] : memref<4x512x64xf32, #tpu.memory_space<vmem>>, vector<1x512x64xf32>
    %11 = vector.shape_cast %10 : vector<1x512x64xf32> to vector<512x64xf32>
    %cst_12 = arith.constant dense<0.000000e+00> : vector<32x64xf32>
    %12 = tpu.matmul %9, %11, %cst_12 {dimension_numbers = #tpu.dot_dimension_numbers<[1], [0], [0], [1], [0, 0, 1, 1], [], []>} : vector<32x512xf32>, vector<512x64xf32>, vector<32x64xf32> -> vector<32x64xf32>
    %c0_13 = arith.constant 0 : index
    %c0_14 = arith.constant 0 : index
    %13 = vector.load %arg3[%c0_13, %c0_14] : memref<1x64xf32, #tpu.memory_space<vmem>>, vector<1x64xf32>
    %14 = vector.broadcast %13 : vector<1x64xf32> to vector<32x64xf32>
    %15 = arith.addf %12, %14 : vector<32x64xf32>
    %c2 = arith.constant 2 : index
    %c0_15 = arith.constant 0 : index
    %c0_16 = arith.constant 0 : index
    %16 = vector.load %arg1[%c2, %c0_15, %c0_16] : memref<4x32x512xf32, #tpu.memory_space<vmem>>, vector<1x32x512xf32>
    %17 = vector.shape_cast %16 : vector<1x32x512xf32> to vector<32x512xf32>
    %c2_17 = arith.constant 2 : index
    %c0_18 = arith.constant 0 : index
    %c0_19 = arith.constant 0 : index
    %18 = vector.load %arg2[%c2_17, %c0_18, %c0_19] : memref<4x512x64xf32, #tpu.memory_space<vmem>>, vector<1x512x64xf32>
    %19 = vector.shape_cast %18 : vector<1x512x64xf32> to vector<512x64xf32>
    %cst_20 = arith.constant dense<0.000000e+00> : vector<32x64xf32>
    %20 = tpu.matmul %17, %19, %cst_20 {dimension_numbers = #tpu.dot_dimension_numbers<[1], [0], [0], [1], [0, 0, 1, 1], [], []>} : vector<32x512xf32>, vector<512x64xf32>, vector<32x64xf32> -> vector<32x64xf32>
    %c0_21 = arith.constant 0 : index
    %c0_22 = arith.constant 0 : index
    %21 = vector.load %arg3[%c0_21, %c0_22] : memref<1x64xf32, #tpu.memory_space<vmem>>, vector<1x64xf32>
    %22 = vector.broadcast %21 : vector<1x64xf32> to vector<32x64xf32>
    %23 = arith.addf %20, %22 : vector<32x64xf32>
    %c3 = arith.constant 3 : index
    %c0_23 = arith.constant 0 : index
    %c0_24 = arith.constant 0 : index
    %24 = vector.load %arg1[%c3, %c0_23, %c0_24] : memref<4x32x512xf32, #tpu.memory_space<vmem>>, vector<1x32x512xf32>
    %25 = vector.shape_cast %24 : vector<1x32x512xf32> to vector<32x512xf32>
    %c3_25 = arith.constant 3 : index
    %c0_26 = arith.constant 0 : index
    %c0_27 = arith.constant 0 : index
    %26 = vector.load %arg2[%c3_25, %c0_26, %c0_27] : memref<4x512x64xf32, #tpu.memory_space<vmem>>, vector<1x512x64xf32>
    %27 = vector.shape_cast %26 : vector<1x512x64xf32> to vector<512x64xf32>
    %cst_28 = arith.constant dense<0.000000e+00> : vector<32x64xf32>
    %28 = tpu.matmul %25, %27, %cst_28 {dimension_numbers = #tpu.dot_dimension_numbers<[1], [0], [0], [1], [0, 0, 1, 1], [], []>} : vector<32x512xf32>, vector<512x64xf32>, vector<32x64xf32> -> vector<32x64xf32>
    %c0_29 = arith.constant 0 : index
    %c0_30 = arith.constant 0 : index
    %29 = vector.load %arg3[%c0_29, %c0_30] : memref<1x64xf32, #tpu.memory_space<vmem>>, vector<1x64xf32>
    %30 = vector.broadcast %29 : vector<1x64xf32> to vector<32x64xf32>
    %31 = arith.addf %28, %30 : vector<32x64xf32>
    %cst_31 = arith.constant dense<0.000000e+00> : vector<64xf32>
    %32 = vector.multi_reduction <add>, %7, %cst_31 [0] : vector<32x64xf32> to vector<64xf32>
    %33 = vector.shape_cast %32 : vector<64xf32> to vector<1x64xf32>
    %cst_32 = arith.constant 0.000000e+00 : f32
    %34 = vector.broadcast %cst_32 : f32 to vector<1x64xf32>
    %35 = arith.addf %34, %33 : vector<1x64xf32>
    %cst_33 = arith.constant dense<0.000000e+00> : vector<64xf32>
    %36 = vector.multi_reduction <add>, %15, %cst_33 [0] : vector<32x64xf32> to vector<64xf32>
    %37 = vector.shape_cast %36 : vector<64xf32> to vector<1x64xf32>
    %38 = arith.addf %35, %37 : vector<1x64xf32>
    %cst_34 = arith.constant dense<0.000000e+00> : vector<64xf32>
    %39 = vector.multi_reduction <add>, %23, %cst_34 [0] : vector<32x64xf32> to vector<64xf32>
    %40 = vector.shape_cast %39 : vector<64xf32> to vector<1x64xf32>
    %41 = arith.addf %38, %40 : vector<1x64xf32>
    %cst_35 = arith.constant dense<0.000000e+00> : vector<64xf32>
    %42 = vector.multi_reduction <add>, %31, %cst_35 [0] : vector<32x64xf32> to vector<64xf32>
    %43 = vector.shape_cast %42 : vector<64xf32> to vector<1x64xf32>
    %44 = arith.addf %41, %43 : vector<1x64xf32>
    %cst_36 = arith.constant 1.280000e+02 : f32
    %45 = vector.broadcast %cst_36 : f32 to vector<1x64xf32>
    %46 = arith.divf %44, %45 : vector<1x64xf32>
    %47 = vector.broadcast %46 : vector<1x64xf32> to vector<32x64xf32>
    %48 = arith.subf %7, %47 : vector<32x64xf32>
    %49 = arith.mulf %48, %48 : vector<32x64xf32>
    %cst_37 = arith.constant dense<0.000000e+00> : vector<64xf32>
    %50 = vector.multi_reduction <add>, %49, %cst_37 [0] : vector<32x64xf32> to vector<64xf32>
    %51 = vector.shape_cast %50 : vector<64xf32> to vector<1x64xf32>
    %cst_38 = arith.constant 0.000000e+00 : f32
    %52 = vector.broadcast %cst_38 : f32 to vector<1x64xf32>
    %53 = arith.addf %52, %51 : vector<1x64xf32>
    %54 = vector.broadcast %46 : vector<1x64xf32> to vector<32x64xf32>
    %55 = arith.subf %15, %54 : vector<32x64xf32>
    %56 = arith.mulf %55, %55 : vector<32x64xf32>
    %cst_39 = arith.constant dense<0.000000e+00> : vector<64xf32>
    %57 = vector.multi_reduction <add>, %56, %cst_39 [0] : vector<32x64xf32> to vector<64xf32>
    %58 = vector.shape_cast %57 : vector<64xf32> to vector<1x64xf32>
    %59 = arith.addf %53, %58 : vector<1x64xf32>
    %60 = vector.broadcast %46 : vector<1x64xf32> to vector<32x64xf32>
    %61 = arith.subf %23, %60 : vector<32x64xf32>
    %62 = arith.mulf %61, %61 : vector<32x64xf32>
    %cst_40 = arith.constant dense<0.000000e+00> : vector<64xf32>
    %63 = vector.multi_reduction <add>, %62, %cst_40 [0] : vector<32x64xf32> to vector<64xf32>
    %64 = vector.shape_cast %63 : vector<64xf32> to vector<1x64xf32>
    %65 = arith.addf %59, %64 : vector<1x64xf32>
    %66 = vector.broadcast %46 : vector<1x64xf32> to vector<32x64xf32>
    %67 = arith.subf %31, %66 : vector<32x64xf32>
    %68 = arith.mulf %67, %67 : vector<32x64xf32>
    %cst_41 = arith.constant dense<0.000000e+00> : vector<64xf32>
    %69 = vector.multi_reduction <add>, %68, %cst_41 [0] : vector<32x64xf32> to vector<64xf32>
    %70 = vector.shape_cast %69 : vector<64xf32> to vector<1x64xf32>
    %71 = arith.addf %65, %70 : vector<1x64xf32>
    %cst_42 = arith.constant 1.280000e+02 : f32
    %72 = vector.broadcast %cst_42 : f32 to vector<1x64xf32>
    %73 = arith.divf %71, %72 : vector<1x64xf32>
    %cst_43 = arith.constant 9.99999974E-6 : f32
    %74 = vector.broadcast %cst_43 : f32 to vector<1x64xf32>
    %75 = arith.addf %73, %74 : vector<1x64xf32>
    %76 = math.rsqrt %75 : vector<1x64xf32>
    %c0_44 = arith.constant 0 : index
    %c0_45 = arith.constant 0 : index
    %77 = vector.load %arg4[%c0_44, %c0_45] : memref<1x64xf32, #tpu.memory_space<vmem>>, vector<1x64xf32>
    %78 = arith.mulf %76, %77 : vector<1x64xf32>
    %c0_46 = arith.constant 0 : index
    %c0_47 = arith.constant 0 : index
    %79 = vector.load %arg5[%c0_46, %c0_47] : memref<1x64xf32, #tpu.memory_space<vmem>>, vector<1x64xf32>
    %80 = arith.mulf %46, %78 : vector<1x64xf32>
    %81 = arith.subf %79, %80 : vector<1x64xf32>
    %82 = vector.broadcast %78 : vector<1x64xf32> to vector<32x64xf32>
    %83 = arith.mulf %7, %82 : vector<32x64xf32>
    %84 = vector.broadcast %81 : vector<1x64xf32> to vector<32x64xf32>
    %85 = arith.addf %83, %84 : vector<32x64xf32>
    %cst_48 = arith.constant 0.000000e+00 : f32
    %86 = vector.broadcast %cst_48 : f32 to vector<32x64xf32>
    %87 = arith.maximumf %85, %86 : vector<32x64xf32>
    %c0_49 = arith.constant 0 : index
    %c0_50 = arith.constant 0 : index
    %c0_51 = arith.constant 0 : index
    %88 = vector.load %arg6[%c0_49, %c0_50, %c0_51] : memref<4x32x64xf32, #tpu.memory_space<vmem>>, vector<1x32x64xf32>
    %89 = vector.shape_cast %88 : vector<1x32x64xf32> to vector<32x64xf32>
    %90 = vector.shape_cast %87 : vector<32x64xf32> to vector<1x32x64xf32>
    tpu.vector_store %arg6[%c0_49, %c0_50, %c0_51], %90 {strides = array<i32>} : memref<4x32x64xf32, #tpu.memory_space<vmem>>, vector<1x32x64xf32>,
    %91 = vector.broadcast %78 : vector<1x64xf32> to vector<32x64xf32>
    %92 = arith.mulf %15, %91 : vector<32x64xf32>
    %93 = vector.broadcast %81 : vector<1x64xf32> to vector<32x64xf32>
    %94 = arith.addf %92, %93 : vector<32x64xf32>
    %cst_52 = arith.constant 0.000000e+00 : f32
    %95 = vector.broadcast %cst_52 : f32 to vector<32x64xf32>
    %96 = arith.maximumf %94, %95 : vector<32x64xf32>
    %c1_53 = arith.constant 1 : index
    %c0_54 = arith.constant 0 : index
    %c0_55 = arith.constant 0 : index
    %97 = vector.load %arg6[%c1_53, %c0_54, %c0_55] : memref<4x32x64xf32, #tpu.memory_space<vmem>>, vector<1x32x64xf32>
    %98 = vector.shape_cast %97 : vector<1x32x64xf32> to vector<32x64xf32>
    %99 = vector.shape_cast %96 : vector<32x64xf32> to vector<1x32x64xf32>
    tpu.vector_store %arg6[%c1_53, %c0_54, %c0_55], %99 {strides = array<i32>} : memref<4x32x64xf32, #tpu.memory_space<vmem>>, vector<1x32x64xf32>,
    %100 = vector.broadcast %78 : vector<1x64xf32> to vector<32x64xf32>
    %101 = arith.mulf %23, %100 : vector<32x64xf32>
    %102 = vector.broadcast %81 : vector<1x64xf32> to vector<32x64xf32>
    %103 = arith.addf %101, %102 : vector<32x64xf32>
    %cst_56 = arith.constant 0.000000e+00 : f32
    %104 = vector.broadcast %cst_56 : f32 to vector<32x64xf32>
    %105 = arith.maximumf %103, %104 : vector<32x64xf32>
    %c2_57 = arith.constant 2 : index
    %c0_58 = arith.constant 0 : index
    %c0_59 = arith.constant 0 : index
    %106 = vector.load %arg6[%c2_57, %c0_58, %c0_59] : memref<4x32x64xf32, #tpu.memory_space<vmem>>, vector<1x32x64xf32>
    %107 = vector.shape_cast %106 : vector<1x32x64xf32> to vector<32x64xf32>
    %108 = vector.shape_cast %105 : vector<32x64xf32> to vector<1x32x64xf32>
    tpu.vector_store %arg6[%c2_57, %c0_58, %c0_59], %108 {strides = array<i32>} : memref<4x32x64xf32, #tpu.memory_space<vmem>>, vector<1x32x64xf32>,
    %109 = vector.broadcast %78 : vector<1x64xf32> to vector<32x64xf32>
    %110 = arith.mulf %31, %109 : vector<32x64xf32>
    %111 = vector.broadcast %81 : vector<1x64xf32> to vector<32x64xf32>
    %112 = arith.addf %110, %111 : vector<32x64xf32>
    %cst_60 = arith.constant 0.000000e+00 : f32
    %113 = vector.broadcast %cst_60 : f32 to vector<32x64xf32>
    %114 = arith.maximumf %112, %113 : vector<32x64xf32>
    %c3_61 = arith.constant 3 : index
    %c0_62 = arith.constant 0 : index
    %c0_63 = arith.constant 0 : index
    %115 = vector.load %arg6[%c3_61, %c0_62, %c0_63] : memref<4x32x64xf32, #tpu.memory_space<vmem>>, vector<1x32x64xf32>
    %116 = vector.shape_cast %115 : vector<1x32x64xf32> to vector<32x64xf32>
    %117 = vector.shape_cast %114 : vector<32x64xf32> to vector<1x32x64xf32>
    tpu.vector_store %arg6[%c3_61, %c0_62, %c0_63], %117 {strides = array<i32>} : memref<4x32x64xf32, #tpu.memory_space<vmem>>, vector<1x32x64xf32>,
    return
  }
  func.func @transform_0(%arg0: i32) -> (i32, i32, i32) {
    %c0_i32 = arith.constant 0 : i32
    %c0_i32_0 = arith.constant 0 : i32
    %c0_i32_1 = arith.constant 0 : i32
    %c0_i32_2 = arith.constant 0 : i32
    return %c0_i32, %c0_i32_0, %c0_i32_1 : i32, i32, i32
  }
  func.func @transform_1(%arg0: i32) -> (i32, i32, i32) {
    %c0_i32 = arith.constant 0 : i32
    %c0_i32_0 = arith.constant 0 : i32
    %c0_i32_1 = arith.constant 0 : i32
    %c0_i32_2 = arith.constant 0 : i32
    return %c0_i32, %c0_i32_0, %c0_i32_1 : i32, i32, i32
  }
  func.func @transform_2(%arg0: i32) -> (i32, i32) {
    %c0_i32 = arith.constant 0 : i32
    %c0_i32_0 = arith.constant 0 : i32
    %c0_i32_1 = arith.constant 0 : i32
    return %c0_i32, %c0_i32_0 : i32, i32
  }
  func.func @transform_3(%arg0: i32) -> (i32, i32) {
    %c0_i32 = arith.constant 0 : i32
    %c0_i32_0 = arith.constant 0 : i32
    %c0_i32_1 = arith.constant 0 : i32
    return %c0_i32, %c0_i32_0 : i32, i32
  }
  func.func @transform_4(%arg0: i32) -> (i32, i32) {
    %c0_i32 = arith.constant 0 : i32
    %c0_i32_0 = arith.constant 0 : i32
    %c0_i32_1 = arith.constant 0 : i32
    return %c0_i32, %c0_i32_0 : i32, i32
  }
  func.func @transform_5(%arg0: i32) -> (i32, i32, i32) {
    %c0_i32 = arith.constant 0 : i32
    %c0_i32_0 = arith.constant 0 : i32
    %c0_i32_1 = arith.constant 0 : i32
    %c0_i32_2 = arith.constant 0 : i32
    return %c0_i32, %c0_i32_0, %c0_i32_1 : i32, i32, i32
  }
}

module attributes {stable_mosaic.version = 11 : i64} {
  func.func @_ct_tanh_kernel(%arg0: i32, %arg1: memref<4x128x256xf32, #tpu.memory_space<vmem>>, %arg2: memref<4x256xf32, #tpu.memory_space<vmem>>, %arg3: memref<1x1xf32, #tpu.memory_space<vmem>>, %arg4: memref<128x4xf32, #tpu.memory_space<vmem>>) attributes {dimension_semantics = [#tpu.dimension_semantics<arbitrary>], iteration_bounds = array<i64: 1>, scalar_prefetch = 0 : i64, scratch_operands = 0 : i64, tpu.core_type = #tpu.core_type<tc>, window_params = [{pipeline_mode = #tpu.pipeline_mode<synchronous>, transform_indices = @transform_0, window_bounds = array<i64: 4, 128, 256>}, {pipeline_mode = #tpu.pipeline_mode<synchronous>, transform_indices = @transform_1, window_bounds = array<i64: 4, 256>}, {pipeline_mode = #tpu.pipeline_mode<synchronous>, transform_indices = @transform_2, window_bounds = array<i64: 1, 1>}, {pipeline_mode = #tpu.pipeline_mode<synchronous>, transform_indices = @transform_3, window_bounds = array<i64: 128, 4>}]} {
    %c0 = arith.constant 0 : index
    %c0_0 = arith.constant 0 : index
    %c0_1 = arith.constant 0 : index
    %0 = vector.load %arg1[%c0, %c0_0, %c0_1] : memref<4x128x256xf32, #tpu.memory_space<vmem>>, vector<1x128x256xf32>
    %1 = vector.shape_cast %0 : vector<1x128x256xf32> to vector<128x256xf32>
    %c0_2 = arith.constant 0 : index
    %c0_3 = arith.constant 0 : index
    %2 = vector.load %arg2[%c0_2, %c0_3] : memref<4x256xf32, #tpu.memory_space<vmem>>, vector<1x256xf32>
    %3 = vector.broadcast %2 : vector<1x256xf32> to vector<128x256xf32>
    %4 = arith.mulf %1, %3 : vector<128x256xf32>
    %cst = arith.constant dense<0.000000e+00> : vector<128xf32>
    %5 = vector.multi_reduction <add>, %4, %cst [1] : vector<128x256xf32> to vector<128xf32>
    %6 = vector.shape_cast %5 : vector<128xf32> to vector<128x1xf32>
    %c0_4 = arith.constant 0 : index
    %c0_5 = arith.constant 0 : index
    %7 = vector.load %arg3[%c0_4, %c0_5] : memref<1x1xf32, #tpu.memory_space<vmem>>, vector<1x1xf32>
    %8 = vector.broadcast %7 : vector<1x1xf32> to vector<128x1xf32>
    %9 = arith.addf %6, %8 : vector<128x1xf32>
    %10 = math.tanh %9 : vector<128x1xf32>
    %c0_6 = arith.constant 0 : index
    %c0_7 = arith.constant 0 : index
    %11 = vector.load %arg4[%c0_6, %c0_7] : memref<128x4xf32, #tpu.memory_space<vmem>>, vector<128x1xf32>
    tpu.vector_store %arg4[%c0_6, %c0_7], %10 {strides = array<i32>} : memref<128x4xf32, #tpu.memory_space<vmem>>, vector<128x1xf32>,
    %c1 = arith.constant 1 : index
    %c0_8 = arith.constant 0 : index
    %c0_9 = arith.constant 0 : index
    %12 = vector.load %arg1[%c1, %c0_8, %c0_9] : memref<4x128x256xf32, #tpu.memory_space<vmem>>, vector<1x128x256xf32>
    %13 = vector.shape_cast %12 : vector<1x128x256xf32> to vector<128x256xf32>
    %c1_10 = arith.constant 1 : index
    %c0_11 = arith.constant 0 : index
    %14 = vector.load %arg2[%c1_10, %c0_11] : memref<4x256xf32, #tpu.memory_space<vmem>>, vector<1x256xf32>
    %15 = vector.broadcast %14 : vector<1x256xf32> to vector<128x256xf32>
    %16 = arith.mulf %13, %15 : vector<128x256xf32>
    %cst_12 = arith.constant dense<0.000000e+00> : vector<128xf32>
    %17 = vector.multi_reduction <add>, %16, %cst_12 [1] : vector<128x256xf32> to vector<128xf32>
    %18 = vector.shape_cast %17 : vector<128xf32> to vector<128x1xf32>
    %c0_13 = arith.constant 0 : index
    %c0_14 = arith.constant 0 : index
    %19 = vector.load %arg3[%c0_13, %c0_14] : memref<1x1xf32, #tpu.memory_space<vmem>>, vector<1x1xf32>
    %20 = vector.broadcast %19 : vector<1x1xf32> to vector<128x1xf32>
    %21 = arith.addf %18, %20 : vector<128x1xf32>
    %22 = math.tanh %21 : vector<128x1xf32>
    %c0_15 = arith.constant 0 : index
    %c1_16 = arith.constant 1 : index
    %23 = vector.load %arg4[%c0_15, %c1_16] : memref<128x4xf32, #tpu.memory_space<vmem>>, vector<128x1xf32>
    tpu.vector_store %arg4[%c0_15, %c1_16], %22 {strides = array<i32>} : memref<128x4xf32, #tpu.memory_space<vmem>>, vector<128x1xf32>,
    %c2 = arith.constant 2 : index
    %c0_17 = arith.constant 0 : index
    %c0_18 = arith.constant 0 : index
    %24 = vector.load %arg1[%c2, %c0_17, %c0_18] : memref<4x128x256xf32, #tpu.memory_space<vmem>>, vector<1x128x256xf32>
    %25 = vector.shape_cast %24 : vector<1x128x256xf32> to vector<128x256xf32>
    %c2_19 = arith.constant 2 : index
    %c0_20 = arith.constant 0 : index
    %26 = vector.load %arg2[%c2_19, %c0_20] : memref<4x256xf32, #tpu.memory_space<vmem>>, vector<1x256xf32>
    %27 = vector.broadcast %26 : vector<1x256xf32> to vector<128x256xf32>
    %28 = arith.mulf %25, %27 : vector<128x256xf32>
    %cst_21 = arith.constant dense<0.000000e+00> : vector<128xf32>
    %29 = vector.multi_reduction <add>, %28, %cst_21 [1] : vector<128x256xf32> to vector<128xf32>
    %30 = vector.shape_cast %29 : vector<128xf32> to vector<128x1xf32>
    %c0_22 = arith.constant 0 : index
    %c0_23 = arith.constant 0 : index
    %31 = vector.load %arg3[%c0_22, %c0_23] : memref<1x1xf32, #tpu.memory_space<vmem>>, vector<1x1xf32>
    %32 = vector.broadcast %31 : vector<1x1xf32> to vector<128x1xf32>
    %33 = arith.addf %30, %32 : vector<128x1xf32>
    %34 = math.tanh %33 : vector<128x1xf32>
    %c0_24 = arith.constant 0 : index
    %c2_25 = arith.constant 2 : index
    %35 = vector.load %arg4[%c0_24, %c2_25] : memref<128x4xf32, #tpu.memory_space<vmem>>, vector<128x1xf32>
    tpu.vector_store %arg4[%c0_24, %c2_25], %34 {strides = array<i32>} : memref<128x4xf32, #tpu.memory_space<vmem>>, vector<128x1xf32>,
    %c3 = arith.constant 3 : index
    %c0_26 = arith.constant 0 : index
    %c0_27 = arith.constant 0 : index
    %36 = vector.load %arg1[%c3, %c0_26, %c0_27] : memref<4x128x256xf32, #tpu.memory_space<vmem>>, vector<1x128x256xf32>
    %37 = vector.shape_cast %36 : vector<1x128x256xf32> to vector<128x256xf32>
    %c3_28 = arith.constant 3 : index
    %c0_29 = arith.constant 0 : index
    %38 = vector.load %arg2[%c3_28, %c0_29] : memref<4x256xf32, #tpu.memory_space<vmem>>, vector<1x256xf32>
    %39 = vector.broadcast %38 : vector<1x256xf32> to vector<128x256xf32>
    %40 = arith.mulf %37, %39 : vector<128x256xf32>
    %cst_30 = arith.constant dense<0.000000e+00> : vector<128xf32>
    %41 = vector.multi_reduction <add>, %40, %cst_30 [1] : vector<128x256xf32> to vector<128xf32>
    %42 = vector.shape_cast %41 : vector<128xf32> to vector<128x1xf32>
    %c0_31 = arith.constant 0 : index
    %c0_32 = arith.constant 0 : index
    %43 = vector.load %arg3[%c0_31, %c0_32] : memref<1x1xf32, #tpu.memory_space<vmem>>, vector<1x1xf32>
    %44 = vector.broadcast %43 : vector<1x1xf32> to vector<128x1xf32>
    %45 = arith.addf %42, %44 : vector<128x1xf32>
    %46 = math.tanh %45 : vector<128x1xf32>
    %c0_33 = arith.constant 0 : index
    %c3_34 = arith.constant 3 : index
    %47 = vector.load %arg4[%c0_33, %c3_34] : memref<128x4xf32, #tpu.memory_space<vmem>>, vector<128x1xf32>
    tpu.vector_store %arg4[%c0_33, %c3_34], %46 {strides = array<i32>} : memref<128x4xf32, #tpu.memory_space<vmem>>, vector<128x1xf32>,
    return
  }
  func.func @transform_0(%arg0: i32) -> (i32, i32, i32) {
    %c0_i32 = arith.constant 0 : i32
    %c0_i32_0 = arith.constant 0 : i32
    %c0_i32_1 = arith.constant 0 : i32
    %c0_i32_2 = arith.constant 0 : i32
    return %c0_i32, %c0_i32_0, %c0_i32_1 : i32, i32, i32
  }
  func.func @transform_1(%arg0: i32) -> (i32, i32) {
    %c0_i32 = arith.constant 0 : i32
    %c0_i32_0 = arith.constant 0 : i32
    %c0_i32_1 = arith.constant 0 : i32
    return %c0_i32, %c0_i32_0 : i32, i32
  }
  func.func @transform_2(%arg0: i32) -> (i32, i32) {
    %c0_i32 = arith.constant 0 : i32
    %c0_i32_0 = arith.constant 0 : i32
    %c0_i32_1 = arith.constant 0 : i32
    return %c0_i32, %c0_i32_0 : i32, i32
  }
  func.func @transform_3(%arg0: i32) -> (i32, i32) {
    %c0_i32 = arith.constant 0 : i32
    %c0_i32_0 = arith.constant 0 : i32
    %c0_i32_1 = arith.constant 0 : i32
    return %c0_i32, %c0_i32_0 : i32, i32
  }
}

</mosaic_0001>

<llo_original>
// kernel: mul.8
$region0: #{mul.8}
  #allocation0 [shape = 's32[1]{0}', space=sflag, size = 0x4, scoped, tag = 'scoped memory for mul.8']
  %s0 = inlined_call_operand.vmem [shape: f32[2,32], index: 0, kind: input, shape index: {}]
  %s1 = inlined_call_operand.vmem [shape: f32[2,32], index: 1, kind: input, shape index: {}]
  %s2 = inlined_call_operand.vmem [shape: f32[2,32], index: 2, kind: output, shape index: {}]
  %v3 = vld [vmem:[%s0] sm:$0x3]
  %v4 = vld [vmem:[%s1] sm:$0x3]
  %5 = xla_tuple %v3, %v4
  %6 = xla_tuple %5
  %v7 = vmul.f32 %v3, %v4
  %8 = xla_tuple %v7
  %9 = vst [vmem:[%s2] sm:$0x3] %v7

// kernel: generator_forward.3
$region0: #{generator_forward.3}
  #allocation0 [shape = 'u32[]', space=smem, size = 0x4, offset = 0x4, fixed_abs, tag = 'smem constant byte address 0x4 - core index']
  #allocation1 [shape = 'u32[144,128]{1,0:T(1,128)}', space=vmem, size = 0x12000, scoped, tag = 'internal scratch']
  %s0 = inlined_call_operand.vmem [shape: f32[32,512], index: 0, kind: input, shape index: {}]
  %s1 = inlined_call_operand.vmem [shape: f32[512,128], index: 1, kind: input, shape index: {}]
  %s2 = inlined_call_operand.vmem [shape: f32[32,128], index: 2, kind: input, shape index: {}]
  %s3 = inlined_call_operand.vmem [shape: f32[1,128], index: 3, kind: input, shape index: {}]
  %s4 = inlined_call_operand.vmem [shape: f32[1,128], index: 4, kind: input, shape index: {}]
  %s5 = inlined_call_operand.vmem [shape: f32[32,128], index: 5, kind: output, shape index: {}]
  %s6 = sld [smem:[#allocation0]]
  $region30: #{generator_forward.3} parent=0
    _
  %s8 = ssub.s32 1, %s6
  %s9 = scalar_select 0, %s8, %s6
  // Predicated region
  $region2: #{generator_forward.3} parent=0 // pred_check
    _
  $region3: #{generator_forward.3} parent=0 // pred_check_branch
    %11 = sbr.rel (0) target = $region5
  $region4: #{generator_forward.3} parent=0 // pred_region
    _
  $region5: #{generator_forward.3} parent=0 // pred_fallthru
    _
  // Predicated region
  $region6: #{generator_forward.3} parent=0 // pred_check
    _
  $region7: #{generator_forward.3} parent=0 // pred_check_branch
    %13 = sbr.rel (0) target = $region9
  $region8: #{generator_forward.3} parent=0 // pred_region
    _
  $region9: #{generator_forward.3} parent=0 // pred_fallthru
    _
  // Predicated region
  $region10: #{generator_forward.3} parent=0 // pred_check
    _
  $region11: #{generator_forward.3} parent=0 // pred_check_branch
    %15 = sbr.rel (0) target = $region13
  $region12: #{generator_forward.3} parent=0 // pred_region
    _
  $region13: #{generator_forward.3} parent=0 // pred_fallthru
    _
  // Predicated region
  $region14: #{generator_forward.3} parent=0 // pred_check
    _
  $region15: #{generator_forward.3} parent=0 // pred_check_branch
    %17 = sbr.rel (0) target = $region17
  $region16: #{generator_forward.3} parent=0 // pred_region
    _
  $region17: #{generator_forward.3} parent=0 // pred_fallthru
    _
  // Predicated region
  $region18: #{generator_forward.3} parent=0 // pred_check
    _
  $region19: #{generator_forward.3} parent=0 // pred_check_branch
    %19 = sbr.rel (0) target = $region21
  $region20: #{generator_forward.3} parent=0 // pred_region
    _
  $region21: #{generator_forward.3} parent=0 // pred_fallthru
    _
  %v20 = vld [vmem:[%s0] sm:$0xff]
  %v21 = vld [vmem:[%s0 + $0x8] sm:$0xff]
  %v22 = vld [vmem:[%s0 + $0x10] sm:$0xff]
  %v23 = vld [vmem:[%s0 + $0x18] sm:$0xff]
  %v24 = vld [vmem:[%s0 + $0x20] sm:$0xff]
  %v25 = vld [vmem:[%s0 + $0x28] sm:$0xff]
  %v26 = vld [vmem:[%s0 + $0x30] sm:$0xff]
  %v27 = vld [vmem:[%s0 + $0x38] sm:$0xff]
  %v28 = vld [vmem:[%s0 + $0x40] sm:$0xff]
  %v29 = vld [vmem:[%s0 + $0x48] sm:$0xff]
  %v30 = vld [vmem:[%s0 + $0x50] sm:$0xff]
  %v31 = vld [vmem:[%s0 + $0x58] sm:$0xff]
  %v32 = vld [vmem:[%s0 + $0x60] sm:$0xff]
  %v33 = vld [vmem:[%s0 + $0x68] sm:$0xff]
  %v34 = vld [vmem:[%s0 + $0x70] sm:$0xff]
  %v35 = vld [vmem:[%s0 + $0x78] sm:$0xff]
  %v36 = vld [vmem:[%s1] sm:$0xff]
  %v37 = vld [vmem:[%s1 + $0x8] sm:$0xff]
  %v38 = vld [vmem:[%s1 + $0x10] sm:$0xff]
  %v39 = vld [vmem:[%s1 + $0x18] sm:$0xff]
  %v40 = vld [vmem:[%s1 + $0x20] sm:$0xff]
  %v41 = vld [vmem:[%s1 + $0x28] sm:$0xff]
  %v42 = vld [vmem:[%s1 + $0x30] sm:$0xff]
  %v43 = vld [vmem:[%s1 + $0x38] sm:$0xff]
  %v44 = vld [vmem:[%s1 + $0x40] sm:$0xff]
  %v45 = vld [vmem:[%s1 + $0x48] sm:$0xff]
  %v46 = vld [vmem:[%s1 + $0x50] sm:$0xff]
  %v47 = vld [vmem:[%s1 + $0x58] sm:$0xff]
  %v48 = vld [vmem:[%s1 + $0x60] sm:$0xff]
  %v49 = vld [vmem:[%s1 + $0x68] sm:$0xff]
  %v50 = vld [vmem:[%s1 + $0x70] sm:$0xff]
  %v51 = vld [vmem:[%s1 + $0x78] sm:$0xff]
  %v52 = vld [vmem:[%s1 + $0x80] sm:$0xff]
  %v53 = vld [vmem:[%s1 + $0x88] sm:$0xff]
  %v54 = vld [vmem:[%s1 + $0x90] sm:$0xff]
  %v55 = vld [vmem:[%s1 + $0x98] sm:$0xff]
  %v56 = vld [vmem:[%s1 + $0xa0] sm:$0xff]
  %v57 = vld [vmem:[%s1 + $0xa8] sm:$0xff]
  %v58 = vld [vmem:[%s1 + $0xb0] sm:$0xff]
  %v59 = vld [vmem:[%s1 + $0xb8] sm:$0xff]
  %v60 = vld [vmem:[%s1 + $0xc0] sm:$0xff]
  %v61 = vld [vmem:[%s1 + $0xc8] sm:$0xff]
  %v62 = vld [vmem:[%s1 + $0xd0] sm:$0xff]
  %v63 = vld [vmem:[%s1 + $0xd8] sm:$0xff]
  %v64 = vld [vmem:[%s1 + $0xe0] sm:$0xff]
  %v65 = vld [vmem:[%s1 + $0xe8] sm:$0xff]
  %v66 = vld [vmem:[%s1 + $0xf0] sm:$0xff]
  %v67 = vld [vmem:[%s1 + $0xf8] sm:$0xff]
  %v68 = vld [vmem:[%s1 + $0x100] sm:$0xff]
  %v69 = vld [vmem:[%s1 + $0x108] sm:$0xff]
  %v70 = vld [vmem:[%s1 + $0x110] sm:$0xff]
  %v71 = vld [vmem:[%s1 + $0x118] sm:$0xff]
  %v72 = vld [vmem:[%s1 + $0x120] sm:$0xff]
  %v73 = vld [vmem:[%s1 + $0x128] sm:$0xff]
  %v74 = vld [vmem:[%s1 + $0x130] sm:$0xff]
  %v75 = vld [vmem:[%s1 + $0x138] sm:$0xff]
  %v76 = vld [vmem:[%s1 + $0x140] sm:$0xff]
  %v77 = vld [vmem:[%s1 + $0x148] sm:$0xff]
  %v78 = vld [vmem:[%s1 + $0x150] sm:$0xff]
  %v79 = vld [vmem:[%s1 + $0x158] sm:$0xff]
  %v80 = vld [vmem:[%s1 + $0x160] sm:$0xff]
  %v81 = vld [vmem:[%s1 + $0x168] sm:$0xff]
  %v82 = vld [vmem:[%s1 + $0x170] sm:$0xff]
  %v83 = vld [vmem:[%s1 + $0x178] sm:$0xff]
  %v84 = vld [vmem:[%s1 + $0x180] sm:$0xff]
  %v85 = vld [vmem:[%s1 + $0x188] sm:$0xff]
  %v86 = vld [vmem:[%s1 + $0x190] sm:$0xff]
  %v87 = vld [vmem:[%s1 + $0x198] sm:$0xff]
  %v88 = vld [vmem:[%s1 + $0x1a0] sm:$0xff]
  %v89 = vld [vmem:[%s1 + $0x1a8] sm:$0xff]
  %v90 = vld [vmem:[%s1 + $0x1b0] sm:$0xff]
  %v91 = vld [vmem:[%s1 + $0x1b8] sm:$0xff]
  %v92 = vld [vmem:[%s1 + $0x1c0] sm:$0xff]
  %v93 = vld [vmem:[%s1 + $0x1c8] sm:$0xff]
  %v94 = vld [vmem:[%s1 + $0x1d0] sm:$0xff]
  %v95 = vld [vmem:[%s1 + $0x1d8] sm:$0xff]
  %v96 = vld [vmem:[%s1 + $0x1e0] sm:$0xff]
  %v97 = vld [vmem:[%s1 + $0x1e8] sm:$0xff]
  %v98 = vld [vmem:[%s1 + $0x1f0] sm:$0xff]
  %v99 = vld [vmem:[%s1 + $0x1f8] sm:$0xff]
  %v100 = vld [vmem:[%s2] sm:$0xff]
  %v101 = vld [vmem:[%s2 + $0x8] sm:$0xff]
  %v102 = vld [vmem:[%s2 + $0x10] sm:$0xff]
  %v103 = vld [vmem:[%s2 + $0x18] sm:$0xff]
  %104 = vmatprep.subr.mxu0 0.0
  %105 = vmatpush1.msra.mxu0 %v51
  %106 = vmatprep.subr.mxu0 0.0
  %107 = vmatpush1.msra.mxu0 %v50
  %108 = vmatprep.subr.mxu0 0.0
  %109 = vmatpush1.msra.mxu0 %v49
  %110 = vmatprep.subr.mxu0 0.0
  %111 = vmatpush1.msra.mxu0 %v48
  %112 = vmatprep.subr.mxu0 0.0
  %113 = vmatpush1.msra.mxu0 %v47
  %114 = vmatprep.subr.mxu0 0.0
  %115 = vmatpush1.msra.mxu0 %v46
  %116 = vmatprep.subr.mxu0 0.0
  %117 = vmatpush1.msra.mxu0 %v45
  %118 = vmatprep.subr.mxu0 0.0
  %119 = vmatpush1.msra.mxu0 %v44
  %120 = vmatprep.subr.mxu0 0.0
  %121 = vmatpush1.msra.mxu0 %v43
  %122 = vmatprep.subr.mxu0 0.0
  %123 = vmatpush1.msra.mxu0 %v42
  %124 = vmatprep.subr.mxu0 0.0
  %125 = vmatpush1.msra.mxu0 %v41
  %126 = vmatprep.subr.mxu0 0.0
  %127 = vmatpush1.msra.mxu0 %v40
  %128 = vmatprep.subr.mxu0 0.0
  %129 = vmatpush1.msra.mxu0 %v39
  %130 = vmatprep.subr.mxu0 0.0
  %131 = vmatpush1.msra.mxu0 %v38
  %132 = vmatprep.subr.mxu0 0.0
  %133 = vmatpush1.msra.mxu0 %v37
  %134 = vmatprep.subr.mxu0 0.0
  %135 = vmatpush1.msra.mxu0 %v36
  %136 = vmatprep.subr.mxu0 0.0
  %137 = vmatpush2.msra.mxu0 %v67
  %138 = vmatprep.subr.mxu0 0.0
  %139 = vmatpush2.msra.mxu0 %v66
  %140 = vmatprep.subr.mxu0 0.0
  %141 = vmatpush2.msra.mxu0 %v65
  %142 = vmatprep.subr.mxu0 0.0
  %143 = vmatpush2.msra.mxu0 %v64
  %144 = vmatprep.subr.mxu0 0.0
  %145 = vmatpush2.msra.mxu0 %v63
  %146 = vmatprep.subr.mxu0 0.0
  %147 = vmatpush2.msra.mxu0 %v62
  %148 = vmatprep.subr.mxu0 0.0
  %149 = vmatpush2.msra.mxu0 %v61
  %150 = vmatprep.subr.mxu0 0.0
  %151 = vmatpush2.msra.mxu0 %v60
  %152 = vmatprep.subr.mxu0 0.0
  %153 = vmatpush2.msra.mxu0 %v59
  %154 = vmatprep.subr.mxu0 0.0
  %155 = vmatpush2.msra.mxu0 %v58
  %156 = vmatprep.subr.mxu0 0.0
  %157 = vmatpush2.msra.mxu0 %v57
  %158 = vmatprep.subr.mxu0 0.0
  %159 = vmatpush2.msra.mxu0 %v56
  %160 = vmatprep.subr.mxu0 0.0
  %161 = vmatpush2.msra.mxu0 %v55
  %162 = vmatprep.subr.mxu0 0.0
  %163 = vmatpush2.msra.mxu0 %v54
  %164 = vmatprep.subr.mxu0 0.0
  %165 = vmatpush2.msra.mxu0 %v53
  %166 = vmatprep.subr.mxu0 0.0
  %167 = vmatpush2.msra.mxu0 %v52
  %168 = vmatprep.mubr.f32.mxu0 %v21
  %169 = vmatmul.mubr.f32.gmra.mxu0 %v20
  %v170 = vpop.f32.mrf.mxu0
  %v171 = vadd.f32 %v100, %v170
  %v172 = vpop.f32.mrf.mxu0
  %173 = vmatprep.mubr.f32.mxu0 %v25
  %174 = vmatmul.mubr.f32.gmra.mxu0 %v24
  %v175 = vpop.f32.mrf.mxu0
  %v176 = vadd.f32 %v101, %v175
  %v177 = vpop.f32.mrf.mxu0
  %178 = vmatprep.mubr.f32.mxu0 %v29
  %179 = vmatmul.mubr.f32.gmra.mxu0 %v28
  %v180 = vpop.f32.mrf.mxu0
  %v181 = vadd.f32 %v102, %v180
  %v182 = vpop.f32.mrf.mxu0
  %183 = vmatprep.mubr.f32.mxu0 %v33
  %184 = vmatmul.mubr.f32.gmra.mxu0 %v32
  %v185 = vpop.f32.mrf.mxu0
  %v186 = vadd.f32 %v103, %v185
  %v187 = vpop.f32.mrf.mxu0
  %188 = vdwg.mxu0
  %189 = vmatprep.subr.mxu0 0.0
  %190 = vmatpush1.msra.mxu0 %v83
  %191 = vmatprep.subr.mxu0 0.0
  %192 = vmatpush1.msra.mxu0 %v82
  %193 = vmatprep.subr.mxu0 0.0
  %194 = vmatpush1.msra.mxu0 %v81
  %195 = vmatprep.subr.mxu0 0.0
  %196 = vmatpush1.msra.mxu0 %v80
  %197 = vmatprep.subr.mxu0 0.0
  %198 = vmatpush1.msra.mxu0 %v79
  %199 = vmatprep.subr.mxu0 0.0
  %200 = vmatpush1.msra.mxu0 %v78
  %201 = vmatprep.subr.mxu0 0.0
  %202 = vmatpush1.msra.mxu0 %v77
  %203 = vmatprep.subr.mxu0 0.0
  %204 = vmatpush1.msra.mxu0 %v76
  %205 = vmatprep.subr.mxu0 0.0
  %206 = vmatpush1.msra.mxu0 %v75
  %207 = vmatprep.subr.mxu0 0.0
  %208 = vmatpush1.msra.mxu0 %v74
  %209 = vmatprep.subr.mxu0 0.0
  %210 = vmatpush1.msra.mxu0 %v73
  %211 = vmatprep.subr.mxu0 0.0
  %212 = vmatpush1.msra.mxu0 %v72
  %213 = vmatprep.subr.mxu0 0.0
  %214 = vmatpush1.msra.mxu0 %v71
  %215 = vmatprep.subr.mxu0 0.0
  %216 = vmatpush1.msra.mxu0 %v70
  %217 = vmatprep.subr.mxu0 0.0
  %218 = vmatpush1.msra.mxu0 %v69
  %219 = vmatprep.subr.mxu0 0.0
  %220 = vmatpush1.msra.mxu0 %v68
  %221 = vmatprep.subr.mxu0 0.0
  %222 = vmatpush2.msra.mxu0 %v99
  %223 = vmatprep.subr.mxu0 0.0
  %224 = vmatpush2.msra.mxu0 %v98
  %225 = vmatprep.subr.mxu0 0.0
  %226 = vmatpush2.msra.mxu0 %v97
  %227 = vmatprep.subr.mxu0 0.0
  %228 = vmatpush2.msra.mxu0 %v96
  %229 = vmatprep.subr.mxu0 0.0
  %230 = vmatpush2.msra.mxu0 %v95
  %231 = vmatprep.subr.mxu0 0.0
  %232 = vmatpush2.msra.mxu0 %v94
  %233 = vmatprep.subr.mxu0 0.0
  %234 = vmatpush2.msra.mxu0 %v93
  %235 = vmatprep.subr.mxu0 0.0
  %236 = vmatpush2.msra.mxu0 %v92
  %237 = vmatprep.subr.mxu0 0.0
  %238 = vmatpush2.msra.mxu0 %v91
  %239 = vmatprep.subr.mxu0 0.0
  %240 = vmatpush2.msra.mxu0 %v90
  %241 = vmatprep.subr.mxu0 0.0
  %242 = vmatpush2.msra.mxu0 %v89
  %243 = vmatprep.subr.mxu0 0.0
  %244 = vmatpush2.msra.mxu0 %v88
  %245 = vmatprep.subr.mxu0 0.0
  %246 = vmatpush2.msra.mxu0 %v87
  %247 = vmatprep.subr.mxu0 0.0
  %248 = vmatpush2.msra.mxu0 %v86
  %249 = vmatprep.subr.mxu0 0.0
  %250 = vmatpush2.msra.mxu0 %v85
  %251 = vmatprep.subr.mxu0 0.0
  %252 = vmatpush2.msra.mxu0 %v84
  %253 = vmatprep.mubr.f32.mxu0 %v23
  %254 = vmatmul.mubr.f32.gmra.mxu0 %v22
  %v255 = vpop.f32.mrf.mxu0
  %v256 = vadd.f32 %v171, %v255
  %v257 = vpop.f32.mrf.mxu0
  %258 = vmatprep.mubr.f32.mxu0 %v27
  %259 = vmatmul.mubr.f32.gmra.mxu0 %v26
  %v260 = vpop.f32.mrf.mxu0
  %v261 = vadd.f32 %v176, %v260
  %v262 = vpop.f32.mrf.mxu0
  %263 = vmatprep.mubr.f32.mxu0 %v31
  %264 = vmatmul.mubr.f32.gmra.mxu0 %v30
  %v265 = vpop.f32.mrf.mxu0
  %v266 = vadd.f32 %v181, %v265
  %v267 = vpop.f32.mrf.mxu0
  %268 = vmatprep.mubr.f32.mxu0 %v35
  %269 = vmatmul.mubr.f32.gmra.mxu0 %v34
  %v270 = vpop.f32.mrf.mxu0
  %v271 = vadd.f32 %v186, %v270
  %v272 = vpop.f32.mrf.mxu0
  %273 = vdwg.mxu0
  %v274 = vadd.f32 %v256, %v261
  %v275 = vadd.f32 %v274, %v266
  %v276 = vadd.f32 %v275, %v271
  %v277 = vrot.slane %v276, 4
  %v278 = vadd.f32 %v276, %v277
  %v279 = vrot.slane %v278, 2
  %v280 = vadd.f32 %v278, %v279
  %v281 = vrot.slane %v280, 1
  %v282 = vadd.f32 %v280, %v281
  %v283 = vrcp.pop 32.0
  %v284 = vmul.f32 %v282, %v283
  %v285 = vsub.f32 %v256, %v284
  %v286 = vsub.f32 %v261, %v284
  %v287 = vsub.f32 %v266, %v284
  %v288 = vsub.f32 %v271, %v284
  %v289 = vmul.f32 %v285, %v285
  %v290 = vmul.f32 %v286, %v286
  %v291 = vmul.f32 %v287, %v287
  %v292 = vmul.f32 %v288, %v288
  %v293 = vadd.f32 %v289, %v290
  %v294 = vadd.f32 %v293, %v291
  %v295 = vadd.f32 %v294, %v292
  %v296 = vrot.slane %v295, 4
  %v297 = vadd.f32 %v295, %v296
  %v298 = vrot.slane %v297, 2
  %v299 = vadd.f32 %v297, %v298
  %v300 = vrot.slane %v299, 1
  %v301 = vadd.f32 %v299, %v300
  %v302 = vmul.f32 %v301, %v283
  %v303 = vadd.f32 %v302, 1e-05
  %v304 = vrsqrt.pop %v303
  %v305 = vmul.f32 %v285, %v304
  %v306 = vmul.f32 %v286, %v304
  %v307 = vmul.f32 %v287, %v304
  %v308 = vmul.f32 %v288, %v304
  %v309 = vld [vmem:[%s3] sm:$0x1]
  %v311 = vlaneseq
  %v312 = vshrl.u32 %v311, 7
  %v313 = vsub.s32 0, %v312
  %v314 = vrot.slane %v309, %v313
  %v316 = vmul.f32 %v305, %v314
  %v317 = vmul.f32 %v306, %v314
  %v318 = vmul.f32 %v307, %v314
  %v319 = vmul.f32 %v308, %v314
  %v320 = vld [vmem:[%s4] sm:$0x1]
  %v322 = vlaneseq
  %v323 = vshrl.u32 %v322, 7
  %v324 = vsub.s32 0, %v323
  %v325 = vrot.slane %v320, %v324
  %v327 = vadd.f32 %v316, %v325
  %v328 = vadd.f32 %v317, %v325
  %v329 = vadd.f32 %v318, %v325
  %v330 = vadd.f32 %v319, %v325
  %331 = vst [vmem:[%s5] sm:$0xff] %v327
  %332 = vst [vmem:[%s5 + $0x8] sm:$0xff] %v328
  %333 = vst [vmem:[%s5 + $0x10] sm:$0xff] %v329
  %334 = vst [vmem:[%s5 + $0x18] sm:$0xff] %v330
  // Predicated region
  $region22: #{generator_forward.3} parent=0 // pred_check
    _
  $region23: #{generator_forward.3} parent=0 // pred_check_branch
    %336 = sbr.rel (0) target = $region25
  $region24: #{generator_forward.3} parent=0 // pred_region
    _
  $region25: #{generator_forward.3} parent=0 // pred_fallthru
    _
  // Predicated region
  $region26: #{generator_forward.3} parent=0 // pred_check
    _
  $region27: #{generator_forward.3} parent=0 // pred_check_branch
    %338 = sbr.rel (0) target = $region29
  $region28: #{generator_forward.3} parent=0 // pred_region
    _
  $region29: #{generator_forward.3} parent=0 // pred_fallthru
    _

// kernel: generator_forward.4
$region0: #{generator_forward.4}
  #allocation0 [shape = 'u32[]', space=smem, size = 0x4, offset = 0x4, fixed_abs, tag = 'smem constant byte address 0x4 - core index']
  #allocation1 [shape = 'u32[144,128]{1,0:T(1,128)}', space=vmem, size = 0x12000, scoped, tag = 'internal scratch']
  %s0 = inlined_call_operand.vmem [shape: f32[4,32,512], index: 0, kind: input, shape index: {}]
  %s1 = inlined_call_operand.vmem [shape: f32[4,512,64], index: 1, kind: input, shape index: {}]
  %s2 = inlined_call_operand.vmem [shape: f32[1,64], index: 2, kind: input, shape index: {}]
  %s3 = inlined_call_operand.vmem [shape: f32[1,64], index: 3, kind: input, shape index: {}]
  %s4 = inlined_call_operand.vmem [shape: f32[1,64], index: 4, kind: input, shape index: {}]
  %s5 = inlined_call_operand.vmem [shape: f32[4,32,64], index: 5, kind: output, shape index: {}]
  %s6 = sld [smem:[#allocation0]]
  $region30: #{generator_forward.4} parent=0
    _
  %s8 = ssub.s32 1, %s6
  %s9 = scalar_select 0, %s8, %s6
  // Predicated region
  $region2: #{generator_forward.4} parent=0 // pred_check
    _
  $region3: #{generator_forward.4} parent=0 // pred_check_branch
    %11 = sbr.rel (0) target = $region5
  $region4: #{generator_forward.4} parent=0 // pred_region
    _
  $region5: #{generator_forward.4} parent=0 // pred_fallthru
    _
  // Predicated region
  $region6: #{generator_forward.4} parent=0 // pred_check
    _
  $region7: #{generator_forward.4} parent=0 // pred_check_branch
    %13 = sbr.rel (0) target = $region9
  $region8: #{generator_forward.4} parent=0 // pred_region
    _
  $region9: #{generator_forward.4} parent=0 // pred_fallthru
    _
  // Predicated region
  $region10: #{generator_forward.4} parent=0 // pred_check
    _
  $region11: #{generator_forward.4} parent=0 // pred_check_branch
    %15 = sbr.rel (0) target = $region13
  $region12: #{generator_forward.4} parent=0 // pred_region
    _
  $region13: #{generator_forward.4} parent=0 // pred_fallthru
    _
  // Predicated region
  $region14: #{generator_forward.4} parent=0 // pred_check
    _
  $region15: #{generator_forward.4} parent=0 // pred_check_branch
    %17 = sbr.rel (0) target = $region17
  $region16: #{generator_forward.4} parent=0 // pred_region
    _
  $region17: #{generator_forward.4} parent=0 // pred_fallthru
    _
  // Predicated region
  $region18: #{generator_forward.4} parent=0 // pred_check
    _
  $region19: #{generator_forward.4} parent=0 // pred_check_branch
    %19 = sbr.rel (0) target = $region21
  $region20: #{generator_forward.4} parent=0 // pred_region
    _
  $region21: #{generator_forward.4} parent=0 // pred_fallthru
    _
  %v20 = vld [vmem:[%s0] sm:$0xff]
  %v21 = vld [vmem:[%s0 + $0x8] sm:$0xff]
  %v22 = vld [vmem:[%s0 + $0x10] sm:$0xff]
  %v23 = vld [vmem:[%s0 + $0x18] sm:$0xff]
  %v24 = vld [vmem:[%s0 + $0x20] sm:$0xff]
  %v25 = vld [vmem:[%s0 + $0x28] sm:$0xff]
  %v26 = vld [vmem:[%s0 + $0x30] sm:$0xff]
  %v27 = vld [vmem:[%s0 + $0x38] sm:$0xff]
  %v28 = vld [vmem:[%s0 + $0x40] sm:$0xff]
  %v29 = vld [vmem:[%s0 + $0x48] sm:$0xff]
  %v30 = vld [vmem:[%s0 + $0x50] sm:$0xff]
  %v31 = vld [vmem:[%s0 + $0x58] sm:$0xff]
  %v32 = vld [vmem:[%s0 + $0x60] sm:$0xff]
  %v33 = vld [vmem:[%s0 + $0x68] sm:$0xff]
  %v34 = vld [vmem:[%s0 + $0x70] sm:$0xff]
  %v35 = vld [vmem:[%s0 + $0x78] sm:$0xff]
  %v36 = vld [vmem:[%s1] sm:$0xff]
  %v37 = vld [vmem:[%s1 + $0x8] sm:$0xff]
  %v38 = vld [vmem:[%s1 + $0x10] sm:$0xff]
  %v39 = vld [vmem:[%s1 + $0x18] sm:$0xff]
  %v40 = vld [vmem:[%s1 + $0x20] sm:$0xff]
  %v41 = vld [vmem:[%s1 + $0x28] sm:$0xff]
  %v42 = vld [vmem:[%s1 + $0x30] sm:$0xff]
  %v43 = vld [vmem:[%s1 + $0x38] sm:$0xff]
  %v44 = vld [vmem:[%s1 + $0x40] sm:$0xff]
  %v45 = vld [vmem:[%s1 + $0x48] sm:$0xff]
  %v46 = vld [vmem:[%s1 + $0x50] sm:$0xff]
  %v47 = vld [vmem:[%s1 + $0x58] sm:$0xff]
  %v48 = vld [vmem:[%s1 + $0x60] sm:$0xff]
  %v49 = vld [vmem:[%s1 + $0x68] sm:$0xff]
  %v50 = vld [vmem:[%s1 + $0x70] sm:$0xff]
  %v51 = vld [vmem:[%s1 + $0x78] sm:$0xff]
  %v52 = vld [vmem:[%s1 + $0x80] sm:$0xff]
  %v53 = vld [vmem:[%s1 + $0x88] sm:$0xff]
  %v54 = vld [vmem:[%s1 + $0x90] sm:$0xff]
  %v55 = vld [vmem:[%s1 + $0x98] sm:$0xff]
  %v56 = vld [vmem:[%s1 + $0xa0] sm:$0xff]
  %v57 = vld [vmem:[%s1 + $0xa8] sm:$0xff]
  %v58 = vld [vmem:[%s1 + $0xb0] sm:$0xff]
  %v59 = vld [vmem:[%s1 + $0xb8] sm:$0xff]
  %v60 = vld [vmem:[%s1 + $0xc0] sm:$0xff]
  %v61 = vld [vmem:[%s1 + $0xc8] sm:$0xff]
  %v62 = vld [vmem:[%s1 + $0xd0] sm:$0xff]
  %v63 = vld [vmem:[%s1 + $0xd8] sm:$0xff]
  %v64 = vld [vmem:[%s1 + $0xe0] sm:$0xff]
  %v65 = vld [vmem:[%s1 + $0xe8] sm:$0xff]
  %v66 = vld [vmem:[%s1 + $0xf0] sm:$0xff]
  %v67 = vld [vmem:[%s1 + $0xf8] sm:$0xff]
  %v68 = vld [vmem:[%s1 + $0x100] sm:$0xff]
  %v69 = vld [vmem:[%s1 + $0x108] sm:$0xff]
  %v70 = vld [vmem:[%s1 + $0x110] sm:$0xff]
  %v71 = vld [vmem:[%s1 + $0x118] sm:$0xff]
  %v72 = vld [vmem:[%s1 + $0x120] sm:$0xff]
  %v73 = vld [vmem:[%s1 + $0x128] sm:$0xff]
  %v74 = vld [vmem:[%s1 + $0x130] sm:$0xff]
  %v75 = vld [vmem:[%s1 + $0x138] sm:$0xff]
  %v76 = vld [vmem:[%s1 + $0x140] sm:$0xff]
  %v77 = vld [vmem:[%s1 + $0x148] sm:$0xff]
  %v78 = vld [vmem:[%s1 + $0x150] sm:$0xff]
  %v79 = vld [vmem:[%s1 + $0x158] sm:$0xff]
  %v80 = vld [vmem:[%s1 + $0x160] sm:$0xff]
  %v81 = vld [vmem:[%s1 + $0x168] sm:$0xff]
  %v82 = vld [vmem:[%s1 + $0x170] sm:$0xff]
  %v83 = vld [vmem:[%s1 + $0x178] sm:$0xff]
  %v84 = vld [vmem:[%s1 + $0x180] sm:$0xff]
  %v85 = vld [vmem:[%s1 + $0x188] sm:$0xff]
  %v86 = vld [vmem:[%s1 + $0x190] sm:$0xff]
  %v87 = vld [vmem:[%s1 + $0x198] sm:$0xff]
  %v88 = vld [vmem:[%s1 + $0x1a0] sm:$0xff]
  %v89 = vld [vmem:[%s1 + $0x1a8] sm:$0xff]
  %v90 = vld [vmem:[%s1 + $0x1b0] sm:$0xff]
  %v91 = vld [vmem:[%s1 + $0x1b8] sm:$0xff]
  %v92 = vld [vmem:[%s1 + $0x1c0] sm:$0xff]
  %v93 = vld [vmem:[%s1 + $0x1c8] sm:$0xff]
  %v94 = vld [vmem:[%s1 + $0x1d0] sm:$0xff]
  %v95 = vld [vmem:[%s1 + $0x1d8] sm:$0xff]
  %v96 = vld [vmem:[%s1 + $0x1e0] sm:$0xff]
  %v97 = vld [vmem:[%s1 + $0x1e8] sm:$0xff]
  %v98 = vld [vmem:[%s1 + $0x1f0] sm:$0xff]
  %v99 = vld [vmem:[%s1 + $0x1f8] sm:$0xff]
  %v100 = vld [vmem:[%s2] sm:$0x1]
  %v102 = vlaneseq
  %v103 = vshrl.u32 %v102, 7
  %v104 = vsub.s32 0, %v103
  %v105 = vrot.slane %v100, %v104
  %107 = vmatprep.subr.mxu0 0.0
  %108 = vmatpush1.msra.mxu0 %v51
  %109 = vmatprep.subr.mxu0 0.0
  %110 = vmatpush1.msra.mxu0 %v50
  %111 = vmatprep.subr.mxu0 0.0
  %112 = vmatpush1.msra.mxu0 %v49
  %113 = vmatprep.subr.mxu0 0.0
  %114 = vmatpush1.msra.mxu0 %v48
  %115 = vmatprep.subr.mxu0 0.0
  %116 = vmatpush1.msra.mxu0 %v47
  %117 = vmatprep.subr.mxu0 0.0
  %118 = vmatpush1.msra.mxu0 %v46
  %119 = vmatprep.subr.mxu0 0.0
  %120 = vmatpush1.msra.mxu0 %v45
  %121 = vmatprep.subr.mxu0 0.0
  %122 = vmatpush1.msra.mxu0 %v44
  %123 = vmatprep.subr.mxu0 0.0
  %124 = vmatpush1.msra.mxu0 %v43
  %125 = vmatprep.subr.mxu0 0.0
  %126 = vmatpush1.msra.mxu0 %v42
  %127 = vmatprep.subr.mxu0 0.0
  %128 = vmatpush1.msra.mxu0 %v41
  %129 = vmatprep.subr.mxu0 0.0
  %130 = vmatpush1.msra.mxu0 %v40
  %131 = vmatprep.subr.mxu0 0.0
  %132 = vmatpush1.msra.mxu0 %v39
  %133 = vmatprep.subr.mxu0 0.0
  %134 = vmatpush1.msra.mxu0 %v38
  %135 = vmatprep.subr.mxu0 0.0
  %136 = vmatpush1.msra.mxu0 %v37
  %137 = vmatprep.subr.mxu0 0.0
  %138 = vmatpush1.msra.mxu0 %v36
  %139 = vmatprep.subr.mxu0 0.0
  %140 = vmatpush2.msra.mxu0 %v67
  %141 = vmatprep.subr.mxu0 0.0
  %142 = vmatpush2.msra.mxu0 %v66
  %143 = vmatprep.subr.mxu0 0.0
  %144 = vmatpush2.msra.mxu0 %v65
  %145 = vmatprep.subr.mxu0 0.0
  %146 = vmatpush2.msra.mxu0 %v64
  %147 = vmatprep.subr.mxu0 0.0
  %148 = vmatpush2.msra.mxu0 %v63
  %149 = vmatprep.subr.mxu0 0.0
  %150 = vmatpush2.msra.mxu0 %v62
  %151 = vmatprep.subr.mxu0 0.0
  %152 = vmatpush2.msra.mxu0 %v61
  %153 = vmatprep.subr.mxu0 0.0
  %154 = vmatpush2.msra.mxu0 %v60
  %155 = vmatprep.subr.mxu0 0.0
  %156 = vmatpush2.msra.mxu0 %v59
  %157 = vmatprep.subr.mxu0 0.0
  %158 = vmatpush2.msra.mxu0 %v58
  %159 = vmatprep.subr.mxu0 0.0
  %160 = vmatpush2.msra.mxu0 %v57
  %161 = vmatprep.subr.mxu0 0.0
  %162 = vmatpush2.msra.mxu0 %v56
  %163 = vmatprep.subr.mxu0 0.0
  %164 = vmatpush2.msra.mxu0 %v55
  %165 = vmatprep.subr.mxu0 0.0
  %166 = vmatpush2.msra.mxu0 %v54
  %167 = vmatprep.subr.mxu0 0.0
  %168 = vmatpush2.msra.mxu0 %v53
  %169 = vmatprep.subr.mxu0 0.0
  %170 = vmatpush2.msra.mxu0 %v52
  %171 = vmatprep.mubr.f32.mxu0 %v21
  %172 = vmatmul.mubr.f32.gmra.mxu0 %v20
  %v173 = vpop.f32.mrf.mxu0
  %v174 = vadd.f32 %v105, %v173
  %v175 = vpop.f32.mrf.mxu0
  %176 = vmatprep.mubr.f32.mxu0 %v25
  %177 = vmatmul.mubr.f32.gmra.mxu0 %v24
  %v178 = vpop.f32.mrf.mxu0
  %v179 = vadd.f32 %v105, %v178
  %v180 = vpop.f32.mrf.mxu0
  %181 = vmatprep.mubr.f32.mxu0 %v29
  %182 = vmatmul.mubr.f32.gmra.mxu0 %v28
  %v183 = vpop.f32.mrf.mxu0
  %v184 = vadd.f32 %v105, %v183
  %v185 = vpop.f32.mrf.mxu0
  %186 = vmatprep.mubr.f32.mxu0 %v33
  %187 = vmatmul.mubr.f32.gmra.mxu0 %v32
  %v188 = vpop.f32.mrf.mxu0
  %v189 = vadd.f32 %v105, %v188
  %v190 = vpop.f32.mrf.mxu0
  %191 = vdwg.mxu0
  %192 = vmatprep.subr.mxu0 0.0
  %193 = vmatpush1.msra.mxu0 %v83
  %194 = vmatprep.subr.mxu0 0.0
  %195 = vmatpush1.msra.mxu0 %v82
  %196 = vmatprep.subr.mxu0 0.0
  %197 = vmatpush1.msra.mxu0 %v81
  %198 = vmatprep.subr.mxu0 0.0
  %199 = vmatpush1.msra.mxu0 %v80
  %200 = vmatprep.subr.mxu0 0.0
  %201 = vmatpush1.msra.mxu0 %v79
  %202 = vmatprep.subr.mxu0 0.0
  %203 = vmatpush1.msra.mxu0 %v78
  %204 = vmatprep.subr.mxu0 0.0
  %205 = vmatpush1.msra.mxu0 %v77
  %206 = vmatprep.subr.mxu0 0.0
  %207 = vmatpush1.msra.mxu0 %v76
  %208 = vmatprep.subr.mxu0 0.0
  %209 = vmatpush1.msra.mxu0 %v75
  %210 = vmatprep.subr.mxu0 0.0
  %211 = vmatpush1.msra.mxu0 %v74
  %212 = vmatprep.subr.mxu0 0.0
  %213 = vmatpush1.msra.mxu0 %v73
  %214 = vmatprep.subr.mxu0 0.0
  %215 = vmatpush1.msra.mxu0 %v72
  %216 = vmatprep.subr.mxu0 0.0
  %217 = vmatpush1.msra.mxu0 %v71
  %218 = vmatprep.subr.mxu0 0.0
  %219 = vmatpush1.msra.mxu0 %v70
  %220 = vmatprep.subr.mxu0 0.0
  %221 = vmatpush1.msra.mxu0 %v69
  %222 = vmatprep.subr.mxu0 0.0
  %223 = vmatpush1.msra.mxu0 %v68
  %224 = vmatprep.subr.mxu0 0.0
  %225 = vmatpush2.msra.mxu0 %v99
  %226 = vmatprep.subr.mxu0 0.0
  %227 = vmatpush2.msra.mxu0 %v98
  %228 = vmatprep.subr.mxu0 0.0
  %229 = vmatpush2.msra.mxu0 %v97
  %230 = vmatprep.subr.mxu0 0.0
  %231 = vmatpush2.msra.mxu0 %v96
  %232 = vmatprep.subr.mxu0 0.0
  %233 = vmatpush2.msra.mxu0 %v95
  %234 = vmatprep.subr.mxu0 0.0
  %235 = vmatpush2.msra.mxu0 %v94
  %236 = vmatprep.subr.mxu0 0.0
  %237 = vmatpush2.msra.mxu0 %v93
  %238 = vmatprep.subr.mxu0 0.0
  %239 = vmatpush2.msra.mxu0 %v92
  %240 = vmatprep.subr.mxu0 0.0
  %241 = vmatpush2.msra.mxu0 %v91
  %242 = vmatprep.subr.mxu0 0.0
  %243 = vmatpush2.msra.mxu0 %v90
  %244 = vmatprep.subr.mxu0 0.0
  %245 = vmatpush2.msra.mxu0 %v89
  %246 = vmatprep.subr.mxu0 0.0
  %247 = vmatpush2.msra.mxu0 %v88
  %248 = vmatprep.subr.mxu0 0.0
  %249 = vmatpush2.msra.mxu0 %v87
  %250 = vmatprep.subr.mxu0 0.0
  %251 = vmatpush2.msra.mxu0 %v86
  %252 = vmatprep.subr.mxu0 0.0
  %253 = vmatpush2.msra.mxu0 %v85
  %254 = vmatprep.subr.mxu0 0.0
  %255 = vmatpush2.msra.mxu0 %v84
  %256 = vmatprep.mubr.f32.mxu0 %v23
  %257 = vmatmul.mubr.f32.gmra.mxu0 %v22
  %v258 = vpop.f32.mrf.mxu0
  %v259 = vadd.f32 %v174, %v258
  %v260 = vpop.f32.mrf.mxu0
  %261 = vmatprep.mubr.f32.mxu0 %v27
  %262 = vmatmul.mubr.f32.gmra.mxu0 %v26
  %v263 = vpop.f32.mrf.mxu0
  %v264 = vadd.f32 %v179, %v263
  %v265 = vpop.f32.mrf.mxu0
  %266 = vmatprep.mubr.f32.mxu0 %v31
  %267 = vmatmul.mubr.f32.gmra.mxu0 %v30
  %v268 = vpop.f32.mrf.mxu0
  %v269 = vadd.f32 %v184, %v268
  %v270 = vpop.f32.mrf.mxu0
  %271 = vmatprep.mubr.f32.mxu0 %v35
  %272 = vmatmul.mubr.f32.gmra.mxu0 %v34
  %v273 = vpop.f32.mrf.mxu0
  %v274 = vadd.f32 %v189, %v273
  %v275 = vpop.f32.mrf.mxu0
  %276 = vdwg.mxu0
  %s277 = scalar_lea.vmem %s0, 128
  %v278 = vld [vmem:[%s277] sm:$0xff]
  %v279 = vld [vmem:[%s277 + $0x8] sm:$0xff]
  %v280 = vld [vmem:[%s277 + $0x10] sm:$0xff]
  %v281 = vld [vmem:[%s277 + $0x18] sm:$0xff]
  %v282 = vld [vmem:[%s277 + $0x20] sm:$0xff]
  %v283 = vld [vmem:[%s277 + $0x28] sm:$0xff]
  %v284 = vld [vmem:[%s277 + $0x30] sm:$0xff]
  %v285 = vld [vmem:[%s277 + $0x38] sm:$0xff]
  %v286 = vld [vmem:[%s277 + $0x40] sm:$0xff]
  %v287 = vld [vmem:[%s277 + $0x48] sm:$0xff]
  %v288 = vld [vmem:[%s277 + $0x50] sm:$0xff]
  %v289 = vld [vmem:[%s277 + $0x58] sm:$0xff]
  %v290 = vld [vmem:[%s277 + $0x60] sm:$0xff]
  %v291 = vld [vmem:[%s277 + $0x68] sm:$0xff]
  %v292 = vld [vmem:[%s277 + $0x70] sm:$0xff]
  %v293 = vld [vmem:[%s277 + $0x78] sm:$0xff]
  %s294 = scalar_lea.vmem %s1, 512
  %v295 = vld [vmem:[%s294] sm:$0xff]
  %v296 = vld [vmem:[%s294 + $0x8] sm:$0xff]
  %v297 = vld [vmem:[%s294 + $0x10] sm:$0xff]
  %v298 = vld [vmem:[%s294 + $0x18] sm:$0xff]
  %v299 = vld [vmem:[%s294 + $0x20] sm:$0xff]
  %v300 = vld [vmem:[%s294 + $0x28] sm:$0xff]
  %v301 = vld [vmem:[%s294 + $0x30] sm:$0xff]
  %v302 = vld [vmem:[%s294 + $0x38] sm:$0xff]
  %v303 = vld [vmem:[%s294 + $0x40] sm:$0xff]
  %v304 = vld [vmem:[%s294 + $0x48] sm:$0xff]
  %v305 = vld [vmem:[%s294 + $0x50] sm:$0xff]
  %v306 = vld [vmem:[%s294 + $0x58] sm:$0xff]
  %v307 = vld [vmem:[%s294 + $0x60] sm:$0xff]
  %v308 = vld [vmem:[%s294 + $0x68] sm:$0xff]
  %v309 = vld [vmem:[%s294 + $0x70] sm:$0xff]
  %v310 = vld [vmem:[%s294 + $0x78] sm:$0xff]
  %v311 = vld [vmem:[%s294 + $0x80] sm:$0xff]
  %v312 = vld [vmem:[%s294 + $0x88] sm:$0xff]
  %v313 = vld [vmem:[%s294 + $0x90] sm:$0xff]
  %v314 = vld [vmem:[%s294 + $0x98] sm:$0xff]
  %v315 = vld [vmem:[%s294 + $0xa0] sm:$0xff]
  %v316 = vld [vmem:[%s294 + $0xa8] sm:$0xff]
  %v317 = vld [vmem:[%s294 + $0xb0] sm:$0xff]
  %v318 = vld [vmem:[%s294 + $0xb8] sm:$0xff]
  %v319 = vld [vmem:[%s294 + $0xc0] sm:$0xff]
  %v320 = vld [vmem:[%s294 + $0xc8] sm:$0xff]
  %v321 = vld [vmem:[%s294 + $0xd0] sm:$0xff]
  %v322 = vld [vmem:[%s294 + $0xd8] sm:$0xff]
  %v323 = vld [vmem:[%s294 + $0xe0] sm:$0xff]
  %v324 = vld [vmem:[%s294 + $0xe8] sm:$0xff]
  %v325 = vld [vmem:[%s294 + $0xf0] sm:$0xff]
  %v326 = vld [vmem:[%s294 + $0xf8] sm:$0xff]
  %v327 = vld [vmem:[%s294 + $0x100] sm:$0xff]
  %v328 = vld [vmem:[%s294 + $0x108] sm:$0xff]
  %v329 = vld [vmem:[%s294 + $0x110] sm:$0xff]
  %v330 = vld [vmem:[%s294 + $0x118] sm:$0xff]
  %v331 = vld [vmem:[%s294 + $0x120] sm:$0xff]
  %v332 = vld [vmem:[%s294 + $0x128] sm:$0xff]
  %v333 = vld [vmem:[%s294 + $0x130] sm:$0xff]
  %v334 = vld [vmem:[%s294 + $0x138] sm:$0xff]
  %v335 = vld [vmem:[%s294 + $0x140] sm:$0xff]
  %v336 = vld [vmem:[%s294 + $0x148] sm:$0xff]
  %v337 = vld [vmem:[%s294 + $0x150] sm:$0xff]
  %v338 = vld [vmem:[%s294 + $0x158] sm:$0xff]
  %v339 = vld [vmem:[%s294 + $0x160] sm:$0xff]
  %v340 = vld [vmem:[%s294 + $0x168] sm:$0xff]
  %v341 = vld [vmem:[%s294 + $0x170] sm:$0xff]
  %v342 = vld [vmem:[%s294 + $0x178] sm:$0xff]
  %v343 = vld [vmem:[%s294 + $0x180] sm:$0xff]
  %v344 = vld [vmem:[%s294 + $0x188] sm:$0xff]
  %v345 = vld [vmem:[%s294 + $0x190] sm:$0xff]
  %v346 = vld [vmem:[%s294 + $0x198] sm:$0xff]
  %v347 = vld [vmem:[%s294 + $0x1a0] sm:$0xff]
  %v348 = vld [vmem:[%s294 + $0x1a8] sm:$0xff]
  %v349 = vld [vmem:[%s294 + $0x1b0] sm:$0xff]
  %v350 = vld [vmem:[%s294 + $0x1b8] sm:$0xff]
  %v351 = vld [vmem:[%s294 + $0x1c0] sm:$0xff]
  %v352 = vld [vmem:[%s294 + $0x1c8] sm:$0xff]
  %v353 = vld [vmem:[%s294 + $0x1d0] sm:$0xff]
  %v354 = vld [vmem:[%s294 + $0x1d8] sm:$0xff]
  %v355 = vld [vmem:[%s294 + $0x1e0] sm:$0xff]
  %v356 = vld [vmem:[%s294 + $0x1e8] sm:$0xff]
  %v357 = vld [vmem:[%s294 + $0x1f0] sm:$0xff]
  %v358 = vld [vmem:[%s294 + $0x1f8] sm:$0xff]
  %359 = vmatprep.subr.mxu0 0.0
  %360 = vmatpush1.msra.mxu0 %v310
  %361 = vmatprep.subr.mxu0 0.0
  %362 = vmatpush1.msra.mxu0 %v309
  %363 = vmatprep.subr.mxu0 0.0
  %364 = vmatpush1.msra.mxu0 %v308
  %365 = vmatprep.subr.mxu0 0.0
  %366 = vmatpush1.msra.mxu0 %v307
  %367 = vmatprep.subr.mxu0 0.0
  %368 = vmatpush1.msra.mxu0 %v306
  %369 = vmatprep.subr.mxu0 0.0
  %370 = vmatpush1.msra.mxu0 %v305
  %371 = vmatprep.subr.mxu0 0.0
  %372 = vmatpush1.msra.mxu0 %v304
  %373 = vmatprep.subr.mxu0 0.0
  %374 = vmatpush1.msra.mxu0 %v303
  %375 = vmatprep.subr.mxu0 0.0
  %376 = vmatpush1.msra.mxu0 %v302
  %377 = vmatprep.subr.mxu0 0.0
  %378 = vmatpush1.msra.mxu0 %v301
  %379 = vmatprep.subr.mxu0 0.0
  %380 = vmatpush1.msra.mxu0 %v300
  %381 = vmatprep.subr.mxu0 0.0
  %382 = vmatpush1.msra.mxu0 %v299
  %383 = vmatprep.subr.mxu0 0.0
  %384 = vmatpush1.msra.mxu0 %v298
  %385 = vmatprep.subr.mxu0 0.0
  %386 = vmatpush1.msra.mxu0 %v297
  %387 = vmatprep.subr.mxu0 0.0
  %388 = vmatpush1.msra.mxu0 %v296
  %389 = vmatprep.subr.mxu0 0.0
  %390 = vmatpush1.msra.mxu0 %v295
  %391 = vmatprep.subr.mxu0 0.0
  %392 = vmatpush2.msra.mxu0 %v326
  %393 = vmatprep.subr.mxu0 0.0
  %394 = vmatpush2.msra.mxu0 %v325
  %395 = vmatprep.subr.mxu0 0.0
  %396 = vmatpush2.msra.mxu0 %v324
  %397 = vmatprep.subr.mxu0 0.0
  %398 = vmatpush2.msra.mxu0 %v323
  %399 = vmatprep.subr.mxu0 0.0
  %400 = vmatpush2.msra.mxu0 %v322
  %401 = vmatprep.subr.mxu0 0.0
  %402 = vmatpush2.msra.mxu0 %v321
  %403 = vmatprep.subr.mxu0 0.0
  %404 = vmatpush2.msra.mxu0 %v320
  %405 = vmatprep.subr.mxu0 0.0
  %406 = vmatpush2.msra.mxu0 %v319
  %407 = vmatprep.subr.mxu0 0.0
  %408 = vmatpush2.msra.mxu0 %v318
  %409 = vmatprep.subr.mxu0 0.0
  %410 = vmatpush2.msra.mxu0 %v317
  %411 = vmatprep.subr.mxu0 0.0
  %412 = vmatpush2.msra.mxu0 %v316
  %413 = vmatprep.subr.mxu0 0.0
  %414 = vmatpush2.msra.mxu0 %v315
  %415 = vmatprep.subr.mxu0 0.0
  %416 = vmatpush2.msra.mxu0 %v314
  %417 = vmatprep.subr.mxu0 0.0
  %418 = vmatpush2.msra.mxu0 %v313
  %419 = vmatprep.subr.mxu0 0.0
  %420 = vmatpush2.msra.mxu0 %v312
  %421 = vmatprep.subr.mxu0 0.0
  %422 = vmatpush2.msra.mxu0 %v311
  %423 = vmatprep.mubr.f32.mxu0 %v279
  %424 = vmatmul.mubr.f32.gmra.mxu0 %v278
  %v425 = vpop.f32.mrf.mxu0
  %v426 = vadd.f32 %v105, %v425
  %v427 = vpop.f32.mrf.mxu0
  %428 = vmatprep.mubr.f32.mxu0 %v283
  %429 = vmatmul.mubr.f32.gmra.mxu0 %v282
  %v430 = vpop.f32.mrf.mxu0
  %v431 = vadd.f32 %v105, %v430
  %v432 = vpop.f32.mrf.mxu0
  %433 = vmatprep.mubr.f32.mxu0 %v287
  %434 = vmatmul.mubr.f32.gmra.mxu0 %v286
  %v435 = vpop.f32.mrf.mxu0
  %v436 = vadd.f32 %v105, %v435
  %v437 = vpop.f32.mrf.mxu0
  %438 = vmatprep.mubr.f32.mxu0 %v291
  %439 = vmatmul.mubr.f32.gmra.mxu0 %v290
  %v440 = vpop.f32.mrf.mxu0
  %v441 = vadd.f32 %v105, %v440
  %v442 = vpop.f32.mrf.mxu0
  %443 = vdwg.mxu0
  %444 = vmatprep.subr.mxu0 0.0
  %445 = vmatpush1.msra.mxu0 %v342
  %446 = vmatprep.subr.mxu0 0.0
  %447 = vmatpush1.msra.mxu0 %v341
  %448 = vmatprep.subr.mxu0 0.0
  %449 = vmatpush1.msra.mxu0 %v340
  %450 = vmatprep.subr.mxu0 0.0
  %451 = vmatpush1.msra.mxu0 %v339
  %452 = vmatprep.subr.mxu0 0.0
  %453 = vmatpush1.msra.mxu0 %v338
  %454 = vmatprep.subr.mxu0 0.0
  %455 = vmatpush1.msra.mxu0 %v337
  %456 = vmatprep.subr.mxu0 0.0
  %457 = vmatpush1.msra.mxu0 %v336
  %458 = vmatprep.subr.mxu0 0.0
  %459 = vmatpush1.msra.mxu0 %v335
  %460 = vmatprep.subr.mxu0 0.0
  %461 = vmatpush1.msra.mxu0 %v334
  %462 = vmatprep.subr.mxu0 0.0
  %463 = vmatpush1.msra.mxu0 %v333
  %464 = vmatprep.subr.mxu0 0.0
  %465 = vmatpush1.msra.mxu0 %v332
  %466 = vmatprep.subr.mxu0 0.0
  %467 = vmatpush1.msra.mxu0 %v331
  %468 = vmatprep.subr.mxu0 0.0
  %469 = vmatpush1.msra.mxu0 %v330
  %470 = vmatprep.subr.mxu0 0.0
  %471 = vmatpush1.msra.mxu0 %v329
  %472 = vmatprep.subr.mxu0 0.0
  %473 = vmatpush1.msra.mxu0 %v328
  %474 = vmatprep.subr.mxu0 0.0
  %475 = vmatpush1.msra.mxu0 %v327
  %476 = vmatprep.subr.mxu0 0.0
  %477 = vmatpush2.msra.mxu0 %v358
  %478 = vmatprep.subr.mxu0 0.0
  %479 = vmatpush2.msra.mxu0 %v357
  %480 = vmatprep.subr.mxu0 0.0
  %481 = vmatpush2.msra.mxu0 %v356
  %482 = vmatprep.subr.mxu0 0.0
  %483 = vmatpush2.msra.mxu0 %v355
  %484 = vmatprep.subr.mxu0 0.0
  %485 = vmatpush2.msra.mxu0 %v354
  %486 = vmatprep.subr.mxu0 0.0
  %487 = vmatpush2.msra.mxu0 %v353
  %488 = vmatprep.subr.mxu0 0.0
  %489 = vmatpush2.msra.mxu0 %v352
  %490 = vmatprep.subr.mxu0 0.0
  %491 = vmatpush2.msra.mxu0 %v351
  %492 = vmatprep.subr.mxu0 0.0
  %493 = vmatpush2.msra.mxu0 %v350
  %494 = vmatprep.subr.mxu0 0.0
  %495 = vmatpush2.msra.mxu0 %v349
  %496 = vmatprep.subr.mxu0 0.0
  %497 = vmatpush2.msra.mxu0 %v348
  %498 = vmatprep.subr.mxu0 0.0
  %499 = vmatpush2.msra.mxu0 %v347
  %500 = vmatprep.subr.mxu0 0.0
  %501 = vmatpush2.msra.mxu0 %v346
  %502 = vmatprep.subr.mxu0 0.0
  %503 = vmatpush2.msra.mxu0 %v345
  %504 = vmatprep.subr.mxu0 0.0
  %505 = vmatpush2.msra.mxu0 %v344
  %506 = vmatprep.subr.mxu0 0.0
  %507 = vmatpush2.msra.mxu0 %v343
  %508 = vmatprep.mubr.f32.mxu0 %v281
  %509 = vmatmul.mubr.f32.gmra.mxu0 %v280
  %v510 = vpop.f32.mrf.mxu0
  %v511 = vadd.f32 %v426, %v510
  %v512 = vpop.f32.mrf.mxu0
  %513 = vmatprep.mubr.f32.mxu0 %v285
  %514 = vmatmul.mubr.f32.gmra.mxu0 %v284
  %v515 = vpop.f32.mrf.mxu0
  %v516 = vadd.f32 %v431, %v515
  %v517 = vpop.f32.mrf.mxu0
  %518 = vmatprep.mubr.f32.mxu0 %v289
  %519 = vmatmul.mubr.f32.gmra.mxu0 %v288
  %v520 = vpop.f32.mrf.mxu0
  %v521 = vadd.f32 %v436, %v520
  %v522 = vpop.f32.mrf.mxu0
  %523 = vmatprep.mubr.f32.mxu0 %v293
  %524 = vmatmul.mubr.f32.gmra.mxu0 %v292
  %v525 = vpop.f32.mrf.mxu0
  %v526 = vadd.f32 %v441, %v525
  %v527 = vpop.f32.mrf.mxu0
  %528 = vdwg.mxu0
  %s529 = scalar_lea.vmem %s0, 256
  %v530 = vld [vmem:[%s529] sm:$0xff]
  %v531 = vld [vmem:[%s529 + $0x8] sm:$0xff]
  %v532 = vld [vmem:[%s529 + $0x10] sm:$0xff]
  %v533 = vld [vmem:[%s529 + $0x18] sm:$0xff]
  %v534 = vld [vmem:[%s529 + $0x20] sm:$0xff]
  %v535 = vld [vmem:[%s529 + $0x28] sm:$0xff]
  %v536 = vld [vmem:[%s529 + $0x30] sm:$0xff]
  %v537 = vld [vmem:[%s529 + $0x38] sm:$0xff]
  %v538 = vld [vmem:[%s529 + $0x40] sm:$0xff]
  %v539 = vld [vmem:[%s529 + $0x48] sm:$0xff]
  %v540 = vld [vmem:[%s529 + $0x50] sm:$0xff]
  %v541 = vld [vmem:[%s529 + $0x58] sm:$0xff]
  %v542 = vld [vmem:[%s529 + $0x60] sm:$0xff]
  %v543 = vld [vmem:[%s529 + $0x68] sm:$0xff]
  %v544 = vld [vmem:[%s529 + $0x70] sm:$0xff]
  %v545 = vld [vmem:[%s529 + $0x78] sm:$0xff]
  %s546 = scalar_lea.vmem %s1, 1024
  %v547 = vld [vmem:[%s546] sm:$0xff]
  %v548 = vld [vmem:[%s546 + $0x8] sm:$0xff]
  %v549 = vld [vmem:[%s546 + $0x10] sm:$0xff]
  %v550 = vld [vmem:[%s546 + $0x18] sm:$0xff]
  %v551 = vld [vmem:[%s546 + $0x20] sm:$0xff]
  %v552 = vld [vmem:[%s546 + $0x28] sm:$0xff]
  %v553 = vld [vmem:[%s546 + $0x30] sm:$0xff]
  %v554 = vld [vmem:[%s546 + $0x38] sm:$0xff]
  %v555 = vld [vmem:[%s546 + $0x40] sm:$0xff]
  %v556 = vld [vmem:[%s546 + $0x48] sm:$0xff]
  %v557 = vld [vmem:[%s546 + $0x50] sm:$0xff]
  %v558 = vld [vmem:[%s546 + $0x58] sm:$0xff]
  %v559 = vld [vmem:[%s546 + $0x60] sm:$0xff]
  %v560 = vld [vmem:[%s546 + $0x68] sm:$0xff]
  %v561 = vld [vmem:[%s546 + $0x70] sm:$0xff]
  %v562 = vld [vmem:[%s546 + $0x78] sm:$0xff]
  %v563 = vld [vmem:[%s546 + $0x80] sm:$0xff]
  %v564 = vld [vmem:[%s546 + $0x88] sm:$0xff]
  %v565 = vld [vmem:[%s546 + $0x90] sm:$0xff]
  %v566 = vld [vmem:[%s546 + $0x98] sm:$0xff]
  %v567 = vld [vmem:[%s546 + $0xa0] sm:$0xff]
  %v568 = vld [vmem:[%s546 + $0xa8] sm:$0xff]
  %v569 = vld [vmem:[%s546 + $0xb0] sm:$0xff]
  %v570 = vld [vmem:[%s546 + $0xb8] sm:$0xff]
  %v571 = vld [vmem:[%s546 + $0xc0] sm:$0xff]
  %v572 = vld [vmem:[%s546 + $0xc8] sm:$0xff]
  %v573 = vld [vmem:[%s546 + $0xd0] sm:$0xff]
  %v574 = vld [vmem:[%s546 + $0xd8] sm:$0xff]
  %v575 = vld [vmem:[%s546 + $0xe0] sm:$0xff]
  %v576 = vld [vmem:[%s546 + $0xe8] sm:$0xff]
  %v577 = vld [vmem:[%s546 + $0xf0] sm:$0xff]
  %v578 = vld [vmem:[%s546 + $0xf8] sm:$0xff]
  %v579 = vld [vmem:[%s546 + $0x100] sm:$0xff]
  %v580 = vld [vmem:[%s546 + $0x108] sm:$0xff]
  %v581 = vld [vmem:[%s546 + $0x110] sm:$0xff]
  %v582 = vld [vmem:[%s546 + $0x118] sm:$0xff]
  %v583 = vld [vmem:[%s546 + $0x120] sm:$0xff]
  %v584 = vld [vmem:[%s546 + $0x128] sm:$0xff]
  %v585 = vld [vmem:[%s546 + $0x130] sm:$0xff]
  %v586 = vld [vmem:[%s546 + $0x138] sm:$0xff]
  %v587 = vld [vmem:[%s546 + $0x140] sm:$0xff]
  %v588 = vld [vmem:[%s546 + $0x148] sm:$0xff]
  %v589 = vld [vmem:[%s546 + $0x150] sm:$0xff]
  %v590 = vld [vmem:[%s546 + $0x158] sm:$0xff]
  %v591 = vld [vmem:[%s546 + $0x160] sm:$0xff]
  %v592 = vld [vmem:[%s546 + $0x168] sm:$0xff]
  %v593 = vld [vmem:[%s546 + $0x170] sm:$0xff]
  %v594 = vld [vmem:[%s546 + $0x178] sm:$0xff]
  %v595 = vld [vmem:[%s546 + $0x180] sm:$0xff]
  %v596 = vld [vmem:[%s546 + $0x188] sm:$0xff]
  %v597 = vld [vmem:[%s546 + $0x190] sm:$0xff]
  %v598 = vld [vmem:[%s546 + $0x198] sm:$0xff]
  %v599 = vld [vmem:[%s546 + $0x1a0] sm:$0xff]
  %v600 = vld [vmem:[%s546 + $0x1a8] sm:$0xff]
  %v601 = vld [vmem:[%s546 + $0x1b0] sm:$0xff]
  %v602 = vld [vmem:[%s546 + $0x1b8] sm:$0xff]
  %v603 = vld [vmem:[%s546 + $0x1c0] sm:$0xff]
  %v604 = vld [vmem:[%s546 + $0x1c8] sm:$0xff]
  %v605 = vld [vmem:[%s546 + $0x1d0] sm:$0xff]
  %v606 = vld [vmem:[%s546 + $0x1d8] sm:$0xff]
  %v607 = vld [vmem:[%s546 + $0x1e0] sm:$0xff]
  %v608 = vld [vmem:[%s546 + $0x1e8] sm:$0xff]
  %v609 = vld [vmem:[%s546 + $0x1f0] sm:$0xff]
  %v610 = vld [vmem:[%s546 + $0x1f8] sm:$0xff]
  %611 = vmatprep.subr.mxu0 0.0
  %612 = vmatpush1.msra.mxu0 %v562
  %613 = vmatprep.subr.mxu0 0.0
  %614 = vmatpush1.msra.mxu0 %v561
  %615 = vmatprep.subr.mxu0 0.0
  %616 = vmatpush1.msra.mxu0 %v560
  %617 = vmatprep.subr.mxu0 0.0
  %618 = vmatpush1.msra.mxu0 %v559
  %619 = vmatprep.subr.mxu0 0.0
  %620 = vmatpush1.msra.mxu0 %v558
  %621 = vmatprep.subr.mxu0 0.0
  %622 = vmatpush1.msra.mxu0 %v557
  %623 = vmatprep.subr.mxu0 0.0
  %624 = vmatpush1.msra.mxu0 %v556
  %625 = vmatprep.subr.mxu0 0.0
  %626 = vmatpush1.msra.mxu0 %v555
  %627 = vmatprep.subr.mxu0 0.0
  %628 = vmatpush1.msra.mxu0 %v554
  %629 = vmatprep.subr.mxu0 0.0
  %630 = vmatpush1.msra.mxu0 %v553
  %631 = vmatprep.subr.mxu0 0.0
  %632 = vmatpush1.msra.mxu0 %v552
  %633 = vmatprep.subr.mxu0 0.0
  %634 = vmatpush1.msra.mxu0 %v551
  %635 = vmatprep.subr.mxu0 0.0
  %636 = vmatpush1.msra.mxu0 %v550
  %637 = vmatprep.subr.mxu0 0.0
  %638 = vmatpush1.msra.mxu0 %v549
  %639 = vmatprep.subr.mxu0 0.0
  %640 = vmatpush1.msra.mxu0 %v548
  %641 = vmatprep.subr.mxu0 0.0
  %642 = vmatpush1.msra.mxu0 %v547
  %643 = vmatprep.subr.mxu0 0.0
  %644 = vmatpush2.msra.mxu0 %v578
  %645 = vmatprep.subr.mxu0 0.0
  %646 = vmatpush2.msra.mxu0 %v577
  %647 = vmatprep.subr.mxu0 0.0
  %648 = vmatpush2.msra.mxu0 %v576
  %649 = vmatprep.subr.mxu0 0.0
  %650 = vmatpush2.msra.mxu0 %v575
  %651 = vmatprep.subr.mxu0 0.0
  %652 = vmatpush2.msra.mxu0 %v574
  %653 = vmatprep.subr.mxu0 0.0
  %654 = vmatpush2.msra.mxu0 %v573
  %655 = vmatprep.subr.mxu0 0.0
  %656 = vmatpush2.msra.mxu0 %v572
  %657 = vmatprep.subr.mxu0 0.0
  %658 = vmatpush2.msra.mxu0 %v571
  %659 = vmatprep.subr.mxu0 0.0
  %660 = vmatpush2.msra.mxu0 %v570
  %661 = vmatprep.subr.mxu0 0.0
  %662 = vmatpush2.msra.mxu0 %v569
  %663 = vmatprep.subr.mxu0 0.0
  %664 = vmatpush2.msra.mxu0 %v568
  %665 = vmatprep.subr.mxu0 0.0
  %666 = vmatpush2.msra.mxu0 %v567
  %667 = vmatprep.subr.mxu0 0.0
  %668 = vmatpush2.msra.mxu0 %v566
  %669 = vmatprep.subr.mxu0 0.0
  %670 = vmatpush2.msra.mxu0 %v565
  %671 = vmatprep.subr.mxu0 0.0
  %672 = vmatpush2.msra.mxu0 %v564
  %673 = vmatprep.subr.mxu0 0.0
  %674 = vmatpush2.msra.mxu0 %v563
  %675 = vmatprep.mubr.f32.mxu0 %v531
  %676 = vmatmul.mubr.f32.gmra.mxu0 %v530
  %v677 = vpop.f32.mrf.mxu0
  %v678 = vadd.f32 %v105, %v677
  %v679 = vpop.f32.mrf.mxu0
  %680 = vmatprep.mubr.f32.mxu0 %v535
  %681 = vmatmul.mubr.f32.gmra.mxu0 %v534
  %v682 = vpop.f32.mrf.mxu0
  %v683 = vadd.f32 %v105, %v682
  %v684 = vpop.f32.mrf.mxu0
  %685 = vmatprep.mubr.f32.mxu0 %v539
  %686 = vmatmul.mubr.f32.gmra.mxu0 %v538
  %v687 = vpop.f32.mrf.mxu0
  %v688 = vadd.f32 %v105, %v687
  %v689 = vpop.f32.mrf.mxu0
  %690 = vmatprep.mubr.f32.mxu0 %v543
  %691 = vmatmul.mubr.f32.gmra.mxu0 %v542
  %v692 = vpop.f32.mrf.mxu0
  %v693 = vadd.f32 %v105, %v692
  %v694 = vpop.f32.mrf.mxu0
  %695 = vdwg.mxu0
  %696 = vmatprep.subr.mxu0 0.0
  %697 = vmatpush1.msra.mxu0 %v594
  %698 = vmatprep.subr.mxu0 0.0
  %699 = vmatpush1.msra.mxu0 %v593
  %700 = vmatprep.subr.mxu0 0.0
  %701 = vmatpush1.msra.mxu0 %v592
  %702 = vmatprep.subr.mxu0 0.0
  %703 = vmatpush1.msra.mxu0 %v591
  %704 = vmatprep.subr.mxu0 0.0
  %705 = vmatpush1.msra.mxu0 %v590
  %706 = vmatprep.subr.mxu0 0.0
  %707 = vmatpush1.msra.mxu0 %v589
  %708 = vmatprep.subr.mxu0 0.0
  %709 = vmatpush1.msra.mxu0 %v588
  %710 = vmatprep.subr.mxu0 0.0
  %711 = vmatpush1.msra.mxu0 %v587
  %712 = vmatprep.subr.mxu0 0.0
  %713 = vmatpush1.msra.mxu0 %v586
  %714 = vmatprep.subr.mxu0 0.0
  %715 = vmatpush1.msra.mxu0 %v585
  %716 = vmatprep.subr.mxu0 0.0
  %717 = vmatpush1.msra.mxu0 %v584
  %718 = vmatprep.subr.mxu0 0.0
  %719 = vmatpush1.msra.mxu0 %v583
  %720 = vmatprep.subr.mxu0 0.0
  %721 = vmatpush1.msra.mxu0 %v582
  %722 = vmatprep.subr.mxu0 0.0
  %723 = vmatpush1.msra.mxu0 %v581
  %724 = vmatprep.subr.mxu0 0.0
  %725 = vmatpush1.msra.mxu0 %v580
  %726 = vmatprep.subr.mxu0 0.0
  %727 = vmatpush1.msra.mxu0 %v579
  %728 = vmatprep.subr.mxu0 0.0
  %729 = vmatpush2.msra.mxu0 %v610
  %730 = vmatprep.subr.mxu0 0.0
  %731 = vmatpush2.msra.mxu0 %v609
  %732 = vmatprep.subr.mxu0 0.0
  %733 = vmatpush2.msra.mxu0 %v608
  %734 = vmatprep.subr.mxu0 0.0
  %735 = vmatpush2.msra.mxu0 %v607
  %736 = vmatprep.subr.mxu0 0.0
  %737 = vmatpush2.msra.mxu0 %v606
  %738 = vmatprep.subr.mxu0 0.0
  %739 = vmatpush2.msra.mxu0 %v605
  %740 = vmatprep.subr.mxu0 0.0
  %741 = vmatpush2.msra.mxu0 %v604
  %742 = vmatprep.subr.mxu0 0.0
  %743 = vmatpush2.msra.mxu0 %v603
  %744 = vmatprep.subr.mxu0 0.0
  %745 = vmatpush2.msra.mxu0 %v602
  %746 = vmatprep.subr.mxu0 0.0
  %747 = vmatpush2.msra.mxu0 %v601
  %748 = vmatprep.subr.mxu0 0.0
  %749 = vmatpush2.msra.mxu0 %v600
  %750 = vmatprep.subr.mxu0 0.0
  %751 = vmatpush2.msra.mxu0 %v599
  %752 = vmatprep.subr.mxu0 0.0
  %753 = vmatpush2.msra.mxu0 %v598
  %754 = vmatprep.subr.mxu0 0.0
  %755 = vmatpush2.msra.mxu0 %v597
  %756 = vmatprep.subr.mxu0 0.0
  %757 = vmatpush2.msra.mxu0 %v596
  %758 = vmatprep.subr.mxu0 0.0
  %759 = vmatpush2.msra.mxu0 %v595
  %760 = vmatprep.mubr.f32.mxu0 %v533
  %761 = vmatmul.mubr.f32.gmra.mxu0 %v532
  %v762 = vpop.f32.mrf.mxu0
  %v763 = vadd.f32 %v678, %v762
  %v764 = vpop.f32.mrf.mxu0
  %765 = vmatprep.mubr.f32.mxu0 %v537
  %766 = vmatmul.mubr.f32.gmra.mxu0 %v536
  %v767 = vpop.f32.mrf.mxu0
  %v768 = vadd.f32 %v683, %v767
  %v769 = vpop.f32.mrf.mxu0
  %770 = vmatprep.mubr.f32.mxu0 %v541
  %771 = vmatmul.mubr.f32.gmra.mxu0 %v540
  %v772 = vpop.f32.mrf.mxu0
  %v773 = vadd.f32 %v688, %v772
  %v774 = vpop.f32.mrf.mxu0
  %775 = vmatprep.mubr.f32.mxu0 %v545
  %776 = vmatmul.mubr.f32.gmra.mxu0 %v544
  %v777 = vpop.f32.mrf.mxu0
  %v778 = vadd.f32 %v693, %v777
  %v779 = vpop.f32.mrf.mxu0
  %780 = vdwg.mxu0
  %s781 = scalar_lea.vmem %s0, 384
  %v782 = vld [vmem:[%s781] sm:$0xff]
  %v783 = vld [vmem:[%s781 + $0x8] sm:$0xff]
  %v784 = vld [vmem:[%s781 + $0x10] sm:$0xff]
  %v785 = vld [vmem:[%s781 + $0x18] sm:$0xff]
  %v786 = vld [vmem:[%s781 + $0x20] sm:$0xff]
  %v787 = vld [vmem:[%s781 + $0x28] sm:$0xff]
  %v788 = vld [vmem:[%s781 + $0x30] sm:$0xff]
  %v789 = vld [vmem:[%s781 + $0x38] sm:$0xff]
  %v790 = vld [vmem:[%s781 + $0x40] sm:$0xff]
  %v791 = vld [vmem:[%s781 + $0x48] sm:$0xff]
  %v792 = vld [vmem:[%s781 + $0x50] sm:$0xff]
  %v793 = vld [vmem:[%s781 + $0x58] sm:$0xff]
  %v794 = vld [vmem:[%s781 + $0x60] sm:$0xff]
  %v795 = vld [vmem:[%s781 + $0x68] sm:$0xff]
  %v796 = vld [vmem:[%s781 + $0x70] sm:$0xff]
  %v797 = vld [vmem:[%s781 + $0x78] sm:$0xff]
  %s798 = scalar_lea.vmem %s1, 1536
  %v799 = vld [vmem:[%s798] sm:$0xff]
  %v800 = vld [vmem:[%s798 + $0x8] sm:$0xff]
  %v801 = vld [vmem:[%s798 + $0x10] sm:$0xff]
  %v802 = vld [vmem:[%s798 + $0x18] sm:$0xff]
  %v803 = vld [vmem:[%s798 + $0x20] sm:$0xff]
  %v804 = vld [vmem:[%s798 + $0x28] sm:$0xff]
  %v805 = vld [vmem:[%s798 + $0x30] sm:$0xff]
  %v806 = vld [vmem:[%s798 + $0x38] sm:$0xff]
  %v807 = vld [vmem:[%s798 + $0x40] sm:$0xff]
  %v808 = vld [vmem:[%s798 + $0x48] sm:$0xff]
  %v809 = vld [vmem:[%s798 + $0x50] sm:$0xff]
  %v810 = vld [vmem:[%s798 + $0x58] sm:$0xff]
  %v811 = vld [vmem:[%s798 + $0x60] sm:$0xff]
  %v812 = vld [vmem:[%s798 + $0x68] sm:$0xff]
  %v813 = vld [vmem:[%s798 + $0x70] sm:$0xff]
  %v814 = vld [vmem:[%s798 + $0x78] sm:$0xff]
  %v815 = vld [vmem:[%s798 + $0x80] sm:$0xff]
  %v816 = vld [vmem:[%s798 + $0x88] sm:$0xff]
  %v817 = vld [vmem:[%s798 + $0x90] sm:$0xff]
  %v818 = vld [vmem:[%s798 + $0x98] sm:$0xff]
  %v819 = vld [vmem:[%s798 + $0xa0] sm:$0xff]
  %v820 = vld [vmem:[%s798 + $0xa8] sm:$0xff]
  %v821 = vld [vmem:[%s798 + $0xb0] sm:$0xff]
  %v822 = vld [vmem:[%s798 + $0xb8] sm:$0xff]
  %v823 = vld [vmem:[%s798 + $0xc0] sm:$0xff]
  %v824 = vld [vmem:[%s798 + $0xc8] sm:$0xff]
  %v825 = vld [vmem:[%s798 + $0xd0] sm:$0xff]
  %v826 = vld [vmem:[%s798 + $0xd8] sm:$0xff]
  %v827 = vld [vmem:[%s798 + $0xe0] sm:$0xff]
  %v828 = vld [vmem:[%s798 + $0xe8] sm:$0xff]
  %v829 = vld [vmem:[%s798 + $0xf0] sm:$0xff]
  %v830 = vld [vmem:[%s798 + $0xf8] sm:$0xff]
  %v831 = vld [vmem:[%s798 + $0x100] sm:$0xff]
  %v832 = vld [vmem:[%s798 + $0x108] sm:$0xff]
  %v833 = vld [vmem:[%s798 + $0x110] sm:$0xff]
  %v834 = vld [vmem:[%s798 + $0x118] sm:$0xff]
  %v835 = vld [vmem:[%s798 + $0x120] sm:$0xff]
  %v836 = vld [vmem:[%s798 + $0x128] sm:$0xff]
  %v837 = vld [vmem:[%s798 + $0x130] sm:$0xff]
  %v838 = vld [vmem:[%s798 + $0x138] sm:$0xff]
  %v839 = vld [vmem:[%s798 + $0x140] sm:$0xff]
  %v840 = vld [vmem:[%s798 + $0x148] sm:$0xff]
  %v841 = vld [vmem:[%s798 + $0x150] sm:$0xff]
  %v842 = vld [vmem:[%s798 + $0x158] sm:$0xff]
  %v843 = vld [vmem:[%s798 + $0x160] sm:$0xff]
  %v844 = vld [vmem:[%s798 + $0x168] sm:$0xff]
  %v845 = vld [vmem:[%s798 + $0x170] sm:$0xff]
  %v846 = vld [vmem:[%s798 + $0x178] sm:$0xff]
  %v847 = vld [vmem:[%s798 + $0x180] sm:$0xff]
  %v848 = vld [vmem:[%s798 + $0x188] sm:$0xff]
  %v849 = vld [vmem:[%s798 + $0x190] sm:$0xff]
  %v850 = vld [vmem:[%s798 + $0x198] sm:$0xff]
  %v851 = vld [vmem:[%s798 + $0x1a0] sm:$0xff]
  %v852 = vld [vmem:[%s798 + $0x1a8] sm:$0xff]
  %v853 = vld [vmem:[%s798 + $0x1b0] sm:$0xff]
  %v854 = vld [vmem:[%s798 + $0x1b8] sm:$0xff]
  %v855 = vld [vmem:[%s798 + $0x1c0] sm:$0xff]
  %v856 = vld [vmem:[%s798 + $0x1c8] sm:$0xff]
  %v857 = vld [vmem:[%s798 + $0x1d0] sm:$0xff]
  %v858 = vld [vmem:[%s798 + $0x1d8] sm:$0xff]
  %v859 = vld [vmem:[%s798 + $0x1e0] sm:$0xff]
  %v860 = vld [vmem:[%s798 + $0x1e8] sm:$0xff]
  %v861 = vld [vmem:[%s798 + $0x1f0] sm:$0xff]
  %v862 = vld [vmem:[%s798 + $0x1f8] sm:$0xff]
  %863 = vmatprep.subr.mxu0 0.0
  %864 = vmatpush1.msra.mxu0 %v814
  %865 = vmatprep.subr.mxu0 0.0
  %866 = vmatpush1.msra.mxu0 %v813
  %867 = vmatprep.subr.mxu0 0.0
  %868 = vmatpush1.msra.mxu0 %v812
  %869 = vmatprep.subr.mxu0 0.0
  %870 = vmatpush1.msra.mxu0 %v811
  %871 = vmatprep.subr.mxu0 0.0
  %872 = vmatpush1.msra.mxu0 %v810
  %873 = vmatprep.subr.mxu0 0.0
  %874 = vmatpush1.msra.mxu0 %v809
  %875 = vmatprep.subr.mxu0 0.0
  %876 = vmatpush1.msra.mxu0 %v808
  %877 = vmatprep.subr.mxu0 0.0
  %878 = vmatpush1.msra.mxu0 %v807
  %879 = vmatprep.subr.mxu0 0.0
  %880 = vmatpush1.msra.mxu0 %v806
  %881 = vmatprep.subr.mxu0 0.0
  %882 = vmatpush1.msra.mxu0 %v805
  %883 = vmatprep.subr.mxu0 0.0
  %884 = vmatpush1.msra.mxu0 %v804
  %885 = vmatprep.subr.mxu0 0.0
  %886 = vmatpush1.msra.mxu0 %v803
  %887 = vmatprep.subr.mxu0 0.0
  %888 = vmatpush1.msra.mxu0 %v802
  %889 = vmatprep.subr.mxu0 0.0
  %890 = vmatpush1.msra.mxu0 %v801
  %891 = vmatprep.subr.mxu0 0.0
  %892 = vmatpush1.msra.mxu0 %v800
  %893 = vmatprep.subr.mxu0 0.0
  %894 = vmatpush1.msra.mxu0 %v799
  %895 = vmatprep.subr.mxu0 0.0
  %896 = vmatpush2.msra.mxu0 %v830
  %897 = vmatprep.subr.mxu0 0.0
  %898 = vmatpush2.msra.mxu0 %v829
  %899 = vmatprep.subr.mxu0 0.0
  %900 = vmatpush2.msra.mxu0 %v828
  %901 = vmatprep.subr.mxu0 0.0
  %902 = vmatpush2.msra.mxu0 %v827
  %903 = vmatprep.subr.mxu0 0.0
  %904 = vmatpush2.msra.mxu0 %v826
  %905 = vmatprep.subr.mxu0 0.0
  %906 = vmatpush2.msra.mxu0 %v825
  %907 = vmatprep.subr.mxu0 0.0
  %908 = vmatpush2.msra.mxu0 %v824
  %909 = vmatprep.subr.mxu0 0.0
  %910 = vmatpush2.msra.mxu0 %v823
  %911 = vmatprep.subr.mxu0 0.0
  %912 = vmatpush2.msra.mxu0 %v822
  %913 = vmatprep.subr.mxu0 0.0
  %914 = vmatpush2.msra.mxu0 %v821
  %915 = vmatprep.subr.mxu0 0.0
  %916 = vmatpush2.msra.mxu0 %v820
  %917 = vmatprep.subr.mxu0 0.0
  %918 = vmatpush2.msra.mxu0 %v819
  %919 = vmatprep.subr.mxu0 0.0
  %920 = vmatpush2.msra.mxu0 %v818
  %921 = vmatprep.subr.mxu0 0.0
  %922 = vmatpush2.msra.mxu0 %v817
  %923 = vmatprep.subr.mxu0 0.0
  %924 = vmatpush2.msra.mxu0 %v816
  %925 = vmatprep.subr.mxu0 0.0
  %926 = vmatpush2.msra.mxu0 %v815
  %927 = vmatprep.mubr.f32.mxu0 %v783
  %928 = vmatmul.mubr.f32.gmra.mxu0 %v782
  %v929 = vpop.f32.mrf.mxu0
  %v930 = vadd.f32 %v105, %v929
  %v931 = vpop.f32.mrf.mxu0
  %932 = vmatprep.mubr.f32.mxu0 %v787
  %933 = vmatmul.mubr.f32.gmra.mxu0 %v786
  %v934 = vpop.f32.mrf.mxu0
  %v935 = vadd.f32 %v105, %v934
  %v936 = vpop.f32.mrf.mxu0
  %937 = vmatprep.mubr.f32.mxu0 %v791
  %938 = vmatmul.mubr.f32.gmra.mxu0 %v790
  %v939 = vpop.f32.mrf.mxu0
  %v940 = vadd.f32 %v105, %v939
  %v941 = vpop.f32.mrf.mxu0
  %942 = vmatprep.mubr.f32.mxu0 %v795
  %943 = vmatmul.mubr.f32.gmra.mxu0 %v794
  %v944 = vpop.f32.mrf.mxu0
  %v945 = vadd.f32 %v105, %v944
  %v946 = vpop.f32.mrf.mxu0
  %947 = vdwg.mxu0
  %948 = vmatprep.subr.mxu0 0.0
  %949 = vmatpush1.msra.mxu0 %v846
  %950 = vmatprep.subr.mxu0 0.0
  %951 = vmatpush1.msra.mxu0 %v845
  %952 = vmatprep.subr.mxu0 0.0
  %953 = vmatpush1.msra.mxu0 %v844
  %954 = vmatprep.subr.mxu0 0.0
  %955 = vmatpush1.msra.mxu0 %v843
  %956 = vmatprep.subr.mxu0 0.0
  %957 = vmatpush1.msra.mxu0 %v842
  %958 = vmatprep.subr.mxu0 0.0
  %959 = vmatpush1.msra.mxu0 %v841
  %960 = vmatprep.subr.mxu0 0.0
  %961 = vmatpush1.msra.mxu0 %v840
  %962 = vmatprep.subr.mxu0 0.0
  %963 = vmatpush1.msra.mxu0 %v839
  %964 = vmatprep.subr.mxu0 0.0
  %965 = vmatpush1.msra.mxu0 %v838
  %966 = vmatprep.subr.mxu0 0.0
  %967 = vmatpush1.msra.mxu0 %v837
  %968 = vmatprep.subr.mxu0 0.0
  %969 = vmatpush1.msra.mxu0 %v836
  %970 = vmatprep.subr.mxu0 0.0
  %971 = vmatpush1.msra.mxu0 %v835
  %972 = vmatprep.subr.mxu0 0.0
  %973 = vmatpush1.msra.mxu0 %v834
  %974 = vmatprep.subr.mxu0 0.0
  %975 = vmatpush1.msra.mxu0 %v833
  %976 = vmatprep.subr.mxu0 0.0
  %977 = vmatpush1.msra.mxu0 %v832
  %978 = vmatprep.subr.mxu0 0.0
  %979 = vmatpush1.msra.mxu0 %v831
  %980 = vmatprep.subr.mxu0 0.0
  %981 = vmatpush2.msra.mxu0 %v862
  %982 = vmatprep.subr.mxu0 0.0
  %983 = vmatpush2.msra.mxu0 %v861
  %984 = vmatprep.subr.mxu0 0.0
  %985 = vmatpush2.msra.mxu0 %v860
  %986 = vmatprep.subr.mxu0 0.0
  %987 = vmatpush2.msra.mxu0 %v859
  %988 = vmatprep.subr.mxu0 0.0
  %989 = vmatpush2.msra.mxu0 %v858
  %990 = vmatprep.subr.mxu0 0.0
  %991 = vmatpush2.msra.mxu0 %v857
  %992 = vmatprep.subr.mxu0 0.0
  %993 = vmatpush2.msra.mxu0 %v856
  %994 = vmatprep.subr.mxu0 0.0
  %995 = vmatpush2.msra.mxu0 %v855
  %996 = vmatprep.subr.mxu0 0.0
  %997 = vmatpush2.msra.mxu0 %v854
  %998 = vmatprep.subr.mxu0 0.0
  %999 = vmatpush2.msra.mxu0 %v853
  %1000 = vmatprep.subr.mxu0 0.0
  %1001 = vmatpush2.msra.mxu0 %v852
  %1002 = vmatprep.subr.mxu0 0.0
  %1003 = vmatpush2.msra.mxu0 %v851
  %1004 = vmatprep.subr.mxu0 0.0
  %1005 = vmatpush2.msra.mxu0 %v850
  %1006 = vmatprep.subr.mxu0 0.0
  %1007 = vmatpush2.msra.mxu0 %v849
  %1008 = vmatprep.subr.mxu0 0.0
  %1009 = vmatpush2.msra.mxu0 %v848
  %1010 = vmatprep.subr.mxu0 0.0
  %1011 = vmatpush2.msra.mxu0 %v847
  %1012 = vmatprep.mubr.f32.mxu0 %v785
  %1013 = vmatmul.mubr.f32.gmra.mxu0 %v784
  %v1014 = vpop.f32.mrf.mxu0
  %v1015 = vadd.f32 %v930, %v1014
  %v1016 = vpop.f32.mrf.mxu0
  %1017 = vmatprep.mubr.f32.mxu0 %v789
  %1018 = vmatmul.mubr.f32.gmra.mxu0 %v788
  %v1019 = vpop.f32.mrf.mxu0
  %v1020 = vadd.f32 %v935, %v1019
  %v1021 = vpop.f32.mrf.mxu0
  %1022 = vmatprep.mubr.f32.mxu0 %v793
  %1023 = vmatmul.mubr.f32.gmra.mxu0 %v792
  %v1024 = vpop.f32.mrf.mxu0
  %v1025 = vadd.f32 %v940, %v1024
  %v1026 = vpop.f32.mrf.mxu0
  %1027 = vmatprep.mubr.f32.mxu0 %v797
  %1028 = vmatmul.mubr.f32.gmra.mxu0 %v796
  %v1029 = vpop.f32.mrf.mxu0
  %v1030 = vadd.f32 %v945, %v1029
  %v1031 = vpop.f32.mrf.mxu0
  %1032 = vdwg.mxu0
  %vm1033 = vcmask 523264
  %v1034 = vsel %vm1033, %v259, 0.0
  %v1035 = vsel %vm1033, %v264, 0.0
  %v1036 = vadd.f32 %v1034, %v1035
  %v1037 = vsel %vm1033, %v269, 0.0
  %v1038 = vadd.f32 %v1036, %v1037
  %v1039 = vsel %vm1033, %v274, 0.0
  %v1040 = vadd.f32 %v1038, %v1039
  %v1041 = vrot.slane %v1040, 4
  %v1042 = vadd.f32 %v1040, %v1041
  %v1043 = vrot.slane %v1042, 2
  %v1044 = vadd.f32 %v1042, %v1043
  %v1045 = vrot.slane %v1044, 1
  %v1046 = vadd.f32 %v1044, %v1045
  %v1047 = vadd.f32 %v1046, 0.0
  %v1048 = vsel %vm1033, %v511, 0.0
  %v1049 = vsel %vm1033, %v516, 0.0
  %v1050 = vadd.f32 %v1048, %v1049
  %v1051 = vsel %vm1033, %v521, 0.0
  %v1052 = vadd.f32 %v1050, %v1051
  %v1053 = vsel %vm1033, %v526, 0.0
  %v1054 = vadd.f32 %v1052, %v1053
  %v1055 = vrot.slane %v1054, 4
  %v1056 = vadd.f32 %v1054, %v1055
  %v1057 = vrot.slane %v1056, 2
  %v1058 = vadd.f32 %v1056, %v1057
  %v1059 = vrot.slane %v1058, 1
  %v1060 = vadd.f32 %v1058, %v1059
  %v1061 = vadd.f32 %v1047, %v1060
  %v1062 = vsel %vm1033, %v763, 0.0
  %v1063 = vsel %vm1033, %v768, 0.0
  %v1064 = vadd.f32 %v1062, %v1063
  %v1065 = vsel %vm1033, %v773, 0.0
  %v1066 = vadd.f32 %v1064, %v1065
  %v1067 = vsel %vm1033, %v778, 0.0
  %v1068 = vadd.f32 %v1066, %v1067
  %v1069 = vrot.slane %v1068, 4
  %v1070 = vadd.f32 %v1068, %v1069
  %v1071 = vrot.slane %v1070, 2
  %v1072 = vadd.f32 %v1070, %v1071
  %v1073 = vrot.slane %v1072, 1
  %v1074 = vadd.f32 %v1072, %v1073
  %v1075 = vadd.f32 %v1061, %v1074
  %v1076 = vsel %vm1033, %v1015, 0.0
  %v1077 = vsel %vm1033, %v1020, 0.0
  %v1078 = vadd.f32 %v1076, %v1077
  %v1079 = vsel %vm1033, %v1025, 0.0
  %v1080 = vadd.f32 %v1078, %v1079
  %v1081 = vsel %vm1033, %v1030, 0.0
  %v1082 = vadd.f32 %v1080, %v1081
  %v1083 = vrot.slane %v1082, 4
  %v1084 = vadd.f32 %v1082, %v1083
  %v1085 = vrot.slane %v1084, 2
  %v1086 = vadd.f32 %v1084, %v1085
  %v1087 = vrot.slane %v1086, 1
  %v1088 = vadd.f32 %v1086, %v1087
  %v1089 = vadd.f32 %v1075, %v1088
  %v1090 = vrcp.pop 128.0
  %v1091 = vmul.f32 %v1089, %v1090
  %v1092 = vsub.f32 %v259, %v1091
  %v1093 = vsub.f32 %v264, %v1091
  %v1094 = vsub.f32 %v269, %v1091
  %v1095 = vsub.f32 %v274, %v1091
  %v1096 = vmul.f32 %v1092, %v1092
  %v1097 = vmul.f32 %v1093, %v1093
  %v1098 = vmul.f32 %v1094, %v1094
  %v1099 = vmul.f32 %v1095, %v1095
  %v1100 = vsel %vm1033, %v1096, 0.0
  %v1101 = vsel %vm1033, %v1097, 0.0
  %v1102 = vadd.f32 %v1100, %v1101
  %v1103 = vsel %vm1033, %v1098, 0.0
  %v1104 = vadd.f32 %v1102, %v1103
  %v1105 = vsel %vm1033, %v1099, 0.0
  %v1106 = vadd.f32 %v1104, %v1105
  %v1107 = vrot.slane %v1106, 4
  %v1108 = vadd.f32 %v1106, %v1107
  %v1109 = vrot.slane %v1108, 2
  %v1110 = vadd.f32 %v1108, %v1109
  %v1111 = vrot.slane %v1110, 1
  %v1112 = vadd.f32 %v1110, %v1111
  %v1113 = vadd.f32 %v1112, 0.0
  %v1114 = vsub.f32 %v511, %v1091
  %v1115 = vsub.f32 %v516, %v1091
  %v1116 = vsub.f32 %v521, %v1091
  %v1117 = vsub.f32 %v526, %v1091
  %v1118 = vmul.f32 %v1114, %v1114
  %v1119 = vmul.f32 %v1115, %v1115
  %v1120 = vmul.f32 %v1116, %v1116
  %v1121 = vmul.f32 %v1117, %v1117
  %v1122 = vsel %vm1033, %v1118, 0.0
  %v1123 = vsel %vm1033, %v1119, 0.0
  %v1124 = vadd.f32 %v1122, %v1123
  %v1125 = vsel %vm1033, %v1120, 0.0
  %v1126 = vadd.f32 %v1124, %v1125
  %v1127 = vsel %vm1033, %v1121, 0.0
  %v1128 = vadd.f32 %v1126, %v1127
  %v1129 = vrot.slane %v1128, 4
  %v1130 = vadd.f32 %v1128, %v1129
  %v1131 = vrot.slane %v1130, 2
  %v1132 = vadd.f32 %v1130, %v1131
  %v1133 = vrot.slane %v1132, 1
  %v1134 = vadd.f32 %v1132, %v1133
  %v1135 = vadd.f32 %v1113, %v1134
  %v1136 = vsub.f32 %v763, %v1091
  %v1137 = vsub.f32 %v768, %v1091
  %v1138 = vsub.f32 %v773, %v1091
  %v1139 = vsub.f32 %v778, %v1091
  %v1140 = vmul.f32 %v1136, %v1136
  %v1141 = vmul.f32 %v1137, %v1137
  %v1142 = vmul.f32 %v1138, %v1138
  %v1143 = vmul.f32 %v1139, %v1139
  %v1144 = vsel %vm1033, %v1140, 0.0
  %v1145 = vsel %vm1033, %v1141, 0.0
  %v1146 = vadd.f32 %v1144, %v1145
  %v1147 = vsel %vm1033, %v1142, 0.0
  %v1148 = vadd.f32 %v1146, %v1147
  %v1149 = vsel %vm1033, %v1143, 0.0
  %v1150 = vadd.f32 %v1148, %v1149
  %v1151 = vrot.slane %v1150, 4
  %v1152 = vadd.f32 %v1150, %v1151
  %v1153 = vrot.slane %v1152, 2
  %v1154 = vadd.f32 %v1152, %v1153
  %v1155 = vrot.slane %v1154, 1
  %v1156 = vadd.f32 %v1154, %v1155
  %v1157 = vadd.f32 %v1135, %v1156
  %v1158 = vsub.f32 %v1015, %v1091
  %v1159 = vsub.f32 %v1020, %v1091
  %v1160 = vsub.f32 %v1025, %v1091
  %v1161 = vsub.f32 %v1030, %v1091
  %v1162 = vmul.f32 %v1158, %v1158
  %v1163 = vmul.f32 %v1159, %v1159
  %v1164 = vmul.f32 %v1160, %v1160
  %v1165 = vmul.f32 %v1161, %v1161
  %v1166 = vsel %vm1033, %v1162, 0.0
  %v1167 = vsel %vm1033, %v1163, 0.0
  %v1168 = vadd.f32 %v1166, %v1167
  %v1169 = vsel %vm1033, %v1164, 0.0
  %v1170 = vadd.f32 %v1168, %v1169
  %v1171 = vsel %vm1033, %v1165, 0.0
  %v1172 = vadd.f32 %v1170, %v1171
  %v1173 = vrot.slane %v1172, 4
  %v1174 = vadd.f32 %v1172, %v1173
  %v1175 = vrot.slane %v1174, 2
  %v1176 = vadd.f32 %v1174, %v1175
  %v1177 = vrot.slane %v1176, 1
  %v1178 = vadd.f32 %v1176, %v1177
  %v1179 = vadd.f32 %v1157, %v1178
  %v1180 = vmul.f32 %v1179, %v1090
  %v1181 = vadd.f32 %v1180, 1e-05
  %v1182 = vrsqrt.pop %v1181
  %v1183 = vld [vmem:[%s3] sm:$0x1]
  %v1184 = vmul.f32 %v1182, %v1183
  %v1185 = vld [vmem:[%s4] sm:$0x1]
  %v1186 = vmul.f32 %v1091, %v1184
  %v1187 = vsub.f32 %v1185, %v1186
  %v1188 = vlaneseq
  %v1189 = vshrl.u32 %v1188, 7
  %v1190 = vsub.s32 0, %v1189
  %v1191 = vrot.slane %v1184, %v1190
  %v1192 = vmul.f32 %v259, %v1191
  %v1193 = vmul.f32 %v264, %v1191
  %v1194 = vmul.f32 %v269, %v1191
  %v1195 = vmul.f32 %v274, %v1191
  %v1197 = vlaneseq
  %v1198 = vshrl.u32 %v1197, 7
  %v1199 = vsub.s32 0, %v1198
  %v1200 = vrot.slane %v1187, %v1199
  %v1202 = vadd.f32 %v1192, %v1200
  %v1203 = vadd.f32 %v1193, %v1200
  %v1204 = vadd.f32 %v1194, %v1200
  %v1205 = vadd.f32 %v1195, %v1200
  %v1206 = vmax.f32 %v1202, 0.0
  %v1207 = vmax.f32 %v1203, 0.0
  %v1208 = vmax.f32 %v1204, 0.0
  %v1209 = vmax.f32 %v1205, 0.0
  %1210 = vst.msk [vmem:[%s5] sm:$0xff] %vm1033, %v1206
  %1211 = vst.msk [vmem:[%s5 + $0x8] sm:$0xff] %vm1033, %v1207
  %1212 = vst.msk [vmem:[%s5 + $0x10] sm:$0xff] %vm1033, %v1208
  %1213 = vst.msk [vmem:[%s5 + $0x18] sm:$0xff] %vm1033, %v1209
  %v1214 = vmul.f32 %v511, %v1191
  %v1215 = vmul.f32 %v516, %v1191
  %v1216 = vmul.f32 %v521, %v1191
  %v1217 = vmul.f32 %v526, %v1191
  %v1218 = vadd.f32 %v1214, %v1200
  %v1219 = vadd.f32 %v1215, %v1200
  %v1220 = vadd.f32 %v1216, %v1200
  %v1221 = vadd.f32 %v1217, %v1200
  %v1222 = vmax.f32 %v1218, 0.0
  %v1223 = vmax.f32 %v1219, 0.0
  %v1224 = vmax.f32 %v1220, 0.0
  %v1225 = vmax.f32 %v1221, 0.0
  %s1226 = scalar_lea.vmem %s5, 32
  %1227 = vst.msk [vmem:[%s1226] sm:$0xff] %vm1033, %v1222
  %1228 = vst.msk [vmem:[%s1226 + $0x8] sm:$0xff] %vm1033, %v1223
  %1229 = vst.msk [vmem:[%s1226 + $0x10] sm:$0xff] %vm1033, %v1224
  %1230 = vst.msk [vmem:[%s1226 + $0x18] sm:$0xff] %vm1033, %v1225
  %v1231 = vmul.f32 %v763, %v1191
  %v1232 = vmul.f32 %v768, %v1191
  %v1233 = vmul.f32 %v773, %v1191
  %v1234 = vmul.f32 %v778, %v1191
  %v1235 = vadd.f32 %v1231, %v1200
  %v1236 = vadd.f32 %v1232, %v1200
  %v1237 = vadd.f32 %v1233, %v1200
  %v1238 = vadd.f32 %v1234, %v1200
  %v1239 = vmax.f32 %v1235, 0.0
  %v1240 = vmax.f32 %v1236, 0.0
  %v1241 = vmax.f32 %v1237, 0.0
  %v1242 = vmax.f32 %v1238, 0.0
  %s1243 = scalar_lea.vmem %s5, 64
  %1244 = vst.msk [vmem:[%s1243] sm:$0xff] %vm1033, %v1239
  %1245 = vst.msk [vmem:[%s1243 + $0x8] sm:$0xff] %vm1033, %v1240
  %1246 = vst.msk [vmem:[%s1243 + $0x10] sm:$0xff] %vm1033, %v1241
  %1247 = vst.msk [vmem:[%s1243 + $0x18] sm:$0xff] %vm1033, %v1242
  %v1248 = vmul.f32 %v1015, %v1191
  %v1249 = vmul.f32 %v1020, %v1191
  %v1250 = vmul.f32 %v1025, %v1191
  %v1251 = vmul.f32 %v1030, %v1191
  %v1252 = vadd.f32 %v1248, %v1200
  %v1253 = vadd.f32 %v1249, %v1200
  %v1254 = vadd.f32 %v1250, %v1200
  %v1255 = vadd.f32 %v1251, %v1200
  %v1256 = vmax.f32 %v1252, 0.0
  %v1257 = vmax.f32 %v1253, 0.0
  %v1258 = vmax.f32 %v1254, 0.0
  %v1259 = vmax.f32 %v1255, 0.0
  %s1260 = scalar_lea.vmem %s5, 96
  %1261 = vst.msk [vmem:[%s1260] sm:$0xff] %vm1033, %v1256
  %1262 = vst.msk [vmem:[%s1260 + $0x8] sm:$0xff] %vm1033, %v1257
  %1263 = vst.msk [vmem:[%s1260 + $0x10] sm:$0xff] %vm1033, %v1258
  %1264 = vst.msk [vmem:[%s1260 + $0x18] sm:$0xff] %vm1033, %v1259
  // Predicated region
  $region22: #{generator_forward.4} parent=0 // pred_check
    _
  $region23: #{generator_forward.4} parent=0 // pred_check_branch
    %1266 = sbr.rel (0) target = $region25
  $region24: #{generator_forward.4} parent=0 // pred_region
    _
  $region25: #{generator_forward.4} parent=0 // pred_fallthru
    _
  // Predicated region
  $region26: #{generator_forward.4} parent=0 // pred_check
    _
  $region27: #{generator_forward.4} parent=0 // pred_check_branch
    %1268 = sbr.rel (0) target = $region29
  $region28: #{generator_forward.4} parent=0 // pred_region
    _
  $region29: #{generator_forward.4} parent=0 // pred_fallthru
    _

// kernel: generator_forward.5
$region0: #{generator_forward.5}
  #allocation0 [shape = 'u32[]', space=smem, size = 0x4, offset = 0x4, fixed_abs, tag = 'smem constant byte address 0x4 - core index']
  #allocation1 [shape = 'u32[144,128]{1,0:T(1,128)}', space=vmem, size = 0x12000, scoped, tag = 'internal scratch']
  #allocation2 [shape = 'f32[1,1]{1,0:T(1,128)S(1)}', space=vmem, size = 0x200, scoped, tag = 'scoped memory for generator_forward.5']
  %s0 = inlined_call_operand.vmem [shape: f32[4,128,256], index: 0, kind: input, shape index: {}]
  %s1 = inlined_call_operand.vmem [shape: f32[4,256], index: 1, kind: input, shape index: {}]
  %s2 = inlined_call_operand.<no memory space> [shape: f32[1,1], index: 2, kind: input, shape index: {}]
  %s3 = inlined_call_operand.vmem [shape: f32[128,4], index: 3, kind: output, shape index: {}]
  %s4 = sld [smem:[#allocation0]]
  $region22: #{generator_forward.5} parent=0
    _
  %s6 = ssub.s32 1, %s4
  %s7 = scalar_select 0, %s6, %s4
  %v8 = vstv %s2
  %9 = vst [vmem:[#allocation2] sm:$0x1] %v8
  // Predicated region
  $region2: #{generator_forward.5} parent=0 // pred_check
    _
  $region3: #{generator_forward.5} parent=0 // pred_check_branch
    %11 = sbr.rel (0) target = $region5
  $region4: #{generator_forward.5} parent=0 // pred_region
    _
  $region5: #{generator_forward.5} parent=0 // pred_fallthru
    _
  // Predicated region
  $region6: #{generator_forward.5} parent=0 // pred_check
    _
  $region7: #{generator_forward.5} parent=0 // pred_check_branch
    %13 = sbr.rel (0) target = $region9
  $region8: #{generator_forward.5} parent=0 // pred_region
    _
  $region9: #{generator_forward.5} parent=0 // pred_fallthru
    _
  // Predicated region
  $region10: #{generator_forward.5} parent=0 // pred_check
    _
  $region11: #{generator_forward.5} parent=0 // pred_check_branch
    %15 = sbr.rel (0) target = $region13
  $region12: #{generator_forward.5} parent=0 // pred_region
    _
  $region13: #{generator_forward.5} parent=0 // pred_fallthru
    _
  %v16 = vld [vmem:[%s0] sm:$0xff]
  %v17 = vld [vmem:[%s0 + $0x8] sm:$0xff]
  %v18 = vld [vmem:[%s0 + $0x10] sm:$0xff]
  %v19 = vld [vmem:[%s0 + $0x18] sm:$0xff]
  %v20 = vld [vmem:[%s0 + $0x20] sm:$0xff]
  %v21 = vld [vmem:[%s0 + $0x28] sm:$0xff]
  %v22 = vld [vmem:[%s0 + $0x30] sm:$0xff]
  %v23 = vld [vmem:[%s0 + $0x38] sm:$0xff]
  %v24 = vld [vmem:[%s0 + $0x40] sm:$0xff]
  %v25 = vld [vmem:[%s0 + $0x48] sm:$0xff]
  %v26 = vld [vmem:[%s0 + $0x50] sm:$0xff]
  %v27 = vld [vmem:[%s0 + $0x58] sm:$0xff]
  %v28 = vld [vmem:[%s0 + $0x60] sm:$0xff]
  %v29 = vld [vmem:[%s0 + $0x68] sm:$0xff]
  %v30 = vld [vmem:[%s0 + $0x70] sm:$0xff]
  %v31 = vld [vmem:[%s0 + $0x78] sm:$0xff]
  %v32 = vld [vmem:[%s0 + $0x80] sm:$0xff]
  %v33 = vld [vmem:[%s0 + $0x88] sm:$0xff]
  %v34 = vld [vmem:[%s0 + $0x90] sm:$0xff]
  %v35 = vld [vmem:[%s0 + $0x98] sm:$0xff]
  %v36 = vld [vmem:[%s0 + $0xa0] sm:$0xff]
  %v37 = vld [vmem:[%s0 + $0xa8] sm:$0xff]
  %v38 = vld [vmem:[%s0 + $0xb0] sm:$0xff]
  %v39 = vld [vmem:[%s0 + $0xb8] sm:$0xff]
  %v40 = vld [vmem:[%s0 + $0xc0] sm:$0xff]
  %v41 = vld [vmem:[%s0 + $0xc8] sm:$0xff]
  %v42 = vld [vmem:[%s0 + $0xd0] sm:$0xff]
  %v43 = vld [vmem:[%s0 + $0xd8] sm:$0xff]
  %v44 = vld [vmem:[%s0 + $0xe0] sm:$0xff]
  %v45 = vld [vmem:[%s0 + $0xe8] sm:$0xff]
  %v46 = vld [vmem:[%s0 + $0xf0] sm:$0xff]
  %v47 = vld [vmem:[%s0 + $0xf8] sm:$0xff]
  %v48 = vld [vmem:[%s1] ss:$4 sm:$0x3]
  %v50 = vlaneseq
  %v51 = vshrl.u32 %v50, 7
  %v52 = vsub.s32 0, %v51
  %v53 = vrot.slane %v48, %v52
  %v54 = vlaneseq
  %v55 = vshrl.u32 %v54, 7
  %v56 = vsub.s32 1, %v55
  %v57 = vrot.slane %v48, %v56
  %v60 = vmul.f32 %v16, %v53
  %v61 = vmul.f32 %v17, %v57
  %v62 = vmul.f32 %v18, %v53
  %v63 = vmul.f32 %v19, %v57
  %v64 = vmul.f32 %v20, %v53
  %v65 = vmul.f32 %v21, %v57
  %v66 = vmul.f32 %v22, %v53
  %v67 = vmul.f32 %v23, %v57
  %v68 = vmul.f32 %v24, %v53
  %v69 = vmul.f32 %v25, %v57
  %v70 = vmul.f32 %v26, %v53
  %v71 = vmul.f32 %v27, %v57
  %v72 = vmul.f32 %v28, %v53
  %v73 = vmul.f32 %v29, %v57
  %v74 = vmul.f32 %v30, %v53
  %v75 = vmul.f32 %v31, %v57
  %v76 = vmul.f32 %v32, %v53
  %v77 = vmul.f32 %v33, %v57
  %v78 = vmul.f32 %v34, %v53
  %v79 = vmul.f32 %v35, %v57
  %v80 = vmul.f32 %v36, %v53
  %v81 = vmul.f32 %v37, %v57
  %v82 = vmul.f32 %v38, %v53
  %v83 = vmul.f32 %v39, %v57
  %v84 = vmul.f32 %v40, %v53
  %v85 = vmul.f32 %v41, %v57
  %v86 = vmul.f32 %v42, %v53
  %v87 = vmul.f32 %v43, %v57
  %v88 = vmul.f32 %v44, %v53
  %v89 = vmul.f32 %v45, %v57
  %v90 = vmul.f32 %v46, %v53
  %v91 = vmul.f32 %v47, %v57
  %v92 = vadd.f32 %v60, %v61
  %93 = vadd.xlane.f32.xlu0 %v92
  %v94 = vpop.xlane.xlu0 %93
  %v95 = vadd.f32 %v62, %v63
  %96 = vadd.xlane.f32.xlu0 %v95
  %v97 = vpop.xlane.xlu0 %96
  %v98 = vadd.f32 %v64, %v65
  %99 = vadd.xlane.f32.xlu0 %v98
  %v100 = vpop.xlane.xlu0 %99
  %v101 = vadd.f32 %v66, %v67
  %102 = vadd.xlane.f32.xlu0 %v101
  %v103 = vpop.xlane.xlu0 %102
  %v104 = vadd.f32 %v68, %v69
  %105 = vadd.xlane.f32.xlu0 %v104
  %v106 = vpop.xlane.xlu0 %105
  %v107 = vadd.f32 %v70, %v71
  %108 = vadd.xlane.f32.xlu0 %v107
  %v109 = vpop.xlane.xlu0 %108
  %v110 = vadd.f32 %v72, %v73
  %111 = vadd.xlane.f32.xlu0 %v110
  %v112 = vpop.xlane.xlu0 %111
  %v113 = vadd.f32 %v74, %v75
  %114 = vadd.xlane.f32.xlu0 %v113
  %v115 = vpop.xlane.xlu0 %114
  %v116 = vadd.f32 %v76, %v77
  %117 = vadd.xlane.f32.xlu0 %v116
  %v118 = vpop.xlane.xlu0 %117
  %v119 = vadd.f32 %v78, %v79
  %120 = vadd.xlane.f32.xlu0 %v119
  %v121 = vpop.xlane.xlu0 %120
  %v122 = vadd.f32 %v80, %v81
  %123 = vadd.xlane.f32.xlu0 %v122
  %v124 = vpop.xlane.xlu0 %123
  %v125 = vadd.f32 %v82, %v83
  %126 = vadd.xlane.f32.xlu0 %v125
  %v127 = vpop.xlane.xlu0 %126
  %v128 = vadd.f32 %v84, %v85
  %129 = vadd.xlane.f32.xlu0 %v128
  %v130 = vpop.xlane.xlu0 %129
  %v131 = vadd.f32 %v86, %v87
  %132 = vadd.xlane.f32.xlu0 %v131
  %v133 = vpop.xlane.xlu0 %132
  %v134 = vadd.f32 %v88, %v89
  %135 = vadd.xlane.f32.xlu0 %v134
  %v136 = vpop.xlane.xlu0 %135
  %v137 = vadd.f32 %v90, %v91
  %138 = vadd.xlane.f32.xlu0 %v137
  %v139 = vpop.xlane.xlu0 %138
  %v140 = vld [vmem:[#allocation2] sm:$0x1]
  %v142 = vlaneseq
  %v143 = vshrl.u32 %v142, 7
  %v144 = vsub.s32 0, %v143
  %v145 = vrot.slane %v140, %v144
  %v147 = vadd.f32 %v94, %v145
  %v148 = vadd.f32 %v97, %v145
  %v149 = vadd.f32 %v100, %v145
  %v150 = vadd.f32 %v103, %v145
  %v151 = vadd.f32 %v106, %v145
  %v152 = vadd.f32 %v109, %v145
  %v153 = vadd.f32 %v112, %v145
  %v154 = vadd.f32 %v115, %v145
  %v155 = vadd.f32 %v118, %v145
  %v156 = vadd.f32 %v121, %v145
  %v157 = vadd.f32 %v124, %v145
  %v158 = vadd.f32 %v127, %v145
  %v159 = vadd.f32 %v130, %v145
  %v160 = vadd.f32 %v133, %v145
  %v161 = vadd.f32 %v136, %v145
  %v162 = vadd.f32 %v139, %v145
  %v163 = vtanh.pop %v147
  %v164 = vtanh.pop %v148
  %v165 = vtanh.pop %v149
  %v166 = vtanh.pop %v150
  %v167 = vtanh.pop %v151
  %v168 = vtanh.pop %v152
  %v169 = vtanh.pop %v153
  %v170 = vtanh.pop %v154
  %v171 = vtanh.pop %v155
  %v172 = vtanh.pop %v156
  %v173 = vtanh.pop %v157
  %v174 = vtanh.pop %v158
  %v175 = vtanh.pop %v159
  %v176 = vtanh.pop %v160
  %v177 = vtanh.pop %v161
  %v178 = vtanh.pop %v162
  %vm179 = vcmask 7168
  %180 = vst.msk [vmem:[%s3] sm:$0xff] %vm179, %v163
  %181 = vst.msk [vmem:[%s3 + $0x8] sm:$0xff] %vm179, %v164
  %182 = vst.msk [vmem:[%s3 + $0x10] sm:$0xff] %vm179, %v165
  %183 = vst.msk [vmem:[%s3 + $0x18] sm:$0xff] %vm179, %v166
  %184 = vst.msk [vmem:[%s3 + $0x20] sm:$0xff] %vm179, %v167
  %185 = vst.msk [vmem:[%s3 + $0x28] sm:$0xff] %vm179, %v168
  %186 = vst.msk [vmem:[%s3 + $0x30] sm:$0xff] %vm179, %v169
  %187 = vst.msk [vmem:[%s3 + $0x38] sm:$0xff] %vm179, %v170
  %188 = vst.msk [vmem:[%s3 + $0x40] sm:$0xff] %vm179, %v171
  %189 = vst.msk [vmem:[%s3 + $0x48] sm:$0xff] %vm179, %v172
  %190 = vst.msk [vmem:[%s3 + $0x50] sm:$0xff] %vm179, %v173
  %191 = vst.msk [vmem:[%s3 + $0x58] sm:$0xff] %vm179, %v174
  %192 = vst.msk [vmem:[%s3 + $0x60] sm:$0xff] %vm179, %v175
  %193 = vst.msk [vmem:[%s3 + $0x68] sm:$0xff] %vm179, %v176
  %194 = vst.msk [vmem:[%s3 + $0x70] sm:$0xff] %vm179, %v177
  %195 = vst.msk [vmem:[%s3 + $0x78] sm:$0xff] %vm179, %v178
  %s196 = scalar_lea.vmem %s0, 256
  %v197 = vld [vmem:[%s196] sm:$0xff]
  %v198 = vld [vmem:[%s196 + $0x8] sm:$0xff]
  %v199 = vld [vmem:[%s196 + $0x10] sm:$0xff]
  %v200 = vld [vmem:[%s196 + $0x18] sm:$0xff]
  %v201 = vld [vmem:[%s196 + $0x20] sm:$0xff]
  %v202 = vld [vmem:[%s196 + $0x28] sm:$0xff]
  %v203 = vld [vmem:[%s196 + $0x30] sm:$0xff]
  %v204 = vld [vmem:[%s196 + $0x38] sm:$0xff]
  %v205 = vld [vmem:[%s196 + $0x40] sm:$0xff]
  %v206 = vld [vmem:[%s196 + $0x48] sm:$0xff]
  %v207 = vld [vmem:[%s196 + $0x50] sm:$0xff]
  %v208 = vld [vmem:[%s196 + $0x58] sm:$0xff]
  %v209 = vld [vmem:[%s196 + $0x60] sm:$0xff]
  %v210 = vld [vmem:[%s196 + $0x68] sm:$0xff]
  %v211 = vld [vmem:[%s196 + $0x70] sm:$0xff]
  %v212 = vld [vmem:[%s196 + $0x78] sm:$0xff]
  %v213 = vld [vmem:[%s196 + $0x80] sm:$0xff]
  %v214 = vld [vmem:[%s196 + $0x88] sm:$0xff]
  %v215 = vld [vmem:[%s196 + $0x90] sm:$0xff]
  %v216 = vld [vmem:[%s196 + $0x98] sm:$0xff]
  %v217 = vld [vmem:[%s196 + $0xa0] sm:$0xff]
  %v218 = vld [vmem:[%s196 + $0xa8] sm:$0xff]
  %v219 = vld [vmem:[%s196 + $0xb0] sm:$0xff]
  %v220 = vld [vmem:[%s196 + $0xb8] sm:$0xff]
  %v221 = vld [vmem:[%s196 + $0xc0] sm:$0xff]
  %v222 = vld [vmem:[%s196 + $0xc8] sm:$0xff]
  %v223 = vld [vmem:[%s196 + $0xd0] sm:$0xff]
  %v224 = vld [vmem:[%s196 + $0xd8] sm:$0xff]
  %v225 = vld [vmem:[%s196 + $0xe0] sm:$0xff]
  %v226 = vld [vmem:[%s196 + $0xe8] sm:$0xff]
  %v227 = vld [vmem:[%s196 + $0xf0] sm:$0xff]
  %v228 = vld [vmem:[%s196 + $0xf8] sm:$0xff]
  %s229 = scalar_lea.vmem %s1, 1
  %v230 = vld [vmem:[%s229] ss:$4 sm:$0x3]
  %v232 = vlaneseq
  %v233 = vshrl.u32 %v232, 7
  %v234 = vsub.s32 0, %v233
  %v235 = vrot.slane %v230, %v234
  %v236 = vlaneseq
  %v237 = vshrl.u32 %v236, 7
  %v238 = vsub.s32 1, %v237
  %v239 = vrot.slane %v230, %v238
  %v242 = vmul.f32 %v197, %v235
  %v243 = vmul.f32 %v198, %v239
  %v244 = vmul.f32 %v199, %v235
  %v245 = vmul.f32 %v200, %v239
  %v246 = vmul.f32 %v201, %v235
  %v247 = vmul.f32 %v202, %v239
  %v248 = vmul.f32 %v203, %v235
  %v249 = vmul.f32 %v204, %v239
  %v250 = vmul.f32 %v205, %v235
  %v251 = vmul.f32 %v206, %v239
  %v252 = vmul.f32 %v207, %v235
  %v253 = vmul.f32 %v208, %v239
  %v254 = vmul.f32 %v209, %v235
  %v255 = vmul.f32 %v210, %v239
  %v256 = vmul.f32 %v211, %v235
  %v257 = vmul.f32 %v212, %v239
  %v258 = vmul.f32 %v213, %v235
  %v259 = vmul.f32 %v214, %v239
  %v260 = vmul.f32 %v215, %v235
  %v261 = vmul.f32 %v216, %v239
  %v262 = vmul.f32 %v217, %v235
  %v263 = vmul.f32 %v218, %v239
  %v264 = vmul.f32 %v219, %v235
  %v265 = vmul.f32 %v220, %v239
  %v266 = vmul.f32 %v221, %v235
  %v267 = vmul.f32 %v222, %v239
  %v268 = vmul.f32 %v223, %v235
  %v269 = vmul.f32 %v224, %v239
  %v270 = vmul.f32 %v225, %v235
  %v271 = vmul.f32 %v226, %v239
  %v272 = vmul.f32 %v227, %v235
  %v273 = vmul.f32 %v228, %v239
  %v274 = vadd.f32 %v242, %v243
  %275 = vadd.xlane.f32.xlu0 %v274
  %v276 = vpop.xlane.xlu0 %275
  %v277 = vadd.f32 %v244, %v245
  %278 = vadd.xlane.f32.xlu0 %v277
  %v279 = vpop.xlane.xlu0 %278
  %v280 = vadd.f32 %v246, %v247
  %281 = vadd.xlane.f32.xlu0 %v280
  %v282 = vpop.xlane.xlu0 %281
  %v283 = vadd.f32 %v248, %v249
  %284 = vadd.xlane.f32.xlu0 %v283
  %v285 = vpop.xlane.xlu0 %284
  %v286 = vadd.f32 %v250, %v251
  %287 = vadd.xlane.f32.xlu0 %v286
  %v288 = vpop.xlane.xlu0 %287
  %v289 = vadd.f32 %v252, %v253
  %290 = vadd.xlane.f32.xlu0 %v289
  %v291 = vpop.xlane.xlu0 %290
  %v292 = vadd.f32 %v254, %v255
  %293 = vadd.xlane.f32.xlu0 %v292
  %v294 = vpop.xlane.xlu0 %293
  %v295 = vadd.f32 %v256, %v257
  %296 = vadd.xlane.f32.xlu0 %v295
  %v297 = vpop.xlane.xlu0 %296
  %v298 = vadd.f32 %v258, %v259
  %299 = vadd.xlane.f32.xlu0 %v298
  %v300 = vpop.xlane.xlu0 %299
  %v301 = vadd.f32 %v260, %v261
  %302 = vadd.xlane.f32.xlu0 %v301
  %v303 = vpop.xlane.xlu0 %302
  %v304 = vadd.f32 %v262, %v263
  %305 = vadd.xlane.f32.xlu0 %v304
  %v306 = vpop.xlane.xlu0 %305
  %v307 = vadd.f32 %v264, %v265
  %308 = vadd.xlane.f32.xlu0 %v307
  %v309 = vpop.xlane.xlu0 %308
  %v310 = vadd.f32 %v266, %v267
  %311 = vadd.xlane.f32.xlu0 %v310
  %v312 = vpop.xlane.xlu0 %311
  %v313 = vadd.f32 %v268, %v269
  %314 = vadd.xlane.f32.xlu0 %v313
  %v315 = vpop.xlane.xlu0 %314
  %v316 = vadd.f32 %v270, %v271
  %317 = vadd.xlane.f32.xlu0 %v316
  %v318 = vpop.xlane.xlu0 %317
  %v319 = vadd.f32 %v272, %v273
  %320 = vadd.xlane.f32.xlu0 %v319
  %v321 = vpop.xlane.xlu0 %320
  %v322 = vld [vmem:[#allocation2] sm:$0x1]
  %v324 = vlaneseq
  %v325 = vshrl.u32 %v324, 7
  %v326 = vsub.s32 0, %v325
  %v327 = vrot.slane %v322, %v326
  %v329 = vadd.f32 %v276, %v327
  %v330 = vadd.f32 %v279, %v327
  %v331 = vadd.f32 %v282, %v327
  %v332 = vadd.f32 %v285, %v327
  %v333 = vadd.f32 %v288, %v327
  %v334 = vadd.f32 %v291, %v327
  %v335 = vadd.f32 %v294, %v327
  %v336 = vadd.f32 %v297, %v327
  %v337 = vadd.f32 %v300, %v327
  %v338 = vadd.f32 %v303, %v327
  %v339 = vadd.f32 %v306, %v327
  %v340 = vadd.f32 %v309, %v327
  %v341 = vadd.f32 %v312, %v327
  %v342 = vadd.f32 %v315, %v327
  %v343 = vadd.f32 %v318, %v327
  %v344 = vadd.f32 %v321, %v327
  %v345 = vtanh.pop %v329
  %v346 = vtanh.pop %v330
  %v347 = vtanh.pop %v331
  %v348 = vtanh.pop %v332
  %v349 = vtanh.pop %v333
  %v350 = vtanh.pop %v334
  %v351 = vtanh.pop %v335
  %v352 = vtanh.pop %v336
  %v353 = vtanh.pop %v337
  %v354 = vtanh.pop %v338
  %v355 = vtanh.pop %v339
  %v356 = vtanh.pop %v340
  %v357 = vtanh.pop %v341
  %v358 = vtanh.pop %v342
  %v359 = vtanh.pop %v343
  %v360 = vtanh.pop %v344
  %377 = vrot.lane.b32.xlu0 %v345, 1
  %v378 = vpop.permute.xlu0 %377
  %379 = vrot.lane.b32.xlu0 %v346, 1
  %v380 = vpop.permute.xlu0 %379
  %381 = vrot.lane.b32.xlu0 %v347, 1
  %v382 = vpop.permute.xlu0 %381
  %383 = vrot.lane.b32.xlu0 %v348, 1
  %v384 = vpop.permute.xlu0 %383
  %385 = vrot.lane.b32.xlu0 %v349, 1
  %v386 = vpop.permute.xlu0 %385
  %387 = vrot.lane.b32.xlu0 %v350, 1
  %v388 = vpop.permute.xlu0 %387
  %389 = vrot.lane.b32.xlu0 %v351, 1
  %v390 = vpop.permute.xlu0 %389
  %391 = vrot.lane.b32.xlu0 %v352, 1
  %v392 = vpop.permute.xlu0 %391
  %393 = vrot.lane.b32.xlu0 %v353, 1
  %v394 = vpop.permute.xlu0 %393
  %395 = vrot.lane.b32.xlu0 %v354, 1
  %v396 = vpop.permute.xlu0 %395
  %397 = vrot.lane.b32.xlu0 %v355, 1
  %v398 = vpop.permute.xlu0 %397
  %399 = vrot.lane.b32.xlu0 %v356, 1
  %v400 = vpop.permute.xlu0 %399
  %401 = vrot.lane.b32.xlu0 %v357, 1
  %v402 = vpop.permute.xlu0 %401
  %403 = vrot.lane.b32.xlu0 %v358, 1
  %v404 = vpop.permute.xlu0 %403
  %405 = vrot.lane.b32.xlu0 %v359, 1
  %v406 = vpop.permute.xlu0 %405
  %407 = vrot.lane.b32.xlu0 %v360, 1
  %v408 = vpop.permute.xlu0 %407
  %vm425 = vcmask 15368
  %426 = vst.msk [vmem:[%s3] sm:$0xff] %vm425, %v378
  %427 = vst.msk [vmem:[%s3 + $0x8] sm:$0xff] %vm425, %v380
  %428 = vst.msk [vmem:[%s3 + $0x10] sm:$0xff] %vm425, %v382
  %429 = vst.msk [vmem:[%s3 + $0x18] sm:$0xff] %vm425, %v384
  %430 = vst.msk [vmem:[%s3 + $0x20] sm:$0xff] %vm425, %v386
  %431 = vst.msk [vmem:[%s3 + $0x28] sm:$0xff] %vm425, %v388
  %432 = vst.msk [vmem:[%s3 + $0x30] sm:$0xff] %vm425, %v390
  %433 = vst.msk [vmem:[%s3 + $0x38] sm:$0xff] %vm425, %v392
  %434 = vst.msk [vmem:[%s3 + $0x40] sm:$0xff] %vm425, %v394
  %435 = vst.msk [vmem:[%s3 + $0x48] sm:$0xff] %vm425, %v396
  %436 = vst.msk [vmem:[%s3 + $0x50] sm:$0xff] %vm425, %v398
  %437 = vst.msk [vmem:[%s3 + $0x58] sm:$0xff] %vm425, %v400
  %438 = vst.msk [vmem:[%s3 + $0x60] sm:$0xff] %vm425, %v402
  %439 = vst.msk [vmem:[%s3 + $0x68] sm:$0xff] %vm425, %v404
  %440 = vst.msk [vmem:[%s3 + $0x70] sm:$0xff] %vm425, %v406
  %441 = vst.msk [vmem:[%s3 + $0x78] sm:$0xff] %vm425, %v408
  %s442 = scalar_lea.vmem %s0, 512
  %v443 = vld [vmem:[%s442] sm:$0xff]
  %v444 = vld [vmem:[%s442 + $0x8] sm:$0xff]
  %v445 = vld [vmem:[%s442 + $0x10] sm:$0xff]
  %v446 = vld [vmem:[%s442 + $0x18] sm:$0xff]
  %v447 = vld [vmem:[%s442 + $0x20] sm:$0xff]
  %v448 = vld [vmem:[%s442 + $0x28] sm:$0xff]
  %v449 = vld [vmem:[%s442 + $0x30] sm:$0xff]
  %v450 = vld [vmem:[%s442 + $0x38] sm:$0xff]
  %v451 = vld [vmem:[%s442 + $0x40] sm:$0xff]
  %v452 = vld [vmem:[%s442 + $0x48] sm:$0xff]
  %v453 = vld [vmem:[%s442 + $0x50] sm:$0xff]
  %v454 = vld [vmem:[%s442 + $0x58] sm:$0xff]
  %v455 = vld [vmem:[%s442 + $0x60] sm:$0xff]
  %v456 = vld [vmem:[%s442 + $0x68] sm:$0xff]
  %v457 = vld [vmem:[%s442 + $0x70] sm:$0xff]
  %v458 = vld [vmem:[%s442 + $0x78] sm:$0xff]
  %v459 = vld [vmem:[%s442 + $0x80] sm:$0xff]
  %v460 = vld [vmem:[%s442 + $0x88] sm:$0xff]
  %v461 = vld [vmem:[%s442 + $0x90] sm:$0xff]
  %v462 = vld [vmem:[%s442 + $0x98] sm:$0xff]
  %v463 = vld [vmem:[%s442 + $0xa0] sm:$0xff]
  %v464 = vld [vmem:[%s442 + $0xa8] sm:$0xff]
  %v465 = vld [vmem:[%s442 + $0xb0] sm:$0xff]
  %v466 = vld [vmem:[%s442 + $0xb8] sm:$0xff]
  %v467 = vld [vmem:[%s442 + $0xc0] sm:$0xff]
  %v468 = vld [vmem:[%s442 + $0xc8] sm:$0xff]
  %v469 = vld [vmem:[%s442 + $0xd0] sm:$0xff]
  %v470 = vld [vmem:[%s442 + $0xd8] sm:$0xff]
  %v471 = vld [vmem:[%s442 + $0xe0] sm:$0xff]
  %v472 = vld [vmem:[%s442 + $0xe8] sm:$0xff]
  %v473 = vld [vmem:[%s442 + $0xf0] sm:$0xff]
  %v474 = vld [vmem:[%s442 + $0xf8] sm:$0xff]
  %s475 = scalar_lea.vmem %s1, 2
  %v476 = vld [vmem:[%s475] ss:$4 sm:$0x3]
  %v478 = vlaneseq
  %v479 = vshrl.u32 %v478, 7
  %v480 = vsub.s32 0, %v479
  %v481 = vrot.slane %v476, %v480
  %v482 = vlaneseq
  %v483 = vshrl.u32 %v482, 7
  %v484 = vsub.s32 1, %v483
  %v485 = vrot.slane %v476, %v484
  %v488 = vmul.f32 %v443, %v481
  %v489 = vmul.f32 %v444, %v485
  %v490 = vmul.f32 %v445, %v481
  %v491 = vmul.f32 %v446, %v485
  %v492 = vmul.f32 %v447, %v481
  %v493 = vmul.f32 %v448, %v485
  %v494 = vmul.f32 %v449, %v481
  %v495 = vmul.f32 %v450, %v485
  %v496 = vmul.f32 %v451, %v481
  %v497 = vmul.f32 %v452, %v485
  %v498 = vmul.f32 %v453, %v481
  %v499 = vmul.f32 %v454, %v485
  %v500 = vmul.f32 %v455, %v481
  %v501 = vmul.f32 %v456, %v485
  %v502 = vmul.f32 %v457, %v481
  %v503 = vmul.f32 %v458, %v485
  %v504 = vmul.f32 %v459, %v481
  %v505 = vmul.f32 %v460, %v485
  %v506 = vmul.f32 %v461, %v481
  %v507 = vmul.f32 %v462, %v485
  %v508 = vmul.f32 %v463, %v481
  %v509 = vmul.f32 %v464, %v485
  %v510 = vmul.f32 %v465, %v481
  %v511 = vmul.f32 %v466, %v485
  %v512 = vmul.f32 %v467, %v481
  %v513 = vmul.f32 %v468, %v485
  %v514 = vmul.f32 %v469, %v481
  %v515 = vmul.f32 %v470, %v485
  %v516 = vmul.f32 %v471, %v481
  %v517 = vmul.f32 %v472, %v485
  %v518 = vmul.f32 %v473, %v481
  %v519 = vmul.f32 %v474, %v485
  %v520 = vadd.f32 %v488, %v489
  %521 = vadd.xlane.f32.xlu0 %v520
  %v522 = vpop.xlane.xlu0 %521
  %v523 = vadd.f32 %v490, %v491
  %524 = vadd.xlane.f32.xlu0 %v523
  %v525 = vpop.xlane.xlu0 %524
  %v526 = vadd.f32 %v492, %v493
  %527 = vadd.xlane.f32.xlu0 %v526
  %v528 = vpop.xlane.xlu0 %527
  %v529 = vadd.f32 %v494, %v495
  %530 = vadd.xlane.f32.xlu0 %v529
  %v531 = vpop.xlane.xlu0 %530
  %v532 = vadd.f32 %v496, %v497
  %533 = vadd.xlane.f32.xlu0 %v532
  %v534 = vpop.xlane.xlu0 %533
  %v535 = vadd.f32 %v498, %v499
  %536 = vadd.xlane.f32.xlu0 %v535
  %v537 = vpop.xlane.xlu0 %536
  %v538 = vadd.f32 %v500, %v501
  %539 = vadd.xlane.f32.xlu0 %v538
  %v540 = vpop.xlane.xlu0 %539
  %v541 = vadd.f32 %v502, %v503
  %542 = vadd.xlane.f32.xlu0 %v541
  %v543 = vpop.xlane.xlu0 %542
  %v544 = vadd.f32 %v504, %v505
  %545 = vadd.xlane.f32.xlu0 %v544
  %v546 = vpop.xlane.xlu0 %545
  %v547 = vadd.f32 %v506, %v507
  %548 = vadd.xlane.f32.xlu0 %v547
  %v549 = vpop.xlane.xlu0 %548
  %v550 = vadd.f32 %v508, %v509
  %551 = vadd.xlane.f32.xlu0 %v550
  %v552 = vpop.xlane.xlu0 %551
  %v553 = vadd.f32 %v510, %v511
  %554 = vadd.xlane.f32.xlu0 %v553
  %v555 = vpop.xlane.xlu0 %554
  %v556 = vadd.f32 %v512, %v513
  %557 = vadd.xlane.f32.xlu0 %v556
  %v558 = vpop.xlane.xlu0 %557
  %v559 = vadd.f32 %v514, %v515
  %560 = vadd.xlane.f32.xlu0 %v559
  %v561 = vpop.xlane.xlu0 %560
  %v562 = vadd.f32 %v516, %v517
  %563 = vadd.xlane.f32.xlu0 %v562
  %v564 = vpop.xlane.xlu0 %563
  %v565 = vadd.f32 %v518, %v519
  %566 = vadd.xlane.f32.xlu0 %v565
  %v567 = vpop.xlane.xlu0 %566
  %v568 = vld [vmem:[#allocation2] sm:$0x1]
  %v570 = vlaneseq
  %v571 = vshrl.u32 %v570, 7
  %v572 = vsub.s32 0, %v571
  %v573 = vrot.slane %v568, %v572
  %v575 = vadd.f32 %v522, %v573
  %v576 = vadd.f32 %v525, %v573
  %v577 = vadd.f32 %v528, %v573
  %v578 = vadd.f32 %v531, %v573
  %v579 = vadd.f32 %v534, %v573
  %v580 = vadd.f32 %v537, %v573
  %v581 = vadd.f32 %v540, %v573
  %v582 = vadd.f32 %v543, %v573
  %v583 = vadd.f32 %v546, %v573
  %v584 = vadd.f32 %v549, %v573
  %v585 = vadd.f32 %v552, %v573
  %v586 = vadd.f32 %v555, %v573
  %v587 = vadd.f32 %v558, %v573
  %v588 = vadd.f32 %v561, %v573
  %v589 = vadd.f32 %v564, %v573
  %v590 = vadd.f32 %v567, %v573
  %v591 = vtanh.pop %v575
  %v592 = vtanh.pop %v576
  %v593 = vtanh.pop %v577
  %v594 = vtanh.pop %v578
  %v595 = vtanh.pop %v579
  %v596 = vtanh.pop %v580
  %v597 = vtanh.pop %v581
  %v598 = vtanh.pop %v582
  %v599 = vtanh.pop %v583
  %v600 = vtanh.pop %v584
  %v601 = vtanh.pop %v585
  %v602 = vtanh.pop %v586
  %v603 = vtanh.pop %v587
  %v604 = vtanh.pop %v588
  %v605 = vtanh.pop %v589
  %v606 = vtanh.pop %v590
  %623 = vrot.lane.b32.xlu0 %v591, 2
  %v624 = vpop.permute.xlu0 %623
  %625 = vrot.lane.b32.xlu0 %v592, 2
  %v626 = vpop.permute.xlu0 %625
  %627 = vrot.lane.b32.xlu0 %v593, 2
  %v628 = vpop.permute.xlu0 %627
  %629 = vrot.lane.b32.xlu0 %v594, 2
  %v630 = vpop.permute.xlu0 %629
  %631 = vrot.lane.b32.xlu0 %v595, 2
  %v632 = vpop.permute.xlu0 %631
  %633 = vrot.lane.b32.xlu0 %v596, 2
  %v634 = vpop.permute.xlu0 %633
  %635 = vrot.lane.b32.xlu0 %v597, 2
  %v636 = vpop.permute.xlu0 %635
  %637 = vrot.lane.b32.xlu0 %v598, 2
  %v638 = vpop.permute.xlu0 %637
  %639 = vrot.lane.b32.xlu0 %v599, 2
  %v640 = vpop.permute.xlu0 %639
  %641 = vrot.lane.b32.xlu0 %v600, 2
  %v642 = vpop.permute.xlu0 %641
  %643 = vrot.lane.b32.xlu0 %v601, 2
  %v644 = vpop.permute.xlu0 %643
  %645 = vrot.lane.b32.xlu0 %v602, 2
  %v646 = vpop.permute.xlu0 %645
  %647 = vrot.lane.b32.xlu0 %v603, 2
  %v648 = vpop.permute.xlu0 %647
  %649 = vrot.lane.b32.xlu0 %v604, 2
  %v650 = vpop.permute.xlu0 %649
  %651 = vrot.lane.b32.xlu0 %v605, 2
  %v652 = vpop.permute.xlu0 %651
  %653 = vrot.lane.b32.xlu0 %v606, 2
  %v654 = vpop.permute.xlu0 %653
  %vm671 = vcmask 23568
  %672 = vst.msk [vmem:[%s3] sm:$0xff] %vm671, %v624
  %673 = vst.msk [vmem:[%s3 + $0x8] sm:$0xff] %vm671, %v626
  %674 = vst.msk [vmem:[%s3 + $0x10] sm:$0xff] %vm671, %v628
  %675 = vst.msk [vmem:[%s3 + $0x18] sm:$0xff] %vm671, %v630
  %676 = vst.msk [vmem:[%s3 + $0x20] sm:$0xff] %vm671, %v632
  %677 = vst.msk [vmem:[%s3 + $0x28] sm:$0xff] %vm671, %v634
  %678 = vst.msk [vmem:[%s3 + $0x30] sm:$0xff] %vm671, %v636
  %679 = vst.msk [vmem:[%s3 + $0x38] sm:$0xff] %vm671, %v638
  %680 = vst.msk [vmem:[%s3 + $0x40] sm:$0xff] %vm671, %v640
  %681 = vst.msk [vmem:[%s3 + $0x48] sm:$0xff] %vm671, %v642
  %682 = vst.msk [vmem:[%s3 + $0x50] sm:$0xff] %vm671, %v644
  %683 = vst.msk [vmem:[%s3 + $0x58] sm:$0xff] %vm671, %v646
  %684 = vst.msk [vmem:[%s3 + $0x60] sm:$0xff] %vm671, %v648
  %685 = vst.msk [vmem:[%s3 + $0x68] sm:$0xff] %vm671, %v650
  %686 = vst.msk [vmem:[%s3 + $0x70] sm:$0xff] %vm671, %v652
  %687 = vst.msk [vmem:[%s3 + $0x78] sm:$0xff] %vm671, %v654
  %s688 = scalar_lea.vmem %s0, 768
  %v689 = vld [vmem:[%s688] sm:$0xff]
  %v690 = vld [vmem:[%s688 + $0x8] sm:$0xff]
  %v691 = vld [vmem:[%s688 + $0x10] sm:$0xff]
  %v692 = vld [vmem:[%s688 + $0x18] sm:$0xff]
  %v693 = vld [vmem:[%s688 + $0x20] sm:$0xff]
  %v694 = vld [vmem:[%s688 + $0x28] sm:$0xff]
  %v695 = vld [vmem:[%s688 + $0x30] sm:$0xff]
  %v696 = vld [vmem:[%s688 + $0x38] sm:$0xff]
  %v697 = vld [vmem:[%s688 + $0x40] sm:$0xff]
  %v698 = vld [vmem:[%s688 + $0x48] sm:$0xff]
  %v699 = vld [vmem:[%s688 + $0x50] sm:$0xff]
  %v700 = vld [vmem:[%s688 + $0x58] sm:$0xff]
  %v701 = vld [vmem:[%s688 + $0x60] sm:$0xff]
  %v702 = vld [vmem:[%s688 + $0x68] sm:$0xff]
  %v703 = vld [vmem:[%s688 + $0x70] sm:$0xff]
  %v704 = vld [vmem:[%s688 + $0x78] sm:$0xff]
  %v705 = vld [vmem:[%s688 + $0x80] sm:$0xff]
  %v706 = vld [vmem:[%s688 + $0x88] sm:$0xff]
  %v707 = vld [vmem:[%s688 + $0x90] sm:$0xff]
  %v708 = vld [vmem:[%s688 + $0x98] sm:$0xff]
  %v709 = vld [vmem:[%s688 + $0xa0] sm:$0xff]
  %v710 = vld [vmem:[%s688 + $0xa8] sm:$0xff]
  %v711 = vld [vmem:[%s688 + $0xb0] sm:$0xff]
  %v712 = vld [vmem:[%s688 + $0xb8] sm:$0xff]
  %v713 = vld [vmem:[%s688 + $0xc0] sm:$0xff]
  %v714 = vld [vmem:[%s688 + $0xc8] sm:$0xff]
  %v715 = vld [vmem:[%s688 + $0xd0] sm:$0xff]
  %v716 = vld [vmem:[%s688 + $0xd8] sm:$0xff]
  %v717 = vld [vmem:[%s688 + $0xe0] sm:$0xff]
  %v718 = vld [vmem:[%s688 + $0xe8] sm:$0xff]
  %v719 = vld [vmem:[%s688 + $0xf0] sm:$0xff]
  %v720 = vld [vmem:[%s688 + $0xf8] sm:$0xff]
  %s721 = scalar_lea.vmem %s1, 3
  %v722 = vld [vmem:[%s721] ss:$4 sm:$0x3]
  %v724 = vlaneseq
  %v725 = vshrl.u32 %v724, 7
  %v726 = vsub.s32 0, %v725
  %v727 = vrot.slane %v722, %v726
  %v728 = vlaneseq
  %v729 = vshrl.u32 %v728, 7
  %v730 = vsub.s32 1, %v729
  %v731 = vrot.slane %v722, %v730
  %v734 = vmul.f32 %v689, %v727
  %v735 = vmul.f32 %v690, %v731
  %v736 = vmul.f32 %v691, %v727
  %v737 = vmul.f32 %v692, %v731
  %v738 = vmul.f32 %v693, %v727
  %v739 = vmul.f32 %v694, %v731
  %v740 = vmul.f32 %v695, %v727
  %v741 = vmul.f32 %v696, %v731
  %v742 = vmul.f32 %v697, %v727
  %v743 = vmul.f32 %v698, %v731
  %v744 = vmul.f32 %v699, %v727
  %v745 = vmul.f32 %v700, %v731
  %v746 = vmul.f32 %v701, %v727
  %v747 = vmul.f32 %v702, %v731
  %v748 = vmul.f32 %v703, %v727
  %v749 = vmul.f32 %v704, %v731
  %v750 = vmul.f32 %v705, %v727
  %v751 = vmul.f32 %v706, %v731
  %v752 = vmul.f32 %v707, %v727
  %v753 = vmul.f32 %v708, %v731
  %v754 = vmul.f32 %v709, %v727
  %v755 = vmul.f32 %v710, %v731
  %v756 = vmul.f32 %v711, %v727
  %v757 = vmul.f32 %v712, %v731
  %v758 = vmul.f32 %v713, %v727
  %v759 = vmul.f32 %v714, %v731
  %v760 = vmul.f32 %v715, %v727
  %v761 = vmul.f32 %v716, %v731
  %v762 = vmul.f32 %v717, %v727
  %v763 = vmul.f32 %v718, %v731
  %v764 = vmul.f32 %v719, %v727
  %v765 = vmul.f32 %v720, %v731
  %v766 = vadd.f32 %v734, %v735
  %767 = vadd.xlane.f32.xlu0 %v766
  %v768 = vpop.xlane.xlu0 %767
  %v769 = vadd.f32 %v736, %v737
  %770 = vadd.xlane.f32.xlu0 %v769
  %v771 = vpop.xlane.xlu0 %770
  %v772 = vadd.f32 %v738, %v739
  %773 = vadd.xlane.f32.xlu0 %v772
  %v774 = vpop.xlane.xlu0 %773
  %v775 = vadd.f32 %v740, %v741
  %776 = vadd.xlane.f32.xlu0 %v775
  %v777 = vpop.xlane.xlu0 %776
  %v778 = vadd.f32 %v742, %v743
  %779 = vadd.xlane.f32.xlu0 %v778
  %v780 = vpop.xlane.xlu0 %779
  %v781 = vadd.f32 %v744, %v745
  %782 = vadd.xlane.f32.xlu0 %v781
  %v783 = vpop.xlane.xlu0 %782
  %v784 = vadd.f32 %v746, %v747
  %785 = vadd.xlane.f32.xlu0 %v784
  %v786 = vpop.xlane.xlu0 %785
  %v787 = vadd.f32 %v748, %v749
  %788 = vadd.xlane.f32.xlu0 %v787
  %v789 = vpop.xlane.xlu0 %788
  %v790 = vadd.f32 %v750, %v751
  %791 = vadd.xlane.f32.xlu0 %v790
  %v792 = vpop.xlane.xlu0 %791
  %v793 = vadd.f32 %v752, %v753
  %794 = vadd.xlane.f32.xlu0 %v793
  %v795 = vpop.xlane.xlu0 %794
  %v796 = vadd.f32 %v754, %v755
  %797 = vadd.xlane.f32.xlu0 %v796
  %v798 = vpop.xlane.xlu0 %797
  %v799 = vadd.f32 %v756, %v757
  %800 = vadd.xlane.f32.xlu0 %v799
  %v801 = vpop.xlane.xlu0 %800
  %v802 = vadd.f32 %v758, %v759
  %803 = vadd.xlane.f32.xlu0 %v802
  %v804 = vpop.xlane.xlu0 %803
  %v805 = vadd.f32 %v760, %v761
  %806 = vadd.xlane.f32.xlu0 %v805
  %v807 = vpop.xlane.xlu0 %806
  %v808 = vadd.f32 %v762, %v763
  %809 = vadd.xlane.f32.xlu0 %v808
  %v810 = vpop.xlane.xlu0 %809
  %v811 = vadd.f32 %v764, %v765
  %812 = vadd.xlane.f32.xlu0 %v811
  %v813 = vpop.xlane.xlu0 %812
  %v814 = vld [vmem:[#allocation2] sm:$0x1]
  %v816 = vlaneseq
  %v817 = vshrl.u32 %v816, 7
  %v818 = vsub.s32 0, %v817
  %v819 = vrot.slane %v814, %v818
  %v821 = vadd.f32 %v768, %v819
  %v822 = vadd.f32 %v771, %v819
  %v823 = vadd.f32 %v774, %v819
  %v824 = vadd.f32 %v777, %v819
  %v825 = vadd.f32 %v780, %v819
  %v826 = vadd.f32 %v783, %v819
  %v827 = vadd.f32 %v786, %v819
  %v828 = vadd.f32 %v789, %v819
  %v829 = vadd.f32 %v792, %v819
  %v830 = vadd.f32 %v795, %v819
  %v831 = vadd.f32 %v798, %v819
  %v832 = vadd.f32 %v801, %v819
  %v833 = vadd.f32 %v804, %v819
  %v834 = vadd.f32 %v807, %v819
  %v835 = vadd.f32 %v810, %v819
  %v836 = vadd.f32 %v813, %v819
  %v837 = vtanh.pop %v821
  %v838 = vtanh.pop %v822
  %v839 = vtanh.pop %v823
  %v840 = vtanh.pop %v824
  %v841 = vtanh.pop %v825
  %v842 = vtanh.pop %v826
  %v843 = vtanh.pop %v827
  %v844 = vtanh.pop %v828
  %v845 = vtanh.pop %v829
  %v846 = vtanh.pop %v830
  %v847 = vtanh.pop %v831
  %v848 = vtanh.pop %v832
  %v849 = vtanh.pop %v833
  %v850 = vtanh.pop %v834
  %v851 = vtanh.pop %v835
  %v852 = vtanh.pop %v836
  %869 = vrot.lane.b32.xlu0 %v837, 3
  %v870 = vpop.permute.xlu0 %869
  %871 = vrot.lane.b32.xlu0 %v838, 3
  %v872 = vpop.permute.xlu0 %871
  %873 = vrot.lane.b32.xlu0 %v839, 3
  %v874 = vpop.permute.xlu0 %873
  %875 = vrot.lane.b32.xlu0 %v840, 3
  %v876 = vpop.permute.xlu0 %875
  %877 = vrot.lane.b32.xlu0 %v841, 3
  %v878 = vpop.permute.xlu0 %877
  %879 = vrot.lane.b32.xlu0 %v842, 3
  %v880 = vpop.permute.xlu0 %879
  %881 = vrot.lane.b32.xlu0 %v843, 3
  %v882 = vpop.permute.xlu0 %881
  %883 = vrot.lane.b32.xlu0 %v844, 3
  %v884 = vpop.permute.xlu0 %883
  %885 = vrot.lane.b32.xlu0 %v845, 3
  %v886 = vpop.permute.xlu0 %885
  %887 = vrot.lane.b32.xlu0 %v846, 3
  %v888 = vpop.permute.xlu0 %887
  %889 = vrot.lane.b32.xlu0 %v847, 3
  %v890 = vpop.permute.xlu0 %889
  %891 = vrot.lane.b32.xlu0 %v848, 3
  %v892 = vpop.permute.xlu0 %891
  %893 = vrot.lane.b32.xlu0 %v849, 3
  %v894 = vpop.permute.xlu0 %893
  %895 = vrot.lane.b32.xlu0 %v850, 3
  %v896 = vpop.permute.xlu0 %895
  %897 = vrot.lane.b32.xlu0 %v851, 3
  %v898 = vpop.permute.xlu0 %897
  %899 = vrot.lane.b32.xlu0 %v852, 3
  %v900 = vpop.permute.xlu0 %899
  %vm917 = vcmask 31768
  %918 = vst.msk [vmem:[%s3] sm:$0xff] %vm917, %v870
  %919 = vst.msk [vmem:[%s3 + $0x8] sm:$0xff] %vm917, %v872
  %920 = vst.msk [vmem:[%s3 + $0x10] sm:$0xff] %vm917, %v874
  %921 = vst.msk [vmem:[%s3 + $0x18] sm:$0xff] %vm917, %v876
  %922 = vst.msk [vmem:[%s3 + $0x20] sm:$0xff] %vm917, %v878
  %923 = vst.msk [vmem:[%s3 + $0x28] sm:$0xff] %vm917, %v880
  %924 = vst.msk [vmem:[%s3 + $0x30] sm:$0xff] %vm917, %v882
  %925 = vst.msk [vmem:[%s3 + $0x38] sm:$0xff] %vm917, %v884
  %926 = vst.msk [vmem:[%s3 + $0x40] sm:$0xff] %vm917, %v886
  %927 = vst.msk [vmem:[%s3 + $0x48] sm:$0xff] %vm917, %v888
  %928 = vst.msk [vmem:[%s3 + $0x50] sm:$0xff] %vm917, %v890
  %929 = vst.msk [vmem:[%s3 + $0x58] sm:$0xff] %vm917, %v892
  %930 = vst.msk [vmem:[%s3 + $0x60] sm:$0xff] %vm917, %v894
  %931 = vst.msk [vmem:[%s3 + $0x68] sm:$0xff] %vm917, %v896
  %932 = vst.msk [vmem:[%s3 + $0x70] sm:$0xff] %vm917, %v898
  %933 = vst.msk [vmem:[%s3 + $0x78] sm:$0xff] %vm917, %v900
  // Predicated region
  $region14: #{generator_forward.5} parent=0 // pred_check
    _
  $region15: #{generator_forward.5} parent=0 // pred_check_branch
    %935 = sbr.rel (0) target = $region17
  $region16: #{generator_forward.5} parent=0 // pred_region
    _
  $region17: #{generator_forward.5} parent=0 // pred_fallthru
    _
  // Predicated region
  $region18: #{generator_forward.5} parent=0 // pred_check
    _
  $region19: #{generator_forward.5} parent=0 // pred_check_branch
    %937 = sbr.rel (0) target = $region21
  $region20: #{generator_forward.5} parent=0 // pred_region
    _
  $region21: #{generator_forward.5} parent=0 // pred_fallthru
    _

</llo_original>
